<compile_context>
chip_gen: v7x
topology: tpu7x:2x2x1
jax: 0.10.0
libtpu: 0.0.40
codegen_flags: <defaults>
</compile_context>

<pallas_src>
import functools

import jax
import jax.numpy as jnp
from jax import lax
from jax.experimental import pallas as pl
from jax.experimental.pallas import tpu as pltpu


def _round_up(x, m):
    return (x + m - 1) // m * m


def gru_layer_kernel(gi0_ref, wih_ref, whh_ref, bgi_ref, bhn_ref, h0_ref,
                     y_ref, hT_ref, gi_scr, *, unroll):
    """One grid step == one GRU layer over the full (padded) sequence.

    Shapes (all padded; P = 128-aligned feature dim, P3 = 3*P):
      gi0_ref: (T, Bp, P3)  precomputed layer-0 input projection (resident)
      wih_ref: (P, P3)      this layer's W_ih^T, gate-blocked [r|z|n] (unused at l==0)
      whh_ref: (P, P3)      this layer's W_hh^T, gate-blocked
      bgi_ref: (1, P3)      folded bias [b_ih_r+b_hh_r | b_ih_z+b_hh_z | b_ih_n]
      bhn_ref: (1, P)       b_hh_n only (n-gate hidden bias)
      h0_ref : (Bp, P)      this layer's initial hidden state
      y_ref  : (Bp-resident) (T, Bp, P) activations; reused as the inter-layer
                            buffer, ends up holding the last layer's outputs
      hT_ref : (Bp, P)      this layer's final hidden state
      gi_scr : (T, Bp, P3)  VMEM scratch holding this layer's input projection
    """
    T, Bp, P3 = gi_scr.shape
    P = P3 // 3
    l = pl.program_id(0)

    # --- full-sequence input projection for this layer -----------------------
    @pl.when(l == 0)
    def _():
        gi_scr[...] = gi0_ref[...]          # layer 0: precomputed outside

    @pl.when(l > 0)
    def _():
        xl = y_ref[...].reshape(T * Bp, P)  # free view (Bp % 8 == 0, P % 128 == 0)
        gi = jnp.dot(xl, wih_ref[...], preferred_element_type=jnp.float32)
        gi_scr[...] = (gi + bgi_ref[...]).reshape(T, Bp, P3)

    # --- serial recurrence: only h @ W_hh^T per step --------------------------
    bhn = jnp.broadcast_to(bhn_ref[...], (Bp, P))      # hoisted out of time loop

    def step(t, h):
        gh = jnp.dot(h, whh_ref[...], preferred_element_type=jnp.float32)
        gi_t = gi_scr[t]                               # (Bp, P3)
        rz = jax.nn.sigmoid(gi_t[:, :2 * P] + gh[:, :2 * P])   # one 2P-wide sigmoid
        r = rz[:, :P]                                  # 128-aligned slices
        z = rz[:, P:]
        n = jnp.tanh(gi_t[:, 2 * P:] + r * (gh[:, 2 * P:] + bhn))
        h_new = n + z * (h - n)                        # == (1-z)*n + z*h
        y_ref[t] = h_new                               # lane-dense store
        return h_new

    hT_ref[...] = lax.fori_loop(0, T, step, h0_ref[...], unroll=unroll)


def gru_stack(gi0, wih, whh, bgi, bhn, h0_pad):
    """gi0: (T, Bp, 3P) layer-0 input projection; stacks are per-layer padded."""
    T, Bp, P3 = gi0.shape
    P = P3 // 3
    L = wih.shape[0]
    unroll = True if T <= 16 else 8

    kernel = functools.partial(gru_layer_kernel, unroll=unroll)
    y, hT = pl.pallas_call(
        kernel,
        out_shape=(jax.ShapeDtypeStruct((T, Bp, P), jnp.float32),
                   jax.ShapeDtypeStruct((L, Bp, P), jnp.float32)),
        grid_spec=pltpu.PrefetchScalarGridSpec(
            num_scalar_prefetch=0,
            grid=(L,),                                        # layer axis
            in_specs=[
                pl.BlockSpec((T, Bp, P3), lambda l: (0, 0, 0)),     # gi0 (resident)
                pl.BlockSpec((None, P, P3), lambda l: (l, 0, 0)),   # W_ih^T[l]
                pl.BlockSpec((None, P, P3), lambda l: (l, 0, 0)),   # W_hh^T[l]
                pl.BlockSpec((None, 1, P3), lambda l: (l, 0, 0)),   # folded gi bias[l]
                pl.BlockSpec((None, 1, P), lambda l: (l, 0, 0)),    # b_hh_n[l]
                pl.BlockSpec((None, Bp, P), lambda l: (l, 0, 0)),   # h0[l]
            ],
            out_specs=(
                pl.BlockSpec((T, Bp, P), lambda l: (0, 0, 0)),      # y (resident)
                pl.BlockSpec((None, Bp, P), lambda l: (l, 0, 0)),   # hT[l]
            ),
            scratch_shapes=[pltpu.VMEM((T, Bp, P3), jnp.float32)],  # persists over grid
        ),
        compiler_params=pltpu.CompilerParams(
            dimension_semantics=("arbitrary",),      # layers are serially dependent
            vmem_limit_bytes=32 * 1024 * 1024),
    )(gi0, wih, whh, bgi, bhn, h0_pad)
    return y, hT


class ToyNNPallas:
    """JAX/Pallas port of ToyNN: frozen embedding + nn.GRU(batch_first=True)."""

    def __init__(self, weights_matrix, hidden_dim, num_layers, key):
        self.emb_w = weights_matrix                      # (num_emb, emb_dim)
        self.hidden_dim = hidden_dim
        self.num_layers = num_layers
        num_emb, emb_dim = weights_matrix.shape
        self.emb_dim = emb_dim

        # PyTorch-style uniform(-1/sqrt(H), 1/sqrt(H)) init, deterministic.
        bound = 1.0 / (hidden_dim ** 0.5)
        self.params = []
        for layer in range(num_layers):
            in_dim = emb_dim if layer == 0 else hidden_dim
            key, k1, k2, k3, k4 = jax.random.split(key, 5)
            w_ih = jax.random.uniform(k1, (3 * hidden_dim, in_dim),
                                      minval=-bound, maxval=bound, dtype=jnp.float32)
            w_hh = jax.random.uniform(k2, (3 * hidden_dim, hidden_dim),
                                      minval=-bound, maxval=bound, dtype=jnp.float32)
            b_ih = jax.random.uniform(k3, (3 * hidden_dim,),
                                      minval=-bound, maxval=bound, dtype=jnp.float32)
            b_hh = jax.random.uniform(k4, (3 * hidden_dim,),
                                      minval=-bound, maxval=bound, dtype=jnp.float32)
            self.params.append((w_ih, w_hh, b_ih, b_hh))

        H = hidden_dim
        P = _round_up(max(emb_dim, hidden_dim), 128)     # lane-aligned feature dim
        self.P = P
        P3 = 3 * P

        # --- fold layer-0 input projection into the frozen embedding table ---
        # emb_gi[v, g*P:g*P+H] = emb[v] @ W_ih0[g]^T + b_ih0[g] (+ b_hh0[g] for r,z)
        w_ih0, _, b_ih0, b_hh0 = self.params[0]
        tbl = jnp.zeros((num_emb, P3), jnp.float32)
        for g in range(3):                               # torch gate order r, z, n
            w_g = w_ih0[g * H:(g + 1) * H, :]            # (H, E)
            b_g = b_ih0[g * H:(g + 1) * H]
            if g < 2:
                b_g = b_g + b_hh0[g * H:(g + 1) * H]
            tbl = tbl.at[:, g * P:g * P + H].set(weights_matrix @ w_g.T + b_g)
        self.emb_gi = tbl                                # (num_emb, 3P)

        # --- padded / gate-blocked / stacked per-layer parameters -----------
        # (layer 0's W_ih / bgi slots are unused by the kernel but kept so the
        #  layer grid axis indexes uniformly)
        wih_s, whh_s, bgi_s, bhn_s = [], [], [], []
        for (w_ih, w_hh, b_ih, b_hh) in self.params:
            in_dim = w_ih.shape[1]
            wih_p = jnp.zeros((P, P3), jnp.float32)
            whh_p = jnp.zeros((P, P3), jnp.float32)
            bgi_p = jnp.zeros((1, P3), jnp.float32)
            bhn_p = jnp.zeros((1, P), jnp.float32)
            for g in range(3):
                wih_p = wih_p.at[:in_dim, g * P:g * P + H].set(
                    w_ih[g * H:(g + 1) * H, :].T)
                whh_p = whh_p.at[:H, g * P:g * P + H].set(
                    w_hh[g * H:(g + 1) * H, :].T)
            # fold b_ih fully into Gi; fold b_hh for r,z; keep b_hh_n separate
            bgi_p = bgi_p.at[0, 0 * P:0 * P + H].set(b_ih[0:H] + b_hh[0:H])
            bgi_p = bgi_p.at[0, 1 * P:1 * P + H].set(b_ih[H:2 * H] + b_hh[H:2 * H])
            bgi_p = bgi_p.at[0, 2 * P:2 * P + H].set(b_ih[2 * H:3 * H])
            bhn_p = bhn_p.at[0, :H].set(b_hh[2 * H:3 * H])
            wih_s.append(wih_p); whh_s.append(whh_p)
            bgi_s.append(bgi_p); bhn_s.append(bhn_p)
        self.wih = jnp.stack(wih_s)                      # (L, P, 3P)
        self.whh = jnp.stack(whh_s)                      # (L, P, 3P)
        self.bgi = jnp.stack(bgi_s)                      # (L, 1, 3P)
        self.bhn = jnp.stack(bhn_s)                      # (L, 1, P)

    def init_hidden(self, batch_size):
        return jnp.zeros((self.num_layers, batch_size, self.hidden_dim),
                         jnp.float32)

    def __call__(self, inp, hidden):
        # inp: (B, T) int32 token ids ; hidden: (num_layers, B, H)
        B, T = inp.shape
        H, P = self.hidden_dim, self.P
        Bp = _round_up(B, 8)                             # sublane-pad the batch

        # layer-0 gate pre-projection via gather of the folded table (glue)
        gi0 = jnp.take(self.emb_gi, inp, axis=0)         # (B, T, 3P)
        gi0 = jnp.transpose(gi0, (1, 0, 2))              # time-major (T, B, 3P)
        gi0 = jnp.pad(gi0, ((0, 0), (0, Bp - B), (0, 0)))
        h0 = jnp.pad(hidden, ((0, 0), (0, Bp - B), (0, P - H)))

        y, hT = gru_stack(gi0, self.wih, self.whh, self.bgi, self.bhn, h0)

        output = jnp.transpose(y[:, :B, :H], (1, 0, 2))  # back to (B, T, H)
        h_n = hT[:, :B, :H]                              # (num_layers, B, H)
        return output, h_n


def gru_reference(inp, hidden, emb_w, params):
    """Pure-JAX reference matching torch.nn.GRU(batch_first=True) semantics."""
    x = jnp.take(emb_w, inp, axis=0)                     # (B, T, E)
    B, T, _ = x.shape
    h_finals = []
    for layer, (w_ih, w_hh, b_ih, b_hh) in enumerate(params):
        H = w_hh.shape[1]
        h = hidden[layer]
        ys = []
        for t in range(T):
            xt = x[:, t, :]
            gi = xt @ w_ih.T + b_ih
            gh = h @ w_hh.T + b_hh
            r = jax.nn.sigmoid(gi[:, :H] + gh[:, :H])
            z = jax.nn.sigmoid(gi[:, H:2 * H] + gh[:, H:2 * H])
            n = jnp.tanh(gi[:, 2 * H:] + r * gh[:, 2 * H:])
            h = (1.0 - z) * n + z * h
            ys.append(h)
        x = jnp.stack(ys, axis=1)                        # (B, T, H)
        h_finals.append(h)
    return x, jnp.stack(h_finals, axis=0)


if __name__ == "__main__":
    key = jax.random.PRNGKey(0)
    num_embeddings, embedding_dim = 50, 16
    hidden_dim, num_layers = 32, 2
    batch, seq = 2, 8

    key, k_emb, k_gru, k_tok = jax.random.split(key, 4)
    weights_matrix = jax.random.normal(k_emb, (num_embeddings, embedding_dim),
                                       dtype=jnp.float32)

    model = ToyNNPallas(weights_matrix, hidden_dim, num_layers, k_gru)

    inp = jax.random.randint(k_tok, (batch, seq), 0, num_embeddings,
                             dtype=jnp.int32)
    hidden = model.init_hidden(batch)

    output, h_n = model(inp, hidden)
    output = jax.block_until_ready(output)
    h_n = jax.block_until_ready(h_n)

    assert output.shape == (batch, seq, hidden_dim)
    assert h_n.shape == (num_layers, batch, hidden_dim)

    # Cross-check against pure-JAX reference of the PyTorch GRU equations.
    ref_out, ref_h = gru_reference(inp, hidden, weights_matrix, model.params)
    assert jnp.allclose(output, ref_out, atol=1e-4, rtol=1e-4)
    assert jnp.allclose(h_n, ref_h, atol=1e-4, rtol=1e-4)

    print("KERNEL_OK")
</pallas_src>

<mosaic_0001>
module attributes {stable_mosaic.version = 11 : i64} {
  func.func @gru_layer_kernel(%arg0: i32, %arg1: memref<8x8x384xf32, #tpu.memory_space<vmem>>, %arg2: memref<1x128x384xf32, #tpu.memory_space<vmem>>, %arg3: memref<1x128x384xf32, #tpu.memory_space<vmem>>, %arg4: memref<1x1x384xf32, #tpu.memory_space<vmem>>, %arg5: memref<1x1x128xf32, #tpu.memory_space<vmem>>, %arg6: memref<1x8x128xf32, #tpu.memory_space<vmem>>, %arg7: memref<8x8x128xf32, #tpu.memory_space<vmem>>, %arg8: memref<1x8x128xf32, #tpu.memory_space<vmem>>, %arg9: memref<8x8x384xf32, #tpu.memory_space<vmem>>) attributes {dimension_semantics = [#tpu.dimension_semantics<arbitrary>], iteration_bounds = array<i64: 2>, scalar_prefetch = 0 : i64, scratch_operands = 1 : i64, tpu.core_type = #tpu.core_type<tc>, window_params = [{pipeline_mode = #tpu.pipeline_mode<synchronous>, transform_indices = @transform_0, window_bounds = array<i64: 8, 8, 384>}, {transform_indices = @transform_1, window_bounds = array<i64: 1, 128, 384>}, {transform_indices = @transform_2, window_bounds = array<i64: 1, 128, 384>}, {transform_indices = @transform_3, window_bounds = array<i64: 1, 1, 384>}, {transform_indices = @transform_4, window_bounds = array<i64: 1, 1, 128>}, {transform_indices = @transform_5, window_bounds = array<i64: 1, 8, 128>}, {pipeline_mode = #tpu.pipeline_mode<synchronous>, transform_indices = @transform_6, window_bounds = array<i64: 8, 8, 128>}, {transform_indices = @transform_7, window_bounds = array<i64: 1, 8, 128>}]} {
    %c0_i32 = arith.constant 0 : i32
    %0 = arith.cmpi eq, %arg0, %c0_i32 : i32
    %1 = arith.extui %0 : i1 to i32
    %c0_i32_0 = arith.constant 0 : i32
    %2 = arith.cmpi ne, %1, %c0_i32_0 : i32
    scf.if %2 {
      %c0_83 = arith.constant 0 : index
      %c0_84 = arith.constant 0 : index
      %c0_85 = arith.constant 0 : index
      %247 = vector.load %arg1[%c0_83, %c0_84, %c0_85] : memref<8x8x384xf32, #tpu.memory_space<vmem>>, vector<8x8x384xf32>
      %c0_86 = arith.constant 0 : index
      %c0_87 = arith.constant 0 : index
      %c0_88 = arith.constant 0 : index
      %248 = vector.load %arg9[%c0_86, %c0_87, %c0_88] : memref<8x8x384xf32, #tpu.memory_space<vmem>>, vector<8x8x384xf32>
      tpu.vector_store %arg9[%c0_86, %c0_87, %c0_88], %247 {strides = array<i32>} : memref<8x8x384xf32, #tpu.memory_space<vmem>>, vector<8x8x384xf32>,
    } else {
    }
    %c0_i32_1 = arith.constant 0 : i32
    %3 = arith.cmpi sgt, %arg0, %c0_i32_1 : i32
    %4 = arith.extui %3 : i1 to i32
    %c0_i32_2 = arith.constant 0 : i32
    %5 = arith.cmpi ne, %4, %c0_i32_2 : i32
    scf.if %5 {
      %c0_83 = arith.constant 0 : index
      %c0_84 = arith.constant 0 : index
      %c0_85 = arith.constant 0 : index
      %247 = vector.load %arg7[%c0_83, %c0_84, %c0_85] : memref<8x8x128xf32, #tpu.memory_space<vmem>>, vector<8x8x128xf32>
      %248 = vector.shape_cast %247 : vector<8x8x128xf32> to vector<64x128xf32>
      %c0_86 = arith.constant 0 : index
      %c0_87 = arith.constant 0 : index
      %c0_88 = arith.constant 0 : index
      %249 = vector.load %arg2[%c0_86, %c0_87, %c0_88] : memref<1x128x384xf32, #tpu.memory_space<vmem>>, vector<1x128x384xf32>
      %250 = vector.shape_cast %249 : vector<1x128x384xf32> to vector<128x384xf32>
      %cst_89 = arith.constant dense<0.000000e+00> : vector<64x384xf32>
      %251 = tpu.matmul %248, %250, %cst_89 {dimension_numbers = #tpu.dot_dimension_numbers<[1], [0], [0], [1], [0, 0, 1, 1], [], []>} : vector<64x128xf32>, vector<128x384xf32>, vector<64x384xf32> -> vector<64x384xf32>
      %c0_90 = arith.constant 0 : index
      %c0_91 = arith.constant 0 : index
      %c0_92 = arith.constant 0 : index
      %252 = vector.load %arg4[%c0_90, %c0_91, %c0_92] : memref<1x1x384xf32, #tpu.memory_space<vmem>>, vector<1x1x384xf32>
      %253 = vector.shape_cast %252 : vector<1x1x384xf32> to vector<1x384xf32>
      %254 = vector.broadcast %253 : vector<1x384xf32> to vector<64x384xf32>
      %255 = arith.addf %251, %254 : vector<64x384xf32>
      %256 = vector.shape_cast %255 : vector<64x384xf32> to vector<8x8x384xf32>
      %c0_93 = arith.constant 0 : index
      %c0_94 = arith.constant 0 : index
      %c0_95 = arith.constant 0 : index
      %257 = vector.load %arg9[%c0_93, %c0_94, %c0_95] : memref<8x8x384xf32, #tpu.memory_space<vmem>>, vector<8x8x384xf32>
      tpu.vector_store %arg9[%c0_93, %c0_94, %c0_95], %256 {strides = array<i32>} : memref<8x8x384xf32, #tpu.memory_space<vmem>>, vector<8x8x384xf32>,
    } else {
    }
    %c0 = arith.constant 0 : index
    %c0_3 = arith.constant 0 : index
    %c0_4 = arith.constant 0 : index
    %6 = vector.load %arg5[%c0, %c0_3, %c0_4] : memref<1x1x128xf32, #tpu.memory_space<vmem>>, vector<1x1x128xf32>
    %7 = vector.shape_cast %6 : vector<1x1x128xf32> to vector<1x128xf32>
    %8 = vector.shape_cast %7 : vector<1x128xf32> to vector<1x128xf32>
    %9 = vector.broadcast %8 : vector<1x128xf32> to vector<8x128xf32>
    %c0_5 = arith.constant 0 : index
    %c0_6 = arith.constant 0 : index
    %c0_7 = arith.constant 0 : index
    %10 = vector.load %arg6[%c0_5, %c0_6, %c0_7] : memref<1x8x128xf32, #tpu.memory_space<vmem>>, vector<1x8x128xf32>
    %11 = vector.shape_cast %10 : vector<1x8x128xf32> to vector<8x128xf32>
    %c0_i32_8 = arith.constant 0 : i32
    %c0_9 = arith.constant 0 : index
    %c0_10 = arith.constant 0 : index
    %c0_11 = arith.constant 0 : index
    %12 = vector.load %arg3[%c0_9, %c0_10, %c0_11] : memref<1x128x384xf32, #tpu.memory_space<vmem>>, vector<1x128x384xf32>
    %13 = vector.shape_cast %12 : vector<1x128x384xf32> to vector<128x384xf32>
    %cst = arith.constant dense<0.000000e+00> : vector<8x384xf32>
    %14 = tpu.matmul %11, %13, %cst {dimension_numbers = #tpu.dot_dimension_numbers<[1], [0], [0], [1], [0, 0, 1, 1], [], []>} : vector<8x128xf32>, vector<128x384xf32>, vector<8x384xf32> -> vector<8x384xf32>
    %15 = arith.index_cast %c0_i32_8 : i32 to index
    %c0_12 = arith.constant 0 : index
    %c0_13 = arith.constant 0 : index
    %16 = vector.load %arg9[%15, %c0_12, %c0_13] : memref<8x8x384xf32, #tpu.memory_space<vmem>>, vector<1x8x384xf32>
    %17 = vector.shape_cast %16 : vector<1x8x384xf32> to vector<8x384xf32>
    %18 = vector.extract_strided_slice %17 {offsets = [0, 0], sizes = [8, 256], strides = [1, 1]} : vector<8x384xf32> to vector<8x256xf32>
    %19 = vector.extract_strided_slice %14 {offsets = [0, 0], sizes = [8, 256], strides = [1, 1]} : vector<8x384xf32> to vector<8x256xf32>
    %20 = arith.addf %18, %19 : vector<8x256xf32>
    %21 = arith.negf %20 : vector<8x256xf32>
    %22 = math.exp %21 : vector<8x256xf32>
    %cst_14 = arith.constant 1.000000e+00 : f32
    %23 = vector.broadcast %cst_14 : f32 to vector<8x256xf32>
    %24 = arith.addf %23, %22 : vector<8x256xf32>
    %25 = arith.divf %23, %24 : vector<8x256xf32>
    %26 = vector.extract_strided_slice %25 {offsets = [0, 0], sizes = [8, 128], strides = [1, 1]} : vector<8x256xf32> to vector<8x128xf32>
    %27 = vector.extract_strided_slice %25 {offsets = [0, 128], sizes = [8, 128], strides = [1, 1]} : vector<8x256xf32> to vector<8x128xf32>
    %28 = vector.extract_strided_slice %17 {offsets = [0, 256], sizes = [8, 128], strides = [1, 1]} : vector<8x384xf32> to vector<8x128xf32>
    %29 = vector.extract_strided_slice %14 {offsets = [0, 256], sizes = [8, 128], strides = [1, 1]} : vector<8x384xf32> to vector<8x128xf32>
    %30 = arith.addf %29, %9 : vector<8x128xf32>
    %31 = arith.mulf %26, %30 : vector<8x128xf32>
    %32 = arith.addf %28, %31 : vector<8x128xf32>
    %33 = math.tanh %32 : vector<8x128xf32>
    %34 = arith.subf %11, %33 : vector<8x128xf32>
    %35 = arith.mulf %27, %34 : vector<8x128xf32>
    %36 = arith.addf %33, %35 : vector<8x128xf32>
    %37 = arith.index_cast %c0_i32_8 : i32 to index
    %c0_15 = arith.constant 0 : index
    %c0_16 = arith.constant 0 : index
    %38 = vector.load %arg7[%37, %c0_15, %c0_16] : memref<8x8x128xf32, #tpu.memory_space<vmem>>, vector<1x8x128xf32>
    %39 = vector.shape_cast %38 : vector<1x8x128xf32> to vector<8x128xf32>
    %40 = vector.shape_cast %36 : vector<8x128xf32> to vector<1x8x128xf32>
    tpu.vector_store %arg7[%37, %c0_15, %c0_16], %40 {strides = array<i32>} : memref<8x8x128xf32, #tpu.memory_space<vmem>>, vector<1x8x128xf32>,
    %c1_i32 = arith.constant 1 : i32
    %c0_17 = arith.constant 0 : index
    %c0_18 = arith.constant 0 : index
    %c0_19 = arith.constant 0 : index
    %41 = vector.load %arg3[%c0_17, %c0_18, %c0_19] : memref<1x128x384xf32, #tpu.memory_space<vmem>>, vector<1x128x384xf32>
    %42 = vector.shape_cast %41 : vector<1x128x384xf32> to vector<128x384xf32>
    %cst_20 = arith.constant dense<0.000000e+00> : vector<8x384xf32>
    %43 = tpu.matmul %36, %42, %cst_20 {dimension_numbers = #tpu.dot_dimension_numbers<[1], [0], [0], [1], [0, 0, 1, 1], [], []>} : vector<8x128xf32>, vector<128x384xf32>, vector<8x384xf32> -> vector<8x384xf32>
    %44 = arith.index_cast %c1_i32 : i32 to index
    %c0_21 = arith.constant 0 : index
    %c0_22 = arith.constant 0 : index
    %45 = vector.load %arg9[%44, %c0_21, %c0_22] : memref<8x8x384xf32, #tpu.memory_space<vmem>>, vector<1x8x384xf32>
    %46 = vector.shape_cast %45 : vector<1x8x384xf32> to vector<8x384xf32>
    %47 = vector.extract_strided_slice %46 {offsets = [0, 0], sizes = [8, 256], strides = [1, 1]} : vector<8x384xf32> to vector<8x256xf32>
    %48 = vector.extract_strided_slice %43 {offsets = [0, 0], sizes = [8, 256], strides = [1, 1]} : vector<8x384xf32> to vector<8x256xf32>
    %49 = arith.addf %47, %48 : vector<8x256xf32>
    %50 = arith.negf %49 : vector<8x256xf32>
    %51 = math.exp %50 : vector<8x256xf32>
    %cst_23 = arith.constant 1.000000e+00 : f32
    %52 = vector.broadcast %cst_23 : f32 to vector<8x256xf32>
    %53 = arith.addf %52, %51 : vector<8x256xf32>
    %54 = arith.divf %52, %53 : vector<8x256xf32>
    %55 = vector.extract_strided_slice %54 {offsets = [0, 0], sizes = [8, 128], strides = [1, 1]} : vector<8x256xf32> to vector<8x128xf32>
    %56 = vector.extract_strided_slice %54 {offsets = [0, 128], sizes = [8, 128], strides = [1, 1]} : vector<8x256xf32> to vector<8x128xf32>
    %57 = vector.extract_strided_slice %46 {offsets = [0, 256], sizes = [8, 128], strides = [1, 1]} : vector<8x384xf32> to vector<8x128xf32>
    %58 = vector.extract_strided_slice %43 {offsets = [0, 256], sizes = [8, 128], strides = [1, 1]} : vector<8x384xf32> to vector<8x128xf32>
    %59 = arith.addf %58, %9 : vector<8x128xf32>
    %60 = arith.mulf %55, %59 : vector<8x128xf32>
    %61 = arith.addf %57, %60 : vector<8x128xf32>
    %62 = math.tanh %61 : vector<8x128xf32>
    %63 = arith.subf %36, %62 : vector<8x128xf32>
    %64 = arith.mulf %56, %63 : vector<8x128xf32>
    %65 = arith.addf %62, %64 : vector<8x128xf32>
    %66 = arith.index_cast %c1_i32 : i32 to index
    %c0_24 = arith.constant 0 : index
    %c0_25 = arith.constant 0 : index
    %67 = vector.load %arg7[%66, %c0_24, %c0_25] : memref<8x8x128xf32, #tpu.memory_space<vmem>>, vector<1x8x128xf32>
    %68 = vector.shape_cast %67 : vector<1x8x128xf32> to vector<8x128xf32>
    %69 = vector.shape_cast %65 : vector<8x128xf32> to vector<1x8x128xf32>
    tpu.vector_store %arg7[%66, %c0_24, %c0_25], %69 {strides = array<i32>} : memref<8x8x128xf32, #tpu.memory_space<vmem>>, vector<1x8x128xf32>,
    %c2_i32 = arith.constant 2 : i32
    %c0_26 = arith.constant 0 : index
    %c0_27 = arith.constant 0 : index
    %c0_28 = arith.constant 0 : index
    %70 = vector.load %arg3[%c0_26, %c0_27, %c0_28] : memref<1x128x384xf32, #tpu.memory_space<vmem>>, vector<1x128x384xf32>
    %71 = vector.shape_cast %70 : vector<1x128x384xf32> to vector<128x384xf32>
    %cst_29 = arith.constant dense<0.000000e+00> : vector<8x384xf32>
    %72 = tpu.matmul %65, %71, %cst_29 {dimension_numbers = #tpu.dot_dimension_numbers<[1], [0], [0], [1], [0, 0, 1, 1], [], []>} : vector<8x128xf32>, vector<128x384xf32>, vector<8x384xf32> -> vector<8x384xf32>
    %73 = arith.index_cast %c2_i32 : i32 to index
    %c0_30 = arith.constant 0 : index
    %c0_31 = arith.constant 0 : index
    %74 = vector.load %arg9[%73, %c0_30, %c0_31] : memref<8x8x384xf32, #tpu.memory_space<vmem>>, vector<1x8x384xf32>
    %75 = vector.shape_cast %74 : vector<1x8x384xf32> to vector<8x384xf32>
    %76 = vector.extract_strided_slice %75 {offsets = [0, 0], sizes = [8, 256], strides = [1, 1]} : vector<8x384xf32> to vector<8x256xf32>
    %77 = vector.extract_strided_slice %72 {offsets = [0, 0], sizes = [8, 256], strides = [1, 1]} : vector<8x384xf32> to vector<8x256xf32>
    %78 = arith.addf %76, %77 : vector<8x256xf32>
    %79 = arith.negf %78 : vector<8x256xf32>
    %80 = math.exp %79 : vector<8x256xf32>
    %cst_32 = arith.constant 1.000000e+00 : f32
    %81 = vector.broadcast %cst_32 : f32 to vector<8x256xf32>
    %82 = arith.addf %81, %80 : vector<8x256xf32>
    %83 = arith.divf %81, %82 : vector<8x256xf32>
    %84 = vector.extract_strided_slice %83 {offsets = [0, 0], sizes = [8, 128], strides = [1, 1]} : vector<8x256xf32> to vector<8x128xf32>
    %85 = vector.extract_strided_slice %83 {offsets = [0, 128], sizes = [8, 128], strides = [1, 1]} : vector<8x256xf32> to vector<8x128xf32>
    %86 = vector.extract_strided_slice %75 {offsets = [0, 256], sizes = [8, 128], strides = [1, 1]} : vector<8x384xf32> to vector<8x128xf32>
    %87 = vector.extract_strided_slice %72 {offsets = [0, 256], sizes = [8, 128], strides = [1, 1]} : vector<8x384xf32> to vector<8x128xf32>
    %88 = arith.addf %87, %9 : vector<8x128xf32>
    %89 = arith.mulf %84, %88 : vector<8x128xf32>
    %90 = arith.addf %86, %89 : vector<8x128xf32>
    %91 = math.tanh %90 : vector<8x128xf32>
    %92 = arith.subf %65, %91 : vector<8x128xf32>
    %93 = arith.mulf %85, %92 : vector<8x128xf32>
    %94 = arith.addf %91, %93 : vector<8x128xf32>
    %95 = arith.index_cast %c2_i32 : i32 to index
    %c0_33 = arith.constant 0 : index
    %c0_34 = arith.constant 0 : index
    %96 = vector.load %arg7[%95, %c0_33, %c0_34] : memref<8x8x128xf32, #tpu.memory_space<vmem>>, vector<1x8x128xf32>
    %97 = vector.shape_cast %96 : vector<1x8x128xf32> to vector<8x128xf32>
    %98 = vector.shape_cast %94 : vector<8x128xf32> to vector<1x8x128xf32>
    tpu.vector_store %arg7[%95, %c0_33, %c0_34], %98 {strides = array<i32>} : memref<8x8x128xf32, #tpu.memory_space<vmem>>, vector<1x8x128xf32>,
    %c3_i32 = arith.constant 3 : i32
    %c0_35 = arith.constant 0 : index
    %c0_36 = arith.constant 0 : index
    %c0_37 = arith.constant 0 : index
    %99 = vector.load %arg3[%c0_35, %c0_36, %c0_37] : memref<1x128x384xf32, #tpu.memory_space<vmem>>, vector<1x128x384xf32>
    %100 = vector.shape_cast %99 : vector<1x128x384xf32> to vector<128x384xf32>
    %cst_38 = arith.constant dense<0.000000e+00> : vector<8x384xf32>
    %101 = tpu.matmul %94, %100, %cst_38 {dimension_numbers = #tpu.dot_dimension_numbers<[1], [0], [0], [1], [0, 0, 1, 1], [], []>} : vector<8x128xf32>, vector<128x384xf32>, vector<8x384xf32> -> vector<8x384xf32>
    %102 = arith.index_cast %c3_i32 : i32 to index
    %c0_39 = arith.constant 0 : index
    %c0_40 = arith.constant 0 : index
    %103 = vector.load %arg9[%102, %c0_39, %c0_40] : memref<8x8x384xf32, #tpu.memory_space<vmem>>, vector<1x8x384xf32>
    %104 = vector.shape_cast %103 : vector<1x8x384xf32> to vector<8x384xf32>
    %105 = vector.extract_strided_slice %104 {offsets = [0, 0], sizes = [8, 256], strides = [1, 1]} : vector<8x384xf32> to vector<8x256xf32>
    %106 = vector.extract_strided_slice %101 {offsets = [0, 0], sizes = [8, 256], strides = [1, 1]} : vector<8x384xf32> to vector<8x256xf32>
    %107 = arith.addf %105, %106 : vector<8x256xf32>
    %108 = arith.negf %107 : vector<8x256xf32>
    %109 = math.exp %108 : vector<8x256xf32>
    %cst_41 = arith.constant 1.000000e+00 : f32
    %110 = vector.broadcast %cst_41 : f32 to vector<8x256xf32>
    %111 = arith.addf %110, %109 : vector<8x256xf32>
    %112 = arith.divf %110, %111 : vector<8x256xf32>
    %113 = vector.extract_strided_slice %112 {offsets = [0, 0], sizes = [8, 128], strides = [1, 1]} : vector<8x256xf32> to vector<8x128xf32>
    %114 = vector.extract_strided_slice %112 {offsets = [0, 128], sizes = [8, 128], strides = [1, 1]} : vector<8x256xf32> to vector<8x128xf32>
    %115 = vector.extract_strided_slice %104 {offsets = [0, 256], sizes = [8, 128], strides = [1, 1]} : vector<8x384xf32> to vector<8x128xf32>
    %116 = vector.extract_strided_slice %101 {offsets = [0, 256], sizes = [8, 128], strides = [1, 1]} : vector<8x384xf32> to vector<8x128xf32>
    %117 = arith.addf %116, %9 : vector<8x128xf32>
    %118 = arith.mulf %113, %117 : vector<8x128xf32>
    %119 = arith.addf %115, %118 : vector<8x128xf32>
    %120 = math.tanh %119 : vector<8x128xf32>
    %121 = arith.subf %94, %120 : vector<8x128xf32>
    %122 = arith.mulf %114, %121 : vector<8x128xf32>
    %123 = arith.addf %120, %122 : vector<8x128xf32>
    %124 = arith.index_cast %c3_i32 : i32 to index
    %c0_42 = arith.constant 0 : index
    %c0_43 = arith.constant 0 : index
    %125 = vector.load %arg7[%124, %c0_42, %c0_43] : memref<8x8x128xf32, #tpu.memory_space<vmem>>, vector<1x8x128xf32>
    %126 = vector.shape_cast %125 : vector<1x8x128xf32> to vector<8x128xf32>
    %127 = vector.shape_cast %123 : vector<8x128xf32> to vector<1x8x128xf32>
    tpu.vector_store %arg7[%124, %c0_42, %c0_43], %127 {strides = array<i32>} : memref<8x8x128xf32, #tpu.memory_space<vmem>>, vector<1x8x128xf32>,
    %c4_i32 = arith.constant 4 : i32
    %c0_44 = arith.constant 0 : index
    %c0_45 = arith.constant 0 : index
    %c0_46 = arith.constant 0 : index
    %128 = vector.load %arg3[%c0_44, %c0_45, %c0_46] : memref<1x128x384xf32, #tpu.memory_space<vmem>>, vector<1x128x384xf32>
    %129 = vector.shape_cast %128 : vector<1x128x384xf32> to vector<128x384xf32>
    %cst_47 = arith.constant dense<0.000000e+00> : vector<8x384xf32>
    %130 = tpu.matmul %123, %129, %cst_47 {dimension_numbers = #tpu.dot_dimension_numbers<[1], [0], [0], [1], [0, 0, 1, 1], [], []>} : vector<8x128xf32>, vector<128x384xf32>, vector<8x384xf32> -> vector<8x384xf32>
    %131 = arith.index_cast %c4_i32 : i32 to index
    %c0_48 = arith.constant 0 : index
    %c0_49 = arith.constant 0 : index
    %132 = vector.load %arg9[%131, %c0_48, %c0_49] : memref<8x8x384xf32, #tpu.memory_space<vmem>>, vector<1x8x384xf32>
    %133 = vector.shape_cast %132 : vector<1x8x384xf32> to vector<8x384xf32>
    %134 = vector.extract_strided_slice %133 {offsets = [0, 0], sizes = [8, 256], strides = [1, 1]} : vector<8x384xf32> to vector<8x256xf32>
    %135 = vector.extract_strided_slice %130 {offsets = [0, 0], sizes = [8, 256], strides = [1, 1]} : vector<8x384xf32> to vector<8x256xf32>
    %136 = arith.addf %134, %135 : vector<8x256xf32>
    %137 = arith.negf %136 : vector<8x256xf32>
    %138 = math.exp %137 : vector<8x256xf32>
    %cst_50 = arith.constant 1.000000e+00 : f32
    %139 = vector.broadcast %cst_50 : f32 to vector<8x256xf32>
    %140 = arith.addf %139, %138 : vector<8x256xf32>
    %141 = arith.divf %139, %140 : vector<8x256xf32>
    %142 = vector.extract_strided_slice %141 {offsets = [0, 0], sizes = [8, 128], strides = [1, 1]} : vector<8x256xf32> to vector<8x128xf32>
    %143 = vector.extract_strided_slice %141 {offsets = [0, 128], sizes = [8, 128], strides = [1, 1]} : vector<8x256xf32> to vector<8x128xf32>
    %144 = vector.extract_strided_slice %133 {offsets = [0, 256], sizes = [8, 128], strides = [1, 1]} : vector<8x384xf32> to vector<8x128xf32>
    %145 = vector.extract_strided_slice %130 {offsets = [0, 256], sizes = [8, 128], strides = [1, 1]} : vector<8x384xf32> to vector<8x128xf32>
    %146 = arith.addf %145, %9 : vector<8x128xf32>
    %147 = arith.mulf %142, %146 : vector<8x128xf32>
    %148 = arith.addf %144, %147 : vector<8x128xf32>
    %149 = math.tanh %148 : vector<8x128xf32>
    %150 = arith.subf %123, %149 : vector<8x128xf32>
    %151 = arith.mulf %143, %150 : vector<8x128xf32>
    %152 = arith.addf %149, %151 : vector<8x128xf32>
    %153 = arith.index_cast %c4_i32 : i32 to index
    %c0_51 = arith.constant 0 : index
    %c0_52 = arith.constant 0 : index
    %154 = vector.load %arg7[%153, %c0_51, %c0_52] : memref<8x8x128xf32, #tpu.memory_space<vmem>>, vector<1x8x128xf32>
    %155 = vector.shape_cast %154 : vector<1x8x128xf32> to vector<8x128xf32>
    %156 = vector.shape_cast %152 : vector<8x128xf32> to vector<1x8x128xf32>
    tpu.vector_store %arg7[%153, %c0_51, %c0_52], %156 {strides = array<i32>} : memref<8x8x128xf32, #tpu.memory_space<vmem>>, vector<1x8x128xf32>,
    %c5_i32 = arith.constant 5 : i32
    %c0_53 = arith.constant 0 : index
    %c0_54 = arith.constant 0 : index
    %c0_55 = arith.constant 0 : index
    %157 = vector.load %arg3[%c0_53, %c0_54, %c0_55] : memref<1x128x384xf32, #tpu.memory_space<vmem>>, vector<1x128x384xf32>
    %158 = vector.shape_cast %157 : vector<1x128x384xf32> to vector<128x384xf32>
    %cst_56 = arith.constant dense<0.000000e+00> : vector<8x384xf32>
    %159 = tpu.matmul %152, %158, %cst_56 {dimension_numbers = #tpu.dot_dimension_numbers<[1], [0], [0], [1], [0, 0, 1, 1], [], []>} : vector<8x128xf32>, vector<128x384xf32>, vector<8x384xf32> -> vector<8x384xf32>
    %160 = arith.index_cast %c5_i32 : i32 to index
    %c0_57 = arith.constant 0 : index
    %c0_58 = arith.constant 0 : index
    %161 = vector.load %arg9[%160, %c0_57, %c0_58] : memref<8x8x384xf32, #tpu.memory_space<vmem>>, vector<1x8x384xf32>
    %162 = vector.shape_cast %161 : vector<1x8x384xf32> to vector<8x384xf32>
    %163 = vector.extract_strided_slice %162 {offsets = [0, 0], sizes = [8, 256], strides = [1, 1]} : vector<8x384xf32> to vector<8x256xf32>
    %164 = vector.extract_strided_slice %159 {offsets = [0, 0], sizes = [8, 256], strides = [1, 1]} : vector<8x384xf32> to vector<8x256xf32>
    %165 = arith.addf %163, %164 : vector<8x256xf32>
    %166 = arith.negf %165 : vector<8x256xf32>
    %167 = math.exp %166 : vector<8x256xf32>
    %cst_59 = arith.constant 1.000000e+00 : f32
    %168 = vector.broadcast %cst_59 : f32 to vector<8x256xf32>
    %169 = arith.addf %168, %167 : vector<8x256xf32>
    %170 = arith.divf %168, %169 : vector<8x256xf32>
    %171 = vector.extract_strided_slice %170 {offsets = [0, 0], sizes = [8, 128], strides = [1, 1]} : vector<8x256xf32> to vector<8x128xf32>
    %172 = vector.extract_strided_slice %170 {offsets = [0, 128], sizes = [8, 128], strides = [1, 1]} : vector<8x256xf32> to vector<8x128xf32>
    %173 = vector.extract_strided_slice %162 {offsets = [0, 256], sizes = [8, 128], strides = [1, 1]} : vector<8x384xf32> to vector<8x128xf32>
    %174 = vector.extract_strided_slice %159 {offsets = [0, 256], sizes = [8, 128], strides = [1, 1]} : vector<8x384xf32> to vector<8x128xf32>
    %175 = arith.addf %174, %9 : vector<8x128xf32>
    %176 = arith.mulf %171, %175 : vector<8x128xf32>
    %177 = arith.addf %173, %176 : vector<8x128xf32>
    %178 = math.tanh %177 : vector<8x128xf32>
    %179 = arith.subf %152, %178 : vector<8x128xf32>
    %180 = arith.mulf %172, %179 : vector<8x128xf32>
    %181 = arith.addf %178, %180 : vector<8x128xf32>
    %182 = arith.index_cast %c5_i32 : i32 to index
    %c0_60 = arith.constant 0 : index
    %c0_61 = arith.constant 0 : index
    %183 = vector.load %arg7[%182, %c0_60, %c0_61] : memref<8x8x128xf32, #tpu.memory_space<vmem>>, vector<1x8x128xf32>
    %184 = vector.shape_cast %183 : vector<1x8x128xf32> to vector<8x128xf32>
    %185 = vector.shape_cast %181 : vector<8x128xf32> to vector<1x8x128xf32>
    tpu.vector_store %arg7[%182, %c0_60, %c0_61], %185 {strides = array<i32>} : memref<8x8x128xf32, #tpu.memory_space<vmem>>, vector<1x8x128xf32>,
    %c6_i32 = arith.constant 6 : i32
    %c0_62 = arith.constant 0 : index
    %c0_63 = arith.constant 0 : index
    %c0_64 = arith.constant 0 : index
    %186 = vector.load %arg3[%c0_62, %c0_63, %c0_64] : memref<1x128x384xf32, #tpu.memory_space<vmem>>, vector<1x128x384xf32>
    %187 = vector.shape_cast %186 : vector<1x128x384xf32> to vector<128x384xf32>
    %cst_65 = arith.constant dense<0.000000e+00> : vector<8x384xf32>
    %188 = tpu.matmul %181, %187, %cst_65 {dimension_numbers = #tpu.dot_dimension_numbers<[1], [0], [0], [1], [0, 0, 1, 1], [], []>} : vector<8x128xf32>, vector<128x384xf32>, vector<8x384xf32> -> vector<8x384xf32>
    %189 = arith.index_cast %c6_i32 : i32 to index
    %c0_66 = arith.constant 0 : index
    %c0_67 = arith.constant 0 : index
    %190 = vector.load %arg9[%189, %c0_66, %c0_67] : memref<8x8x384xf32, #tpu.memory_space<vmem>>, vector<1x8x384xf32>
    %191 = vector.shape_cast %190 : vector<1x8x384xf32> to vector<8x384xf32>
    %192 = vector.extract_strided_slice %191 {offsets = [0, 0], sizes = [8, 256], strides = [1, 1]} : vector<8x384xf32> to vector<8x256xf32>
    %193 = vector.extract_strided_slice %188 {offsets = [0, 0], sizes = [8, 256], strides = [1, 1]} : vector<8x384xf32> to vector<8x256xf32>
    %194 = arith.addf %192, %193 : vector<8x256xf32>
    %195 = arith.negf %194 : vector<8x256xf32>
    %196 = math.exp %195 : vector<8x256xf32>
    %cst_68 = arith.constant 1.000000e+00 : f32
    %197 = vector.broadcast %cst_68 : f32 to vector<8x256xf32>
    %198 = arith.addf %197, %196 : vector<8x256xf32>
    %199 = arith.divf %197, %198 : vector<8x256xf32>
    %200 = vector.extract_strided_slice %199 {offsets = [0, 0], sizes = [8, 128], strides = [1, 1]} : vector<8x256xf32> to vector<8x128xf32>
    %201 = vector.extract_strided_slice %199 {offsets = [0, 128], sizes = [8, 128], strides = [1, 1]} : vector<8x256xf32> to vector<8x128xf32>
    %202 = vector.extract_strided_slice %191 {offsets = [0, 256], sizes = [8, 128], strides = [1, 1]} : vector<8x384xf32> to vector<8x128xf32>
    %203 = vector.extract_strided_slice %188 {offsets = [0, 256], sizes = [8, 128], strides = [1, 1]} : vector<8x384xf32> to vector<8x128xf32>
    %204 = arith.addf %203, %9 : vector<8x128xf32>
    %205 = arith.mulf %200, %204 : vector<8x128xf32>
    %206 = arith.addf %202, %205 : vector<8x128xf32>
    %207 = math.tanh %206 : vector<8x128xf32>
    %208 = arith.subf %181, %207 : vector<8x128xf32>
    %209 = arith.mulf %201, %208 : vector<8x128xf32>
    %210 = arith.addf %207, %209 : vector<8x128xf32>
    %211 = arith.index_cast %c6_i32 : i32 to index
    %c0_69 = arith.constant 0 : index
    %c0_70 = arith.constant 0 : index
    %212 = vector.load %arg7[%211, %c0_69, %c0_70] : memref<8x8x128xf32, #tpu.memory_space<vmem>>, vector<1x8x128xf32>
    %213 = vector.shape_cast %212 : vector<1x8x128xf32> to vector<8x128xf32>
    %214 = vector.shape_cast %210 : vector<8x128xf32> to vector<1x8x128xf32>
    tpu.vector_store %arg7[%211, %c0_69, %c0_70], %214 {strides = array<i32>} : memref<8x8x128xf32, #tpu.memory_space<vmem>>, vector<1x8x128xf32>,
    %c7_i32 = arith.constant 7 : i32
    %c0_71 = arith.constant 0 : index
    %c0_72 = arith.constant 0 : index
    %c0_73 = arith.constant 0 : index
    %215 = vector.load %arg3[%c0_71, %c0_72, %c0_73] : memref<1x128x384xf32, #tpu.memory_space<vmem>>, vector<1x128x384xf32>
    %216 = vector.shape_cast %215 : vector<1x128x384xf32> to vector<128x384xf32>
    %cst_74 = arith.constant dense<0.000000e+00> : vector<8x384xf32>
    %217 = tpu.matmul %210, %216, %cst_74 {dimension_numbers = #tpu.dot_dimension_numbers<[1], [0], [0], [1], [0, 0, 1, 1], [], []>} : vector<8x128xf32>, vector<128x384xf32>, vector<8x384xf32> -> vector<8x384xf32>
    %218 = arith.index_cast %c7_i32 : i32 to index
    %c0_75 = arith.constant 0 : index
    %c0_76 = arith.constant 0 : index
    %219 = vector.load %arg9[%218, %c0_75, %c0_76] : memref<8x8x384xf32, #tpu.memory_space<vmem>>, vector<1x8x384xf32>
    %220 = vector.shape_cast %219 : vector<1x8x384xf32> to vector<8x384xf32>
    %221 = vector.extract_strided_slice %220 {offsets = [0, 0], sizes = [8, 256], strides = [1, 1]} : vector<8x384xf32> to vector<8x256xf32>
    %222 = vector.extract_strided_slice %217 {offsets = [0, 0], sizes = [8, 256], strides = [1, 1]} : vector<8x384xf32> to vector<8x256xf32>
    %223 = arith.addf %221, %222 : vector<8x256xf32>
    %224 = arith.negf %223 : vector<8x256xf32>
    %225 = math.exp %224 : vector<8x256xf32>
    %cst_77 = arith.constant 1.000000e+00 : f32
    %226 = vector.broadcast %cst_77 : f32 to vector<8x256xf32>
    %227 = arith.addf %226, %225 : vector<8x256xf32>
    %228 = arith.divf %226, %227 : vector<8x256xf32>
    %229 = vector.extract_strided_slice %228 {offsets = [0, 0], sizes = [8, 128], strides = [1, 1]} : vector<8x256xf32> to vector<8x128xf32>
    %230 = vector.extract_strided_slice %228 {offsets = [0, 128], sizes = [8, 128], strides = [1, 1]} : vector<8x256xf32> to vector<8x128xf32>
    %231 = vector.extract_strided_slice %220 {offsets = [0, 256], sizes = [8, 128], strides = [1, 1]} : vector<8x384xf32> to vector<8x128xf32>
    %232 = vector.extract_strided_slice %217 {offsets = [0, 256], sizes = [8, 128], strides = [1, 1]} : vector<8x384xf32> to vector<8x128xf32>
    %233 = arith.addf %232, %9 : vector<8x128xf32>
    %234 = arith.mulf %229, %233 : vector<8x128xf32>
    %235 = arith.addf %231, %234 : vector<8x128xf32>
    %236 = math.tanh %235 : vector<8x128xf32>
    %237 = arith.subf %210, %236 : vector<8x128xf32>
    %238 = arith.mulf %230, %237 : vector<8x128xf32>
    %239 = arith.addf %236, %238 : vector<8x128xf32>
    %240 = arith.index_cast %c7_i32 : i32 to index
    %c0_78 = arith.constant 0 : index
    %c0_79 = arith.constant 0 : index
    %241 = vector.load %arg7[%240, %c0_78, %c0_79] : memref<8x8x128xf32, #tpu.memory_space<vmem>>, vector<1x8x128xf32>
    %242 = vector.shape_cast %241 : vector<1x8x128xf32> to vector<8x128xf32>
    %243 = vector.shape_cast %239 : vector<8x128xf32> to vector<1x8x128xf32>
    tpu.vector_store %arg7[%240, %c0_78, %c0_79], %243 {strides = array<i32>} : memref<8x8x128xf32, #tpu.memory_space<vmem>>, vector<1x8x128xf32>,
    %c8_i32 = arith.constant 8 : i32
    %c0_80 = arith.constant 0 : index
    %c0_81 = arith.constant 0 : index
    %c0_82 = arith.constant 0 : index
    %244 = vector.load %arg8[%c0_80, %c0_81, %c0_82] : memref<1x8x128xf32, #tpu.memory_space<vmem>>, vector<1x8x128xf32>
    %245 = vector.shape_cast %244 : vector<1x8x128xf32> to vector<8x128xf32>
    %246 = vector.shape_cast %239 : vector<8x128xf32> to vector<1x8x128xf32>
    tpu.vector_store %arg8[%c0_80, %c0_81, %c0_82], %246 {strides = array<i32>} : memref<1x8x128xf32, #tpu.memory_space<vmem>>, vector<1x8x128xf32>,
    return
  }
  func.func @transform_0(%arg0: i32) -> (i32, i32, i32) {
    %c0_i32 = arith.constant 0 : i32
    %c0_i32_0 = arith.constant 0 : i32
    %c0_i32_1 = arith.constant 0 : i32
    %c0_i32_2 = arith.constant 0 : i32
    return %c0_i32, %c0_i32_0, %c0_i32_1 : i32, i32, i32
  }
  func.func @transform_1(%arg0: i32) -> (i32, i32, i32) {
    %c0_i32 = arith.constant 0 : i32
    %c0_i32_0 = arith.constant 0 : i32
    %c0_i32_1 = arith.constant 0 : i32
    return %arg0, %c0_i32, %c0_i32_0 : i32, i32, i32
  }
  func.func @transform_2(%arg0: i32) -> (i32, i32, i32) {
    %c0_i32 = arith.constant 0 : i32
    %c0_i32_0 = arith.constant 0 : i32
    %c0_i32_1 = arith.constant 0 : i32
    return %arg0, %c0_i32, %c0_i32_0 : i32, i32, i32
  }
  func.func @transform_3(%arg0: i32) -> (i32, i32, i32) {
    %c0_i32 = arith.constant 0 : i32
    %c0_i32_0 = arith.constant 0 : i32
    %c0_i32_1 = arith.constant 0 : i32
    return %arg0, %c0_i32, %c0_i32_0 : i32, i32, i32
  }
  func.func @transform_4(%arg0: i32) -> (i32, i32, i32) {
    %c0_i32 = arith.constant 0 : i32
    %c0_i32_0 = arith.constant 0 : i32
    %c0_i32_1 = arith.constant 0 : i32
    return %arg0, %c0_i32, %c0_i32_0 : i32, i32, i32
  }
  func.func @transform_5(%arg0: i32) -> (i32, i32, i32) {
    %c0_i32 = arith.constant 0 : i32
    %c0_i32_0 = arith.constant 0 : i32
    %c0_i32_1 = arith.constant 0 : i32
    return %arg0, %c0_i32, %c0_i32_0 : i32, i32, i32
  }
  func.func @transform_6(%arg0: i32) -> (i32, i32, i32) {
    %c0_i32 = arith.constant 0 : i32
    %c0_i32_0 = arith.constant 0 : i32
    %c0_i32_1 = arith.constant 0 : i32
    %c0_i32_2 = arith.constant 0 : i32
    return %c0_i32, %c0_i32_0, %c0_i32_1 : i32, i32, i32
  }
  func.func @transform_7(%arg0: i32) -> (i32, i32, i32) {
    %c0_i32 = arith.constant 0 : i32
    %c0_i32_0 = arith.constant 0 : i32
    %c0_i32_1 = arith.constant 0 : i32
    return %arg0, %c0_i32, %c0_i32_0 : i32, i32, i32
  }
}

</mosaic_0001>

<llo_original>
// kernel: tpu_custom_call.1
$region0: #{tpu_custom_call.1}
  #allocation0 [shape = 'u32[]', space=smem, size = 0x4, offset = 0x4, fixed_abs, tag = 'smem constant byte address 0x4 - core index']
  #allocation1 [shape = 'u32[144,128]{1,0:T(1,128)}', space=vmem, size = 0x12000, scoped, tag = 'internal scratch']
  #allocation2 [shape = 'f32[8,8,384]{2,1,0:T(8,128)}', space=vmem, size = 0x18000, scoped, tag = 'scratch operand']
  %s0 = inlined_call_operand.hbm [shape: f32[8,8,384], index: 0, kind: input, shape index: {}]
  %s1 = inlined_call_operand.hbm [shape: f32[2,128,384], index: 1, kind: input, shape index: {}]
  %s2 = inlined_call_operand.hbm [shape: f32[2,128,384], index: 2, kind: input, shape index: {}]
  %s3 = inlined_call_operand.hbm [shape: f32[2,1,384], index: 3, kind: input, shape index: {}]
  %s4 = inlined_call_operand.vmem [shape: f32[2,1,128], index: 4, kind: input, shape index: {}]
  %s5 = inlined_call_operand.vmem [shape: f32[2,8,128], index: 5, kind: input, shape index: {}]
  %s6 = inlined_call_operand.hbm [shape: f32[8,8,128], index: 6, kind: output, shape index: {0}]
  %s7 = inlined_call_operand.hbm [shape: f32[2,8,128], index: 7, kind: output, shape index: {1}]
  %8 = xla_tuple %s6, %s7
  %s9 = sld [smem:[#allocation0]]
  $region89: #{tpu_custom_call.1} parent=0
    _
  %s11 = ssub.s32 1, %s9
  %s12 = scalar_select 0, %s11, %s9
  $region1: #{tpu_custom_call.1} parent=0
    #allocation3 [shape = 'u8[98304]{0}', space=vmem, size = 0x18000, scoped, tag = 'input window, operand 0, single buffered']
    #allocation4 [shape = 's32[2]{0}', space=sflag, size = 0x8, scoped, tag = 'scoped memory for tpu_custom_call.1']
    #allocation5 [shape = 's32[2]{0}', space=sflag, size = 0x8, scoped, tag = 'scoped memory for tpu_custom_call.1']
    #allocation6 [shape = 'u8[393216]{0}', space=vmem, size = 0x60000, scoped, tag = 'input window, operand 1']
    #allocation7 [shape = 's32[2]{0}', space=sflag, size = 0x8, scoped, tag = 'scoped memory for tpu_custom_call.1']
    #allocation8 [shape = 'u8[393216]{0}', space=vmem, size = 0x60000, scoped, tag = 'input window, operand 2']
    #allocation9 [shape = 'u8[3072]{0}', space=vmem, size = 0xc00, scoped, tag = 'input window, operand 3']
    #allocation10 [shape = 's32[2]{0}', space=sflag, size = 0x8, scoped, tag = 'scoped memory for tpu_custom_call.1']
    #allocation11 [shape = 'u8[32768]{0}', space=vmem, size = 0x8000, scoped, tag = 'output window, operand 0, single buffered']
    #allocation12 [shape = 'u8[8192]{0}', space=vmem, size = 0x2000, scoped, tag = 'output window, operand 1']
    #allocation13 [shape = 's32[2]{0}', space=sflag, size = 0x8, scoped, tag = 'scoped memory for tpu_custom_call.1']
    %13 = vsyncpa [#allocation4], 0
    %14 = vsyncpa [#allocation7], 0
    %s15 = scalar_lea.sflag [#allocation7], 1
    %16 = vsyncpa %s15, 0
    %17 = vsyncpa [#allocation10], 0
    %s18 = scalar_lea.sflag [#allocation10], 1
    %19 = vsyncpa %s18, 0
    %20 = vsyncpa [#allocation5], 0
    %21 = vsyncpa [#allocation13], 0
    %s22 = scalar_lea.sflag [#allocation13], 1
    %23 = vsyncpa %s22, 0
    loop: start=0, step=1, limit=4
    $region2: #{tpu_custom_call.1} parent=1 // loop_pre_header
      _
    $region3: #{tpu_custom_call.1} parent=1 // loop_header
      %s25 = sphi 0, %s29
      %p26 = scmp.ge.s32.totalorder %s25, 4
      %s33 = sphi 0, %s33
      %s35 = sphi 0, %s33
      %s36 = sphi 0, %s35
      %s50 = sphi 0, %s36
      %s56 = sphi 0, %s58
      %s59 = sphi 0, %s56
      %s60 = sphi 0, %s59
      %s76 = sphi 0, %s60
      %s82 = sphi 0, %s84
      %s85 = sphi 0, %s82
      %s86 = sphi 0, %s85
      %s102 = sphi 0, %s86
      %s108 = sphi 0, %s110
      %s111 = sphi 0, %s108
      %s112 = sphi 0, %s111
      %s128 = sphi 0, %s112
      %s134 = sphi 0, %s136
      %s137 = sphi 0, %s134
      %s138 = sphi 0, %s137
      %s154 = sphi 0, %s138
      %s160 = sphi 0, %s162
      %s163 = sphi 0, %s160
      %s164 = sphi 0, %s163
      %s180 = sphi 0, %s164
      %s184 = sphi 0, %s184
      %s186 = sphi 0, %s184
      %s187 = sphi 0, %s186
      %s201 = sphi 0, %s187
      %s207 = sphi 0, %s209
      %s210 = sphi 0, %s207
      %s211 = sphi 0, %s210
      %s227 = sphi 0, %s211
    $region4: #{tpu_custom_call.1} parent=1 // loop_header_branch
      %28 = sbr.rel (%p26) target = $region8
    $region5: #{tpu_custom_call.1} parent=1 // loop_body
      %s30 = ssub.s32 %s25, 1
      %s31 = ssub.s32 %s25, 2
      %s32 = sadd.s32 %s25, 1
      %s34 = sadd.s32 %s33, 1
      %p37 = scmp.eq.s32.totalorder %s25, 1
      %p38 = scmp.ne.s32.totalorder %s33, %s35
      %p39 = scmp.eq.s32.totalorder %s25, 0
      %p40 = por %p38, %p39
      %p41 = scmp.ne.s32.totalorder %s33, %s35
      %p42 = scmp.eq.s32.totalorder %s30, 1
      %p43 = por %p41, %p42
      %p44 = scmp.ne.s32.totalorder %s35, %s36
      %p45 = scmp.eq.s32.totalorder %s30, 0
      %p46 = por %p44, %p45
      %p47 = scmp.ne.s32.totalorder %s35, %s36
      %p48 = scmp.eq.s32.totalorder %s31, 1
      %p49 = por %p47, %p48
      %p51 = scmp.ne.s32.totalorder %s36, %s50
      %p52 = scmp.eq.s32.totalorder %s31, 0
      %p53 = por %p51, %p52
      %s54 = ssub.s32 %s25, %s32
      %p55 = scmp.eq.s32.totalorder %s54, 0
      %s57 = sadd.s32 %s56, 1
      %s58 = scalar_select %p55, %s56, %s57
      %p61 = pneg %p55
      %p62 = scmp.eq.s32.totalorder %s25, 1
      %p63 = por %p61, %p62
      %p64 = scmp.ne.s32.totalorder %s56, %s59
      %p65 = scmp.eq.s32.totalorder %s25, 0
      %p66 = por %p64, %p65
      %p67 = scmp.ne.s32.totalorder %s56, %s59
      %p68 = scmp.eq.s32.totalorder %s30, 1
      %p69 = por %p67, %p68
      %p70 = scmp.ne.s32.totalorder %s59, %s60
      %p71 = scmp.eq.s32.totalorder %s30, 0
      %p72 = por %p70, %p71
      %p73 = scmp.ne.s32.totalorder %s59, %s60
      %p74 = scmp.eq.s32.totalorder %s31, 1
      %p75 = por %p73, %p74
      %p77 = scmp.ne.s32.totalorder %s60, %s76
      %p78 = scmp.eq.s32.totalorder %s31, 0
      %p79 = por %p77, %p78
      %s80 = ssub.s32 %s25, %s32
      %p81 = scmp.eq.s32.totalorder %s80, 0
      %s83 = sadd.s32 %s82, 1
      %s84 = scalar_select %p81, %s82, %s83
      %p87 = pneg %p81
      %p88 = scmp.eq.s32.totalorder %s25, 1
      %p89 = por %p87, %p88
      %p90 = scmp.ne.s32.totalorder %s82, %s85
      %p91 = scmp.eq.s32.totalorder %s25, 0
      %p92 = por %p90, %p91
      %p93 = scmp.ne.s32.totalorder %s82, %s85
      %p94 = scmp.eq.s32.totalorder %s30, 1
      %p95 = por %p93, %p94
      %p96 = scmp.ne.s32.totalorder %s85, %s86
      %p97 = scmp.eq.s32.totalorder %s30, 0
      %p98 = por %p96, %p97
      %p99 = scmp.ne.s32.totalorder %s85, %s86
      %p100 = scmp.eq.s32.totalorder %s31, 1
      %p101 = por %p99, %p100
      %p103 = scmp.ne.s32.totalorder %s86, %s102
      %p104 = scmp.eq.s32.totalorder %s31, 0
      %p105 = por %p103, %p104
      %s106 = ssub.s32 %s25, %s32
      %p107 = scmp.eq.s32.totalorder %s106, 0
      %s109 = sadd.s32 %s108, 1
      %s110 = scalar_select %p107, %s108, %s109
      %p113 = pneg %p107
      %p114 = scmp.eq.s32.totalorder %s25, 1
      %p115 = por %p113, %p114
      %p116 = scmp.ne.s32.totalorder %s108, %s111
      %p117 = scmp.eq.s32.totalorder %s25, 0
      %p118 = por %p116, %p117
      %p119 = scmp.ne.s32.totalorder %s108, %s111
      %p120 = scmp.eq.s32.totalorder %s30, 1
      %p121 = por %p119, %p120
      %p122 = scmp.ne.s32.totalorder %s111, %s112
      %p123 = scmp.eq.s32.totalorder %s30, 0
      %p124 = por %p122, %p123
      %p125 = scmp.ne.s32.totalorder %s111, %s112
      %p126 = scmp.eq.s32.totalorder %s31, 1
      %p127 = por %p125, %p126
      %p129 = scmp.ne.s32.totalorder %s112, %s128
      %p130 = scmp.eq.s32.totalorder %s31, 0
      %p131 = por %p129, %p130
      %s132 = ssub.s32 %s25, %s32
      %p133 = scmp.eq.s32.totalorder %s132, 0
      %s135 = sadd.s32 %s134, 1
      %s136 = scalar_select %p133, %s134, %s135
      %p139 = pneg %p133
      %p140 = scmp.eq.s32.totalorder %s25, 1
      %p141 = por %p139, %p140
      %p142 = scmp.ne.s32.totalorder %s134, %s137
      %p143 = scmp.eq.s32.totalorder %s25, 0
      %p144 = por %p142, %p143
      %p145 = scmp.ne.s32.totalorder %s134, %s137
      %p146 = scmp.eq.s32.totalorder %s30, 1
      %p147 = por %p145, %p146
      %p148 = scmp.ne.s32.totalorder %s137, %s138
      %p149 = scmp.eq.s32.totalorder %s30, 0
      %p150 = por %p148, %p149
      %p151 = scmp.ne.s32.totalorder %s137, %s138
      %p152 = scmp.eq.s32.totalorder %s31, 1
      %p153 = por %p151, %p152
      %p155 = scmp.ne.s32.totalorder %s138, %s154
      %p156 = scmp.eq.s32.totalorder %s31, 0
      %p157 = por %p155, %p156
      %s158 = ssub.s32 %s25, %s32
      %p159 = scmp.eq.s32.totalorder %s158, 0
      %s161 = sadd.s32 %s160, 1
      %s162 = scalar_select %p159, %s160, %s161
      %p165 = pneg %p159
      %p166 = scmp.eq.s32.totalorder %s25, 1
      %p167 = por %p165, %p166
      %p168 = scmp.ne.s32.totalorder %s160, %s163
      %p169 = scmp.eq.s32.totalorder %s25, 0
      %p170 = por %p168, %p169
      %p171 = scmp.ne.s32.totalorder %s160, %s163
      %p172 = scmp.eq.s32.totalorder %s30, 1
      %p173 = por %p171, %p172
      %p174 = scmp.ne.s32.totalorder %s163, %s164
      %p175 = scmp.eq.s32.totalorder %s30, 0
      %p176 = por %p174, %p175
      %p177 = scmp.ne.s32.totalorder %s163, %s164
      %p178 = scmp.eq.s32.totalorder %s31, 1
      %p179 = por %p177, %p178
      %p181 = scmp.ne.s32.totalorder %s164, %s180
      %p182 = scmp.eq.s32.totalorder %s31, 0
      %p183 = por %p181, %p182
      %s185 = sadd.s32 %s184, 1
      %p188 = scmp.eq.s32.totalorder %s25, 1
      %p189 = scmp.ne.s32.totalorder %s184, %s186
      %p190 = scmp.eq.s32.totalorder %s25, 0
      %p191 = por %p189, %p190
      %p192 = scmp.ne.s32.totalorder %s184, %s186
      %p193 = scmp.eq.s32.totalorder %s30, 1
      %p194 = por %p192, %p193
      %p195 = scmp.ne.s32.totalorder %s186, %s187
      %p196 = scmp.eq.s32.totalorder %s30, 0
      %p197 = por %p195, %p196
      %p198 = scmp.ne.s32.totalorder %s186, %s187
      %p199 = scmp.eq.s32.totalorder %s31, 1
      %p200 = por %p198, %p199
      %p202 = scmp.ne.s32.totalorder %s187, %s201
      %p203 = scmp.eq.s32.totalorder %s31, 0
      %p204 = por %p202, %p203
      %s205 = ssub.s32 %s25, %s32
      %p206 = scmp.eq.s32.totalorder %s205, 0
      %s208 = sadd.s32 %s207, 1
      %s209 = scalar_select %p206, %s207, %s208
      %p212 = pneg %p206
      %p213 = scmp.eq.s32.totalorder %s25, 1
      %p214 = por %p212, %p213
      %p215 = scmp.ne.s32.totalorder %s207, %s210
      %p216 = scmp.eq.s32.totalorder %s25, 0
      %p217 = por %p215, %p216
      %p218 = scmp.ne.s32.totalorder %s207, %s210
      %p219 = scmp.eq.s32.totalorder %s30, 1
      %p220 = por %p218, %p219
      %p221 = scmp.ne.s32.totalorder %s210, %s211
      %p222 = scmp.eq.s32.totalorder %s30, 0
      %p223 = por %p221, %p222
      %p224 = scmp.ne.s32.totalorder %s210, %s211
      %p225 = scmp.eq.s32.totalorder %s31, 1
      %p226 = por %p224, %p225
      %p228 = scmp.ne.s32.totalorder %s211, %s227
      %p229 = scmp.eq.s32.totalorder %s31, 0
      %p230 = por %p228, %p229
      %p231 = scmp.le.s32.totalorder 1, %s25
      %p232 = scmp.lt.s32.totalorder %s25, 3
      %p233 = pnand %p231, %p232
      %p234 = pneg %p233
      // Predicated region
      $region9: #{tpu_custom_call.1} parent=5 // pred_check
        _
      $region10: #{tpu_custom_call.1} parent=5 // pred_check_branch
        %236 = sbr.rel (%p233) target = $region12
      $region11: #{tpu_custom_call.1} parent=5 // pred_region
        %s237 = ssub.s32 %s25, 1
        // Predicated region
        $region13: #{tpu_custom_call.1} parent=11 // pred_check
          %p238 = pneg %p46
        $region14: #{tpu_custom_call.1} parent=11 // pred_check_branch
          %240 = sbr.rel (%p238) target = $region16
        $region15: #{tpu_custom_call.1} parent=11 // pred_region
          %s242 = ssub.s32 3072, 3072
          %243 = vsyncadd [#allocation4], %s242
          %s244 = sshll.u32 [#allocation3], 4
          %s245 = int_to_ptr.vmem [resolvable:$true] %s244
          %250 = dma.hbm_to_vmem [thread:$0]  %s0, 3072, %s245, [#allocation4], 384, 384, 24
        $region16: #{tpu_custom_call.1} parent=11 // pred_fallthru
          _
      $region12: #{tpu_custom_call.1} parent=5 // pred_fallthru
        _
      %p251 = scmp.lt.s32.totalorder %s25, 2
      // Predicated region
      $region17: #{tpu_custom_call.1} parent=5 // pred_check
        %p252 = pneg %p251
      $region18: #{tpu_custom_call.1} parent=5 // pred_check_branch
        %254 = sbr.rel (%p252) target = $region20
      $region19: #{tpu_custom_call.1} parent=5 // pred_region
        // Predicated region
        $region21: #{tpu_custom_call.1} parent=19 // pred_check
          %p255 = pneg %p66
        $region22: #{tpu_custom_call.1} parent=19 // pred_check_branch
          %257 = sbr.rel (%p255) target = $region24
        $region23: #{tpu_custom_call.1} parent=19 // pred_region
          %s258 = sand.u32 %s25, 1
          %s259 = scalar_lea.sflag [#allocation7], %s258
          %s260 = sand.u32 %s56, 1
          %s261 = smul.addr %s260, 384
          %s262 = scalar_lea.vmem [#allocation6], %s261
          %s264 = ssub.s32 6144, 6144
          %265 = vsyncadd %s259, %s264
          %s266 = smul.addr %s25, 48
          %s267 = smul.addr %s266, 128
          %s268 = scalar_lea.hbm %s1, %s267
          %s269 = sshll.u32 %s262, 4
          %s270 = int_to_ptr.vmem [resolvable:$true] %s269
          %275 = dma.hbm_to_vmem [thread:$0]  %s268, 6144, %s270, %s259, 384, 384, 24
        $region24: #{tpu_custom_call.1} parent=19 // pred_fallthru
          _
        // Predicated region
        $region25: #{tpu_custom_call.1} parent=19 // pred_check
          %p276 = pneg %p92
        $region26: #{tpu_custom_call.1} parent=19 // pred_check_branch
          %278 = sbr.rel (%p276) target = $region28
        $region27: #{tpu_custom_call.1} parent=19 // pred_region
          %s279 = sand.u32 %s25, 1
          %s280 = scalar_lea.sflag [#allocation7], %s279
          %s281 = sand.u32 %s82, 1
          %s282 = smul.addr %s281, 384
          %s283 = scalar_lea.vmem [#allocation8], %s282
          %s285 = ssub.s32 6144, 6144
          %286 = vsyncadd %s280, %s285
          %s287 = smul.addr %s25, 48
          %s288 = smul.addr %s287, 128
          %s289 = scalar_lea.hbm %s2, %s288
          %s290 = sshll.u32 %s283, 4
          %s291 = int_to_ptr.vmem [resolvable:$true] %s290
          %296 = dma.hbm_to_vmem [thread:$0]  %s289, 6144, %s291, %s280, 384, 384, 24
        $region28: #{tpu_custom_call.1} parent=19 // pred_fallthru
          _
        // Predicated region
        $region29: #{tpu_custom_call.1} parent=19 // pred_check
          %p297 = pneg %p118
        $region30: #{tpu_custom_call.1} parent=19 // pred_check_branch
          %299 = sbr.rel (%p297) target = $region32
        $region31: #{tpu_custom_call.1} parent=19 // pred_region
          %s300 = sand.u32 %s108, 1
          %s301 = scalar_lea.sflag [#allocation10], %s300
          %s302 = sand.u32 %s108, 1
          %s303 = smul.addr %s302, 3
          %s304 = scalar_lea.vmem [#allocation9], %s303
          %s306 = ssub.s32 48, 48
          %307 = vsyncadd %s301, %s306
          %s308 = smul.addr %s25, 3
          %s309 = smul.addr %s308, 16
          %s310 = scalar_lea.hbm %s3, %s309
          %s312 = sshll.u32 %s304, 4
          %s313 = int_to_ptr.vmem [resolvable:$true] %s312
          %315 = dma.hbm_to_vmem [thread:$0]  %s310, 48, %s313, %s301
        $region32: #{tpu_custom_call.1} parent=19 // pred_fallthru
          _
        // Predicated region
        $region33: #{tpu_custom_call.1} parent=19 // pred_check
          %p316 = pneg %p144
        $region34: #{tpu_custom_call.1} parent=19 // pred_check_branch
          %318 = sbr.rel (%p316) target = $region36
        $region35: #{tpu_custom_call.1} parent=19 // pred_region
          %p319 = scmp.lt.s32.totalorder %s25, 1
          %s320 = scalar_select %p319, %s25, 1
          %s321 = scalar_lea.vmem %s4, %s320
        $region36: #{tpu_custom_call.1} parent=19 // pred_fallthru
          _
        // Predicated region
        $region37: #{tpu_custom_call.1} parent=19 // pred_check
          %p322 = pneg %p170
        $region38: #{tpu_custom_call.1} parent=19 // pred_check_branch
          %324 = sbr.rel (%p322) target = $region40
        $region39: #{tpu_custom_call.1} parent=19 // pred_region
          %p325 = scmp.lt.s32.totalorder %s25, 1
          %s326 = scalar_select %p325, %s25, 1
          %s327 = smul.addr %s326, 8
          %s328 = scalar_lea.vmem %s5, %s327
        $region40: #{tpu_custom_call.1} parent=19 // pred_fallthru
          _
      $region20: #{tpu_custom_call.1} parent=5 // pred_fallthru
        _
      %p329 = scmp.le.s32.totalorder 1, %s25
      %p330 = scmp.lt.s32.totalorder %s25, 3
      %p331 = pnand %p329, %p330
      %p332 = pneg %p331
      // Predicated region
      $region41: #{tpu_custom_call.1} parent=5 // pred_check
        _
      $region42: #{tpu_custom_call.1} parent=5 // pred_check_branch
        %334 = sbr.rel (%p331) target = $region44
      $region43: #{tpu_custom_call.1} parent=5 // pred_region
        %s335 = ssub.s32 %s25, 1
        // Predicated region
        $region45: #{tpu_custom_call.1} parent=43 // pred_check
          %p336 = pneg %p46
        $region46: #{tpu_custom_call.1} parent=43 // pred_check_branch
          %338 = sbr.rel (%p336) target = $region48
        $region47: #{tpu_custom_call.1} parent=43 // pred_region
          %339 = dma.done [#allocation4], 3072
        $region48: #{tpu_custom_call.1} parent=43 // pred_fallthru
          _
        %s340 = sand.u32 %s30, 1
        %s341 = scalar_lea.sflag [#allocation7], %s340
        %s342 = sand.u32 %s59, 1
        %s343 = smul.addr %s342, 384
        %s344 = scalar_lea.vmem [#allocation6], %s343
        // Predicated region
        $region49: #{tpu_custom_call.1} parent=43 // pred_check
          %p345 = pneg %p72
        $region50: #{tpu_custom_call.1} parent=43 // pred_check_branch
          %347 = sbr.rel (%p345) target = $region52
        $region51: #{tpu_custom_call.1} parent=43 // pred_region
          %348 = dma.done %s341, 6144
        $region52: #{tpu_custom_call.1} parent=43 // pred_fallthru
          _
        %s349 = sand.u32 %s30, 1
        %s350 = scalar_lea.sflag [#allocation7], %s349
        %s351 = sand.u32 %s85, 1
        %s352 = smul.addr %s351, 384
        %s353 = scalar_lea.vmem [#allocation8], %s352
        // Predicated region
        $region53: #{tpu_custom_call.1} parent=43 // pred_check
          %p354 = pneg %p98
        $region54: #{tpu_custom_call.1} parent=43 // pred_check_branch
          %356 = sbr.rel (%p354) target = $region56
        $region55: #{tpu_custom_call.1} parent=43 // pred_region
          %357 = dma.done %s350, 6144
        $region56: #{tpu_custom_call.1} parent=43 // pred_fallthru
          _
        %s358 = sand.u32 %s111, 1
        %s359 = scalar_lea.sflag [#allocation10], %s358
        %s360 = sand.u32 %s111, 1
        %s361 = smul.addr %s360, 3
        %s362 = scalar_lea.vmem [#allocation9], %s361
        // Predicated region
        $region57: #{tpu_custom_call.1} parent=43 // pred_check
          %p363 = pneg %p124
        $region58: #{tpu_custom_call.1} parent=43 // pred_check_branch
          %365 = sbr.rel (%p363) target = $region60
        $region59: #{tpu_custom_call.1} parent=43 // pred_region
          %366 = dma.done %s359, 48
        $region60: #{tpu_custom_call.1} parent=43 // pred_fallthru
          _
        %p367 = pneg %p46
        %p368 = pneg %p43
        %s369 = sand.u32 %s30, 1
        %s370 = scalar_lea.sflag [#allocation7], %s369
        %s371 = sand.u32 %s59, 1
        %s372 = smul.addr %s371, 384
        %s373 = scalar_lea.vmem [#allocation6], %s372
        %p374 = pneg %p72
        %p375 = pneg %p69
        %s376 = sand.u32 %s30, 1
        %s377 = scalar_lea.sflag [#allocation7], %s376
        %s378 = sand.u32 %s85, 1
        %s379 = smul.addr %s378, 384
        %s380 = scalar_lea.vmem [#allocation8], %s379
        %p381 = pneg %p98
        %p382 = pneg %p95
        %s383 = sand.u32 %s111, 1
        %s384 = scalar_lea.sflag [#allocation10], %s383
        %s385 = sand.u32 %s111, 1
        %s386 = smul.addr %s385, 3
        %s387 = scalar_lea.vmem [#allocation9], %s386
        %p388 = pneg %p124
        %p389 = pneg %p121
        %p390 = scmp.lt.s32.totalorder %s30, 1
        %s391 = scalar_select %p390, %s30, 1
        %s392 = scalar_lea.vmem %s4, %s391
        %p393 = pneg %p150
        %p394 = pneg %p147
        %p395 = scmp.lt.s32.totalorder %s30, 1
        %s396 = scalar_select %p395, %s30, 1
        %s397 = smul.addr %s396, 8
        %s398 = scalar_lea.vmem %s5, %s397
        %p399 = pneg %p176
        %p400 = pneg %p173
        %p401 = pneg %p197
        %p402 = pneg %p194
        %p403 = pneg %p223
        %p404 = pneg %p220
        %s405 = sand.u32 %s210, 1
        %s406 = scalar_lea.sflag [#allocation13], %s405
        %s407 = sand.u32 %s210, 1
        %s408 = smul.addr %s407, 8
        %s409 = scalar_lea.vmem [#allocation12], %s408
        %p410 = scmp.lt.s32.totalorder %s30, 1
        %s411 = scalar_select %p410, %s30, 1
        %s412 = scalar_lea.vmem %s4, %s411
        %p413 = scmp.lt.s32.totalorder %s30, 1
        %s414 = scalar_select %p413, %s30, 1
        %s415 = smul.addr %s414, 8
        %s416 = scalar_lea.vmem %s5, %s415
        %p417 = scmp.eq.s32.totalorder %s30, 0
        // Predicated region
        $region61: #{tpu_custom_call.1} parent=43 // pred_check
          %p418 = pneg %p417
        $region62: #{tpu_custom_call.1} parent=43 // pred_check_branch
          %420 = sbr.rel (%p418) target = $region64
        $region63: #{tpu_custom_call.1} parent=43 // pred_region
          %v421 = vld [vmem:[#allocation3] sm:$0xff]
          %v422 = vld [vmem:[#allocation3 + $0x8] sm:$0xff]
          %v423 = vld [vmem:[#allocation3 + $0x10] sm:$0xff]
          %v424 = vld [vmem:[#allocation3 + $0x18] sm:$0xff]
          %v425 = vld [vmem:[#allocation3 + $0x20] sm:$0xff]
          %v426 = vld [vmem:[#allocation3 + $0x28] sm:$0xff]
          %v427 = vld [vmem:[#allocation3 + $0x30] sm:$0xff]
          %v428 = vld [vmem:[#allocation3 + $0x38] sm:$0xff]
          %v429 = vld [vmem:[#allocation3 + $0x40] sm:$0xff]
          %v430 = vld [vmem:[#allocation3 + $0x48] sm:$0xff]
          %v431 = vld [vmem:[#allocation3 + $0x50] sm:$0xff]
          %v432 = vld [vmem:[#allocation3 + $0x58] sm:$0xff]
          %v433 = vld [vmem:[#allocation3 + $0x60] sm:$0xff]
          %v434 = vld [vmem:[#allocation3 + $0x68] sm:$0xff]
          %v435 = vld [vmem:[#allocation3 + $0x70] sm:$0xff]
          %v436 = vld [vmem:[#allocation3 + $0x78] sm:$0xff]
          %v437 = vld [vmem:[#allocation3 + $0x80] sm:$0xff]
          %v438 = vld [vmem:[#allocation3 + $0x88] sm:$0xff]
          %v439 = vld [vmem:[#allocation3 + $0x90] sm:$0xff]
          %v440 = vld [vmem:[#allocation3 + $0x98] sm:$0xff]
          %v441 = vld [vmem:[#allocation3 + $0xa0] sm:$0xff]
          %v442 = vld [vmem:[#allocation3 + $0xa8] sm:$0xff]
          %v443 = vld [vmem:[#allocation3 + $0xb0] sm:$0xff]
          %v444 = vld [vmem:[#allocation3 + $0xb8] sm:$0xff]
          %445 = vst [vmem:[#allocation2] sm:$0xff] %v421
          %446 = vst [vmem:[#allocation2 + $0x8] sm:$0xff] %v422
          %447 = vst [vmem:[#allocation2 + $0x10] sm:$0xff] %v423
          %448 = vst [vmem:[#allocation2 + $0x18] sm:$0xff] %v424
          %449 = vst [vmem:[#allocation2 + $0x20] sm:$0xff] %v425
          %450 = vst [vmem:[#allocation2 + $0x28] sm:$0xff] %v426
          %451 = vst [vmem:[#allocation2 + $0x30] sm:$0xff] %v427
          %452 = vst [vmem:[#allocation2 + $0x38] sm:$0xff] %v428
          %453 = vst [vmem:[#allocation2 + $0x40] sm:$0xff] %v429
          %454 = vst [vmem:[#allocation2 + $0x48] sm:$0xff] %v430
          %455 = vst [vmem:[#allocation2 + $0x50] sm:$0xff] %v431
          %456 = vst [vmem:[#allocation2 + $0x58] sm:$0xff] %v432
          %457 = vst [vmem:[#allocation2 + $0x60] sm:$0xff] %v433
          %458 = vst [vmem:[#allocation2 + $0x68] sm:$0xff] %v434
          %459 = vst [vmem:[#allocation2 + $0x70] sm:$0xff] %v435
          %460 = vst [vmem:[#allocation2 + $0x78] sm:$0xff] %v436
          %461 = vst [vmem:[#allocation2 + $0x80] sm:$0xff] %v437
          %462 = vst [vmem:[#allocation2 + $0x88] sm:$0xff] %v438
          %463 = vst [vmem:[#allocation2 + $0x90] sm:$0xff] %v439
          %464 = vst [vmem:[#allocation2 + $0x98] sm:$0xff] %v440
          %465 = vst [vmem:[#allocation2 + $0xa0] sm:$0xff] %v441
          %466 = vst [vmem:[#allocation2 + $0xa8] sm:$0xff] %v442
          %467 = vst [vmem:[#allocation2 + $0xb0] sm:$0xff] %v443
          %468 = vst [vmem:[#allocation2 + $0xb8] sm:$0xff] %v444
        $region64: #{tpu_custom_call.1} parent=43 // pred_fallthru
          _
        %p469 = scmp.gt.s32.totalorder %s30, 0
        // Predicated region
        $region65: #{tpu_custom_call.1} parent=43 // pred_check
          %p470 = pneg %p469
        $region66: #{tpu_custom_call.1} parent=43 // pred_check_branch
          %472 = sbr.rel (%p470) target = $region68
        $region67: #{tpu_custom_call.1} parent=43 // pred_region
          %v473 = vld [vmem:[#allocation11] sm:$0xff]
          %v474 = vld [vmem:[#allocation11 + $0x8] sm:$0xff]
          %v475 = vld [vmem:[#allocation11 + $0x10] sm:$0xff]
          %v476 = vld [vmem:[#allocation11 + $0x18] sm:$0xff]
          %v477 = vld [vmem:[#allocation11 + $0x20] sm:$0xff]
          %v478 = vld [vmem:[#allocation11 + $0x28] sm:$0xff]
          %v479 = vld [vmem:[#allocation11 + $0x30] sm:$0xff]
          %v480 = vld [vmem:[#allocation11 + $0x38] sm:$0xff]
          %v481 = vld [vmem:[%s344] sm:$0xff]
          %v482 = vld [vmem:[%s344 + $0x8] sm:$0xff]
          %v483 = vld [vmem:[%s344 + $0x10] sm:$0xff]
          %v484 = vld [vmem:[%s344 + $0x18] sm:$0xff]
          %v485 = vld [vmem:[%s344 + $0x20] sm:$0xff]
          %v486 = vld [vmem:[%s344 + $0x28] sm:$0xff]
          %v487 = vld [vmem:[%s344 + $0x30] sm:$0xff]
          %v488 = vld [vmem:[%s344 + $0x38] sm:$0xff]
          %v489 = vld [vmem:[%s344 + $0x40] sm:$0xff]
          %v490 = vld [vmem:[%s344 + $0x48] sm:$0xff]
          %v491 = vld [vmem:[%s344 + $0x50] sm:$0xff]
          %v492 = vld [vmem:[%s344 + $0x58] sm:$0xff]
          %v493 = vld [vmem:[%s344 + $0x60] sm:$0xff]
          %v494 = vld [vmem:[%s344 + $0x68] sm:$0xff]
          %v495 = vld [vmem:[%s344 + $0x70] sm:$0xff]
          %v496 = vld [vmem:[%s344 + $0x78] sm:$0xff]
          %v497 = vld [vmem:[%s344 + $0x80] sm:$0xff]
          %v498 = vld [vmem:[%s344 + $0x88] sm:$0xff]
          %v499 = vld [vmem:[%s344 + $0x90] sm:$0xff]
          %v500 = vld [vmem:[%s344 + $0x98] sm:$0xff]
          %v501 = vld [vmem:[%s344 + $0xa0] sm:$0xff]
          %v502 = vld [vmem:[%s344 + $0xa8] sm:$0xff]
          %v503 = vld [vmem:[%s344 + $0xb0] sm:$0xff]
          %v504 = vld [vmem:[%s344 + $0xb8] sm:$0xff]
          %v505 = vld [vmem:[%s344 + $0xc0] sm:$0xff]
          %v506 = vld [vmem:[%s344 + $0xc8] sm:$0xff]
          %v507 = vld [vmem:[%s344 + $0xd0] sm:$0xff]
          %v508 = vld [vmem:[%s344 + $0xd8] sm:$0xff]
          %v509 = vld [vmem:[%s344 + $0xe0] sm:$0xff]
          %v510 = vld [vmem:[%s344 + $0xe8] sm:$0xff]
          %v511 = vld [vmem:[%s344 + $0xf0] sm:$0xff]
          %v512 = vld [vmem:[%s344 + $0xf8] sm:$0xff]
          %v513 = vld [vmem:[%s344 + $0x100] sm:$0xff]
          %v514 = vld [vmem:[%s344 + $0x108] sm:$0xff]
          %v515 = vld [vmem:[%s344 + $0x110] sm:$0xff]
          %v516 = vld [vmem:[%s344 + $0x118] sm:$0xff]
          %v517 = vld [vmem:[%s344 + $0x120] sm:$0xff]
          %v518 = vld [vmem:[%s344 + $0x128] sm:$0xff]
          %v519 = vld [vmem:[%s344 + $0x130] sm:$0xff]
          %v520 = vld [vmem:[%s344 + $0x138] sm:$0xff]
          %v521 = vld [vmem:[%s344 + $0x140] sm:$0xff]
          %v522 = vld [vmem:[%s344 + $0x148] sm:$0xff]
          %v523 = vld [vmem:[%s344 + $0x150] sm:$0xff]
          %v524 = vld [vmem:[%s344 + $0x158] sm:$0xff]
          %v525 = vld [vmem:[%s344 + $0x160] sm:$0xff]
          %v526 = vld [vmem:[%s344 + $0x168] sm:$0xff]
          %v527 = vld [vmem:[%s344 + $0x170] sm:$0xff]
          %v528 = vld [vmem:[%s344 + $0x178] sm:$0xff]
          %v529 = vld [vmem:[%s362] sm:$0x7]
          %v531 = vlaneseq
          %v532 = vshrl.u32 %v531, 7
          %v533 = vsub.s32 0, %v532
          %v534 = vrot.slane %v529, %v533
          %v535 = vlaneseq
          %v536 = vshrl.u32 %v535, 7
          %v537 = vsub.s32 1, %v536
          %v538 = vrot.slane %v529, %v537
          %v539 = vlaneseq
          %v540 = vshrl.u32 %v539, 7
          %v541 = vsub.s32 2, %v540
          %v542 = vrot.slane %v529, %v541
          %546 = vmatprep.subr.mxu0 %v482
          %547 = vmatpush1.msra.mxu0 %v481
          %548 = vmatprep.subr.mxu0 %v485
          %549 = vmatpush1.msra.mxu0 %v484
          %550 = vmatprep.subr.mxu0 %v488
          %551 = vmatpush1.msra.mxu0 %v487
          %552 = vmatprep.subr.mxu0 %v491
          %553 = vmatpush1.msra.mxu0 %v490
          %554 = vmatprep.subr.mxu0 %v494
          %555 = vmatpush1.msra.mxu0 %v493
          %556 = vmatprep.subr.mxu0 %v497
          %557 = vmatpush1.msra.mxu0 %v496
          %558 = vmatprep.subr.mxu0 %v500
          %559 = vmatpush1.msra.mxu0 %v499
          %560 = vmatprep.subr.mxu0 %v503
          %561 = vmatpush1.msra.mxu0 %v502
          %562 = vmatprep.subr.mxu0 %v506
          %563 = vmatpush1.msra.mxu0 %v505
          %564 = vmatprep.subr.mxu0 %v509
          %565 = vmatpush1.msra.mxu0 %v508
          %566 = vmatprep.subr.mxu0 %v512
          %567 = vmatpush1.msra.mxu0 %v511
          %568 = vmatprep.subr.mxu0 %v515
          %569 = vmatpush1.msra.mxu0 %v514
          %570 = vmatprep.subr.mxu0 %v518
          %571 = vmatpush1.msra.mxu0 %v517
          %572 = vmatprep.subr.mxu0 %v521
          %573 = vmatpush1.msra.mxu0 %v520
          %574 = vmatprep.subr.mxu0 %v524
          %575 = vmatpush1.msra.mxu0 %v523
          %576 = vmatprep.subr.mxu0 %v527
          %577 = vmatpush1.msra.mxu0 %v526
          %578 = vmatprep.subr.mxu0 0.0
          %579 = vmatpush1.msra.mxu0 0.0
          %580 = vmatprep.subr.mxu0 0.0
          %581 = vmatpush1.msra.mxu0 0.0
          %582 = vmatprep.subr.mxu0 0.0
          %583 = vmatpush1.msra.mxu0 0.0
          %584 = vmatprep.subr.mxu0 0.0
          %585 = vmatpush1.msra.mxu0 0.0
          %586 = vmatprep.subr.mxu0 0.0
          %587 = vmatpush1.msra.mxu0 0.0
          %588 = vmatprep.subr.mxu0 0.0
          %589 = vmatpush1.msra.mxu0 0.0
          %590 = vmatprep.subr.mxu0 0.0
          %591 = vmatpush1.msra.mxu0 0.0
          %592 = vmatprep.subr.mxu0 0.0
          %593 = vmatpush1.msra.mxu0 0.0
          %594 = vmatprep.subr.mxu0 0.0
          %595 = vmatpush1.msra.mxu0 0.0
          %596 = vmatprep.subr.mxu0 0.0
          %597 = vmatpush1.msra.mxu0 0.0
          %598 = vmatprep.subr.mxu0 0.0
          %599 = vmatpush1.msra.mxu0 0.0
          %600 = vmatprep.subr.mxu0 0.0
          %601 = vmatpush1.msra.mxu0 0.0
          %602 = vmatprep.subr.mxu0 0.0
          %603 = vmatpush1.msra.mxu0 0.0
          %604 = vmatprep.subr.mxu0 0.0
          %605 = vmatpush1.msra.mxu0 0.0
          %606 = vmatprep.subr.mxu0 0.0
          %607 = vmatpush1.msra.mxu0 0.0
          %608 = vmatprep.subr.mxu0 0.0
          %609 = vmatpush1.msra.mxu0 0.0
          %610 = vmatprep.mubr.f32.mxu0 0.0
          %611 = vmatmul.mubr.f32.gmra.mrb[0].mxu0 %v473
          %v612 = vpop.f32.mrb[0].mxu0
          %v613 = vadd.f32 %v534, %v612
          %v614 = vpop.f32.mrb[0].mxu0
          %v615 = vadd.f32 %v538, %v614
          %616 = vmatprep.mubr.f32.mxu0 0.0
          %617 = vmatmul.mubr.f32.gmra.mrb[0].mxu0 %v474
          %v618 = vpop.f32.mrb[0].mxu0
          %v619 = vadd.f32 %v534, %v618
          %v620 = vpop.f32.mrb[0].mxu0
          %v621 = vadd.f32 %v538, %v620
          %622 = vmatprep.mubr.f32.mxu0 0.0
          %623 = vmatmul.mubr.f32.gmra.mrb[0].mxu0 %v475
          %v624 = vpop.f32.mrb[0].mxu0
          %v625 = vadd.f32 %v534, %v624
          %v626 = vpop.f32.mrb[0].mxu0
          %v627 = vadd.f32 %v538, %v626
          %628 = vmatprep.mubr.f32.mxu0 0.0
          %629 = vmatmul.mubr.f32.gmra.mrb[0].mxu0 %v476
          %v630 = vpop.f32.mrb[0].mxu0
          %v631 = vadd.f32 %v534, %v630
          %v632 = vpop.f32.mrb[0].mxu0
          %v633 = vadd.f32 %v538, %v632
          %634 = vmatprep.mubr.f32.mxu0 0.0
          %635 = vmatmul.mubr.f32.gmra.mrb[0].mxu0 %v477
          %v636 = vpop.f32.mrb[0].mxu0
          %v637 = vadd.f32 %v534, %v636
          %v638 = vpop.f32.mrb[0].mxu0
          %v639 = vadd.f32 %v538, %v638
          %640 = vmatprep.mubr.f32.mxu0 0.0
          %641 = vmatmul.mubr.f32.gmra.mrb[0].mxu0 %v478
          %v642 = vpop.f32.mrb[0].mxu0
          %v643 = vadd.f32 %v534, %v642
          %v644 = vpop.f32.mrb[0].mxu0
          %v645 = vadd.f32 %v538, %v644
          %646 = vmatprep.mubr.f32.mxu0 0.0
          %647 = vmatmul.mubr.f32.gmra.mrb[0].mxu0 %v479
          %v648 = vpop.f32.mrb[0].mxu0
          %v649 = vadd.f32 %v534, %v648
          %v650 = vpop.f32.mrb[0].mxu0
          %v651 = vadd.f32 %v538, %v650
          %652 = vmatprep.mubr.f32.mxu0 0.0
          %653 = vmatmul.mubr.f32.gmra.mrb[0].mxu0 %v480
          %v654 = vpop.f32.mrb[0].mxu0
          %v655 = vadd.f32 %v534, %v654
          %v656 = vpop.f32.mrb[0].mxu0
          %v657 = vadd.f32 %v538, %v656
          %658 = vdwg.mxu0
          %659 = vmatprep.subr.mxu0 0.0
          %660 = vmatpush1.msra.mxu0 %v483
          %661 = vmatprep.subr.mxu0 0.0
          %662 = vmatpush1.msra.mxu0 %v486
          %663 = vmatprep.subr.mxu0 0.0
          %664 = vmatpush1.msra.mxu0 %v489
          %665 = vmatprep.subr.mxu0 0.0
          %666 = vmatpush1.msra.mxu0 %v492
          %667 = vmatprep.subr.mxu0 0.0
          %668 = vmatpush1.msra.mxu0 %v495
          %669 = vmatprep.subr.mxu0 0.0
          %670 = vmatpush1.msra.mxu0 %v498
          %671 = vmatprep.subr.mxu0 0.0
          %672 = vmatpush1.msra.mxu0 %v501
          %673 = vmatprep.subr.mxu0 0.0
          %674 = vmatpush1.msra.mxu0 %v504
          %675 = vmatprep.subr.mxu0 0.0
          %676 = vmatpush1.msra.mxu0 %v507
          %677 = vmatprep.subr.mxu0 0.0
          %678 = vmatpush1.msra.mxu0 %v510
          %679 = vmatprep.subr.mxu0 0.0
          %680 = vmatpush1.msra.mxu0 %v513
          %681 = vmatprep.subr.mxu0 0.0
          %682 = vmatpush1.msra.mxu0 %v516
          %683 = vmatprep.subr.mxu0 0.0
          %684 = vmatpush1.msra.mxu0 %v519
          %685 = vmatprep.subr.mxu0 0.0
          %686 = vmatpush1.msra.mxu0 %v522
          %687 = vmatprep.subr.mxu0 0.0
          %688 = vmatpush1.msra.mxu0 %v525
          %689 = vmatprep.subr.mxu0 0.0
          %690 = vmatpush1.msra.mxu0 %v528
          %691 = vmatprep.subr.mxu0 0.0
          %692 = vmatpush1.msra.mxu0 0.0
          %693 = vmatprep.subr.mxu0 0.0
          %694 = vmatpush1.msra.mxu0 0.0
          %695 = vmatprep.subr.mxu0 0.0
          %696 = vmatpush1.msra.mxu0 0.0
          %697 = vmatprep.subr.mxu0 0.0
          %698 = vmatpush1.msra.mxu0 0.0
          %699 = vmatprep.subr.mxu0 0.0
          %700 = vmatpush1.msra.mxu0 0.0
          %701 = vmatprep.subr.mxu0 0.0
          %702 = vmatpush1.msra.mxu0 0.0
          %703 = vmatprep.subr.mxu0 0.0
          %704 = vmatpush1.msra.mxu0 0.0
          %705 = vmatprep.subr.mxu0 0.0
          %706 = vmatpush1.msra.mxu0 0.0
          %707 = vmatprep.subr.mxu0 0.0
          %708 = vmatpush1.msra.mxu0 0.0
          %709 = vmatprep.subr.mxu0 0.0
          %710 = vmatpush1.msra.mxu0 0.0
          %711 = vmatprep.subr.mxu0 0.0
          %712 = vmatpush1.msra.mxu0 0.0
          %713 = vmatprep.subr.mxu0 0.0
          %714 = vmatpush1.msra.mxu0 0.0
          %715 = vmatprep.subr.mxu0 0.0
          %716 = vmatpush1.msra.mxu0 0.0
          %717 = vmatprep.subr.mxu0 0.0
          %718 = vmatpush1.msra.mxu0 0.0
          %719 = vmatprep.subr.mxu0 0.0
          %720 = vmatpush1.msra.mxu0 0.0
          %721 = vmatprep.subr.mxu0 0.0
          %722 = vmatpush1.msra.mxu0 0.0
          %723 = vmatprep.mubr.f32.mxu0 0.0
          %724 = vmatmul.mubr.f32.gmra.mrb[0].mxu0 %v473
          %v725 = vpop.f32.mrb[0].mxu0
          %v726 = vadd.f32 %v542, %v725
          %v727 = vpop.f32.mrb[0].mxu0
          %728 = vmatprep.mubr.f32.mxu0 0.0
          %729 = vmatmul.mubr.f32.gmra.mrb[0].mxu0 %v474
          %v730 = vpop.f32.mrb[0].mxu0
          %v731 = vadd.f32 %v542, %v730
          %v732 = vpop.f32.mrb[0].mxu0
          %733 = vmatprep.mubr.f32.mxu0 0.0
          %734 = vmatmul.mubr.f32.gmra.mrb[0].mxu0 %v475
          %v735 = vpop.f32.mrb[0].mxu0
          %v736 = vadd.f32 %v542, %v735
          %v737 = vpop.f32.mrb[0].mxu0
          %738 = vmatprep.mubr.f32.mxu0 0.0
          %739 = vmatmul.mubr.f32.gmra.mrb[0].mxu0 %v476
          %v740 = vpop.f32.mrb[0].mxu0
          %v741 = vadd.f32 %v542, %v740
          %v742 = vpop.f32.mrb[0].mxu0
          %743 = vmatprep.mubr.f32.mxu0 0.0
          %744 = vmatmul.mubr.f32.gmra.mrb[0].mxu0 %v477
          %v745 = vpop.f32.mrb[0].mxu0
          %v746 = vadd.f32 %v542, %v745
          %v747 = vpop.f32.mrb[0].mxu0
          %748 = vmatprep.mubr.f32.mxu0 0.0
          %749 = vmatmul.mubr.f32.gmra.mrb[0].mxu0 %v478
          %v750 = vpop.f32.mrb[0].mxu0
          %v751 = vadd.f32 %v542, %v750
          %v752 = vpop.f32.mrb[0].mxu0
          %753 = vmatprep.mubr.f32.mxu0 0.0
          %754 = vmatmul.mubr.f32.gmra.mrb[0].mxu0 %v479
          %v755 = vpop.f32.mrb[0].mxu0
          %v756 = vadd.f32 %v542, %v755
          %v757 = vpop.f32.mrb[0].mxu0
          %758 = vmatprep.mubr.f32.mxu0 0.0
          %759 = vmatmul.mubr.f32.gmra.mrb[0].mxu0 %v480
          %v760 = vpop.f32.mrb[0].mxu0
          %v761 = vadd.f32 %v542, %v760
          %v762 = vpop.f32.mrb[0].mxu0
          %763 = vdwg.mxu0
          %764 = vst [vmem:[#allocation2] sm:$0xff] %v613
          %765 = vst [vmem:[#allocation2 + $0x8] sm:$0xff] %v615
          %766 = vst [vmem:[#allocation2 + $0x10] sm:$0xff] %v726
          %767 = vst [vmem:[#allocation2 + $0x18] sm:$0xff] %v619
          %768 = vst [vmem:[#allocation2 + $0x20] sm:$0xff] %v621
          %769 = vst [vmem:[#allocation2 + $0x28] sm:$0xff] %v731
          %770 = vst [vmem:[#allocation2 + $0x30] sm:$0xff] %v625
          %771 = vst [vmem:[#allocation2 + $0x38] sm:$0xff] %v627
          %772 = vst [vmem:[#allocation2 + $0x40] sm:$0xff] %v736
          %773 = vst [vmem:[#allocation2 + $0x48] sm:$0xff] %v631
          %774 = vst [vmem:[#allocation2 + $0x50] sm:$0xff] %v633
          %775 = vst [vmem:[#allocation2 + $0x58] sm:$0xff] %v741
          %776 = vst [vmem:[#allocation2 + $0x60] sm:$0xff] %v637
          %777 = vst [vmem:[#allocation2 + $0x68] sm:$0xff] %v639
          %778 = vst [vmem:[#allocation2 + $0x70] sm:$0xff] %v746
          %779 = vst [vmem:[#allocation2 + $0x78] sm:$0xff] %v643
          %780 = vst [vmem:[#allocation2 + $0x80] sm:$0xff] %v645
          %781 = vst [vmem:[#allocation2 + $0x88] sm:$0xff] %v751
          %782 = vst [vmem:[#allocation2 + $0x90] sm:$0xff] %v649
          %783 = vst [vmem:[#allocation2 + $0x98] sm:$0xff] %v651
          %784 = vst [vmem:[#allocation2 + $0xa0] sm:$0xff] %v756
          %785 = vst [vmem:[#allocation2 + $0xa8] sm:$0xff] %v655
          %786 = vst [vmem:[#allocation2 + $0xb0] sm:$0xff] %v657
          %787 = vst [vmem:[#allocation2 + $0xb8] sm:$0xff] %v761
        $region68: #{tpu_custom_call.1} parent=43 // pred_fallthru
          _
        %v788 = vld [vmem:[%s412] sm:$0x1]
        %v790 = vlaneseq
        %v791 = vshrl.u32 %v790, 7
        %v792 = vsub.s32 0, %v791
        %v793 = vrot.slane %v788, %v792
        %v795 = vld [vmem:[%s416] sm:$0xff]
        %v796 = vld [vmem:[%s353] sm:$0xff]
        %v797 = vld [vmem:[%s353 + $0x8] sm:$0xff]
        %v798 = vld [vmem:[%s353 + $0x10] sm:$0xff]
        %v799 = vld [vmem:[%s353 + $0x18] sm:$0xff]
        %v800 = vld [vmem:[%s353 + $0x20] sm:$0xff]
        %v801 = vld [vmem:[%s353 + $0x28] sm:$0xff]
        %v802 = vld [vmem:[%s353 + $0x30] sm:$0xff]
        %v803 = vld [vmem:[%s353 + $0x38] sm:$0xff]
        %v804 = vld [vmem:[%s353 + $0x40] sm:$0xff]
        %v805 = vld [vmem:[%s353 + $0x48] sm:$0xff]
        %v806 = vld [vmem:[%s353 + $0x50] sm:$0xff]
        %v807 = vld [vmem:[%s353 + $0x58] sm:$0xff]
        %v808 = vld [vmem:[%s353 + $0x60] sm:$0xff]
        %v809 = vld [vmem:[%s353 + $0x68] sm:$0xff]
        %v810 = vld [vmem:[%s353 + $0x70] sm:$0xff]
        %v811 = vld [vmem:[%s353 + $0x78] sm:$0xff]
        %v812 = vld [vmem:[%s353 + $0x80] sm:$0xff]
        %v813 = vld [vmem:[%s353 + $0x88] sm:$0xff]
        %v814 = vld [vmem:[%s353 + $0x90] sm:$0xff]
        %v815 = vld [vmem:[%s353 + $0x98] sm:$0xff]
        %v816 = vld [vmem:[%s353 + $0xa0] sm:$0xff]
        %v817 = vld [vmem:[%s353 + $0xa8] sm:$0xff]
        %v818 = vld [vmem:[%s353 + $0xb0] sm:$0xff]
        %v819 = vld [vmem:[%s353 + $0xb8] sm:$0xff]
        %v820 = vld [vmem:[%s353 + $0xc0] sm:$0xff]
        %v821 = vld [vmem:[%s353 + $0xc8] sm:$0xff]
        %v822 = vld [vmem:[%s353 + $0xd0] sm:$0xff]
        %v823 = vld [vmem:[%s353 + $0xd8] sm:$0xff]
        %v824 = vld [vmem:[%s353 + $0xe0] sm:$0xff]
        %v825 = vld [vmem:[%s353 + $0xe8] sm:$0xff]
        %v826 = vld [vmem:[%s353 + $0xf0] sm:$0xff]
        %v827 = vld [vmem:[%s353 + $0xf8] sm:$0xff]
        %v828 = vld [vmem:[%s353 + $0x100] sm:$0xff]
        %v829 = vld [vmem:[%s353 + $0x108] sm:$0xff]
        %v830 = vld [vmem:[%s353 + $0x110] sm:$0xff]
        %v831 = vld [vmem:[%s353 + $0x118] sm:$0xff]
        %v832 = vld [vmem:[%s353 + $0x120] sm:$0xff]
        %v833 = vld [vmem:[%s353 + $0x128] sm:$0xff]
        %v834 = vld [vmem:[%s353 + $0x130] sm:$0xff]
        %v835 = vld [vmem:[%s353 + $0x138] sm:$0xff]
        %v836 = vld [vmem:[%s353 + $0x140] sm:$0xff]
        %v837 = vld [vmem:[%s353 + $0x148] sm:$0xff]
        %v838 = vld [vmem:[%s353 + $0x150] sm:$0xff]
        %v839 = vld [vmem:[%s353 + $0x158] sm:$0xff]
        %v840 = vld [vmem:[%s353 + $0x160] sm:$0xff]
        %v841 = vld [vmem:[%s353 + $0x168] sm:$0xff]
        %v842 = vld [vmem:[%s353 + $0x170] sm:$0xff]
        %v843 = vld [vmem:[%s353 + $0x178] sm:$0xff]
        %844 = vmatprep.subr.mxu0 %v797
        %845 = vmatpush1.msra.mxu0 %v796
        %846 = vmatprep.subr.mxu0 %v800
        %847 = vmatpush1.msra.mxu0 %v799
        %848 = vmatprep.subr.mxu0 %v803
        %849 = vmatpush1.msra.mxu0 %v802
        %850 = vmatprep.subr.mxu0 %v806
        %851 = vmatpush1.msra.mxu0 %v805
        %852 = vmatprep.subr.mxu0 %v809
        %853 = vmatpush1.msra.mxu0 %v808
        %854 = vmatprep.subr.mxu0 %v812
        %855 = vmatpush1.msra.mxu0 %v811
        %856 = vmatprep.subr.mxu0 %v815
        %857 = vmatpush1.msra.mxu0 %v814
        %858 = vmatprep.subr.mxu0 %v818
        %859 = vmatpush1.msra.mxu0 %v817
        %860 = vmatprep.subr.mxu0 %v821
        %861 = vmatpush1.msra.mxu0 %v820
        %862 = vmatprep.subr.mxu0 %v824
        %863 = vmatpush1.msra.mxu0 %v823
        %864 = vmatprep.subr.mxu0 %v827
        %865 = vmatpush1.msra.mxu0 %v826
        %866 = vmatprep.subr.mxu0 %v830
        %867 = vmatpush1.msra.mxu0 %v829
        %868 = vmatprep.subr.mxu0 %v833
        %869 = vmatpush1.msra.mxu0 %v832
        %870 = vmatprep.subr.mxu0 %v836
        %871 = vmatpush1.msra.mxu0 %v835
        %872 = vmatprep.subr.mxu0 %v839
        %873 = vmatpush1.msra.mxu0 %v838
        %874 = vmatprep.subr.mxu0 %v842
        %875 = vmatpush1.msra.mxu0 %v841
        %876 = vmatprep.subr.mxu0 0.0
        %877 = vmatpush1.msra.mxu0 0.0
        %878 = vmatprep.subr.mxu0 0.0
        %879 = vmatpush1.msra.mxu0 0.0
        %880 = vmatprep.subr.mxu0 0.0
        %881 = vmatpush1.msra.mxu0 0.0
        %882 = vmatprep.subr.mxu0 0.0
        %883 = vmatpush1.msra.mxu0 0.0
        %884 = vmatprep.subr.mxu0 0.0
        %885 = vmatpush1.msra.mxu0 0.0
        %886 = vmatprep.subr.mxu0 0.0
        %887 = vmatpush1.msra.mxu0 0.0
        %888 = vmatprep.subr.mxu0 0.0
        %889 = vmatpush1.msra.mxu0 0.0
        %890 = vmatprep.subr.mxu0 0.0
        %891 = vmatpush1.msra.mxu0 0.0
        %892 = vmatprep.subr.mxu0 0.0
        %893 = vmatpush1.msra.mxu0 0.0
        %894 = vmatprep.subr.mxu0 0.0
        %895 = vmatpush1.msra.mxu0 0.0
        %896 = vmatprep.subr.mxu0 0.0
        %897 = vmatpush1.msra.mxu0 0.0
        %898 = vmatprep.subr.mxu0 0.0
        %899 = vmatpush1.msra.mxu0 0.0
        %900 = vmatprep.subr.mxu0 0.0
        %901 = vmatpush1.msra.mxu0 0.0
        %902 = vmatprep.subr.mxu0 0.0
        %903 = vmatpush1.msra.mxu0 0.0
        %904 = vmatprep.subr.mxu0 0.0
        %905 = vmatpush1.msra.mxu0 0.0
        %906 = vmatprep.subr.mxu0 0.0
        %907 = vmatpush1.msra.mxu0 0.0
        %908 = vmatprep.mubr.f32.mxu0 0.0
        %909 = vmatmul.mubr.f32.gmra.mrb[0].mxu0 %v795
        %v910 = vpop.f32.mrb[0].mxu0
        %v911 = vadd.f32 0.0, %v910
        %v912 = vpop.f32.mrb[0].mxu0
        %v913 = vadd.f32 0.0, %v912
        %914 = vdwg.mxu0
        %915 = vmatprep.subr.mxu0 0.0
        %916 = vmatpush1.msra.mxu0 %v798
        %917 = vmatprep.subr.mxu0 0.0
        %918 = vmatpush1.msra.mxu0 %v801
        %919 = vmatprep.subr.mxu0 0.0
        %920 = vmatpush1.msra.mxu0 %v804
        %921 = vmatprep.subr.mxu0 0.0
        %922 = vmatpush1.msra.mxu0 %v807
        %923 = vmatprep.subr.mxu0 0.0
        %924 = vmatpush1.msra.mxu0 %v810
        %925 = vmatprep.subr.mxu0 0.0
        %926 = vmatpush1.msra.mxu0 %v813
        %927 = vmatprep.subr.mxu0 0.0
        %928 = vmatpush1.msra.mxu0 %v816
        %929 = vmatprep.subr.mxu0 0.0
        %930 = vmatpush1.msra.mxu0 %v819
        %931 = vmatprep.subr.mxu0 0.0
        %932 = vmatpush1.msra.mxu0 %v822
        %933 = vmatprep.subr.mxu0 0.0
        %934 = vmatpush1.msra.mxu0 %v825
        %935 = vmatprep.subr.mxu0 0.0
        %936 = vmatpush1.msra.mxu0 %v828
        %937 = vmatprep.subr.mxu0 0.0
        %938 = vmatpush1.msra.mxu0 %v831
        %939 = vmatprep.subr.mxu0 0.0
        %940 = vmatpush1.msra.mxu0 %v834
        %941 = vmatprep.subr.mxu0 0.0
        %942 = vmatpush1.msra.mxu0 %v837
        %943 = vmatprep.subr.mxu0 0.0
        %944 = vmatpush1.msra.mxu0 %v840
        %945 = vmatprep.subr.mxu0 0.0
        %946 = vmatpush1.msra.mxu0 %v843
        %947 = vmatprep.subr.mxu0 0.0
        %948 = vmatpush1.msra.mxu0 0.0
        %949 = vmatprep.subr.mxu0 0.0
        %950 = vmatpush1.msra.mxu0 0.0
        %951 = vmatprep.subr.mxu0 0.0
        %952 = vmatpush1.msra.mxu0 0.0
        %953 = vmatprep.subr.mxu0 0.0
        %954 = vmatpush1.msra.mxu0 0.0
        %955 = vmatprep.subr.mxu0 0.0
        %956 = vmatpush1.msra.mxu0 0.0
        %957 = vmatprep.subr.mxu0 0.0
        %958 = vmatpush1.msra.mxu0 0.0
        %959 = vmatprep.subr.mxu0 0.0
        %960 = vmatpush1.msra.mxu0 0.0
        %961 = vmatprep.subr.mxu0 0.0
        %962 = vmatpush1.msra.mxu0 0.0
        %963 = vmatprep.subr.mxu0 0.0
        %964 = vmatpush1.msra.mxu0 0.0
        %965 = vmatprep.subr.mxu0 0.0
        %966 = vmatpush1.msra.mxu0 0.0
        %967 = vmatprep.subr.mxu0 0.0
        %968 = vmatpush1.msra.mxu0 0.0
        %969 = vmatprep.subr.mxu0 0.0
        %970 = vmatpush1.msra.mxu0 0.0
        %971 = vmatprep.subr.mxu0 0.0
        %972 = vmatpush1.msra.mxu0 0.0
        %973 = vmatprep.subr.mxu0 0.0
        %974 = vmatpush1.msra.mxu0 0.0
        %975 = vmatprep.subr.mxu0 0.0
        %976 = vmatpush1.msra.mxu0 0.0
        %977 = vmatprep.subr.mxu0 0.0
        %978 = vmatpush1.msra.mxu0 0.0
        %979 = vmatprep.mubr.f32.mxu0 0.0
        %980 = vmatmul.mubr.f32.gmra.mrb[0].mxu0 %v795
        %v981 = vpop.f32.mrb[0].mxu0
        %v982 = vadd.f32 0.0, %v981
        %v983 = vpop.f32.mrb[0].mxu0
        %984 = vdwg.mxu0
        %v985 = vld [vmem:[#allocation2] sm:$0xff]
        %v986 = vld [vmem:[#allocation2 + $0x8] sm:$0xff]
        %v987 = vld [vmem:[#allocation2 + $0x10] sm:$0xff]
        %v988 = vadd.f32 %v985, %v911
        %v989 = vadd.f32 %v986, %v913
        %v990 = vxor.u32 %v988, 2147483648
        %v991 = vxor.u32 %v989, 2147483648
        %v992 = vmul.f32 %v990, 1.442695
        %v993 = vpow.pop %v992
        %v994 = vmul.f32 %v991, 1.442695
        %v995 = vpow.pop %v994
        %v996 = vadd.f32 %v993, 1.0
        %v997 = vadd.f32 %v995, 1.0
        %v998 = vrcp.pop %v996
        %v999 = vmul.f32 1.0, %v998
        %v1000 = vrcp.pop %v997
        %v1001 = vmul.f32 1.0, %v1000
        %v1002 = vadd.f32 %v982, %v793
        %v1003 = vmul.f32 %v999, %v1002
        %v1004 = vadd.f32 %v987, %v1003
        %v1005 = vtanh.pop %v1004
        %v1006 = vsub.f32 %v795, %v1005
        %v1007 = vmul.f32 %v1001, %v1006
        %v1008 = vadd.f32 %v1005, %v1007
        %1009 = vst [vmem:[#allocation11] sm:$0xff] %v1008
        %v1010 = vld [vmem:[%s353] sm:$0xff]
        %v1011 = vld [vmem:[%s353 + $0x8] sm:$0xff]
        %v1012 = vld [vmem:[%s353 + $0x10] sm:$0xff]
        %v1013 = vld [vmem:[%s353 + $0x18] sm:$0xff]
        %v1014 = vld [vmem:[%s353 + $0x20] sm:$0xff]
        %v1015 = vld [vmem:[%s353 + $0x28] sm:$0xff]
        %v1016 = vld [vmem:[%s353 + $0x30] sm:$0xff]
        %v1017 = vld [vmem:[%s353 + $0x38] sm:$0xff]
        %v1018 = vld [vmem:[%s353 + $0x40] sm:$0xff]
        %v1019 = vld [vmem:[%s353 + $0x48] sm:$0xff]
        %v1020 = vld [vmem:[%s353 + $0x50] sm:$0xff]
        %v1021 = vld [vmem:[%s353 + $0x58] sm:$0xff]
        %v1022 = vld [vmem:[%s353 + $0x60] sm:$0xff]
        %v1023 = vld [vmem:[%s353 + $0x68] sm:$0xff]
        %v1024 = vld [vmem:[%s353 + $0x70] sm:$0xff]
        %v1025 = vld [vmem:[%s353 + $0x78] sm:$0xff]
        %v1026 = vld [vmem:[%s353 + $0x80] sm:$0xff]
        %v1027 = vld [vmem:[%s353 + $0x88] sm:$0xff]
        %v1028 = vld [vmem:[%s353 + $0x90] sm:$0xff]
        %v1029 = vld [vmem:[%s353 + $0x98] sm:$0xff]
        %v1030 = vld [vmem:[%s353 + $0xa0] sm:$0xff]
        %v1031 = vld [vmem:[%s353 + $0xa8] sm:$0xff]
        %v1032 = vld [vmem:[%s353 + $0xb0] sm:$0xff]
        %v1033 = vld [vmem:[%s353 + $0xb8] sm:$0xff]
        %v1034 = vld [vmem:[%s353 + $0xc0] sm:$0xff]
        %v1035 = vld [vmem:[%s353 + $0xc8] sm:$0xff]
        %v1036 = vld [vmem:[%s353 + $0xd0] sm:$0xff]
        %v1037 = vld [vmem:[%s353 + $0xd8] sm:$0xff]
        %v1038 = vld [vmem:[%s353 + $0xe0] sm:$0xff]
        %v1039 = vld [vmem:[%s353 + $0xe8] sm:$0xff]
        %v1040 = vld [vmem:[%s353 + $0xf0] sm:$0xff]
        %v1041 = vld [vmem:[%s353 + $0xf8] sm:$0xff]
        %v1042 = vld [vmem:[%s353 + $0x100] sm:$0xff]
        %v1043 = vld [vmem:[%s353 + $0x108] sm:$0xff]
        %v1044 = vld [vmem:[%s353 + $0x110] sm:$0xff]
        %v1045 = vld [vmem:[%s353 + $0x118] sm:$0xff]
        %v1046 = vld [vmem:[%s353 + $0x120] sm:$0xff]
        %v1047 = vld [vmem:[%s353 + $0x128] sm:$0xff]
        %v1048 = vld [vmem:[%s353 + $0x130] sm:$0xff]
        %v1049 = vld [vmem:[%s353 + $0x138] sm:$0xff]
        %v1050 = vld [vmem:[%s353 + $0x140] sm:$0xff]
        %v1051 = vld [vmem:[%s353 + $0x148] sm:$0xff]
        %v1052 = vld [vmem:[%s353 + $0x150] sm:$0xff]
        %v1053 = vld [vmem:[%s353 + $0x158] sm:$0xff]
        %v1054 = vld [vmem:[%s353 + $0x160] sm:$0xff]
        %v1055 = vld [vmem:[%s353 + $0x168] sm:$0xff]
        %v1056 = vld [vmem:[%s353 + $0x170] sm:$0xff]
        %v1057 = vld [vmem:[%s353 + $0x178] sm:$0xff]
        %1058 = vmatprep.subr.mxu0 %v1011
        %1059 = vmatpush1.msra.mxu0 %v1010
        %1060 = vmatprep.subr.mxu0 %v1014
        %1061 = vmatpush1.msra.mxu0 %v1013
        %1062 = vmatprep.subr.mxu0 %v1017
        %1063 = vmatpush1.msra.mxu0 %v1016
        %1064 = vmatprep.subr.mxu0 %v1020
        %1065 = vmatpush1.msra.mxu0 %v1019
        %1066 = vmatprep.subr.mxu0 %v1023
        %1067 = vmatpush1.msra.mxu0 %v1022
        %1068 = vmatprep.subr.mxu0 %v1026
        %1069 = vmatpush1.msra.mxu0 %v1025
        %1070 = vmatprep.subr.mxu0 %v1029
        %1071 = vmatpush1.msra.mxu0 %v1028
        %1072 = vmatprep.subr.mxu0 %v1032
        %1073 = vmatpush1.msra.mxu0 %v1031
        %1074 = vmatprep.subr.mxu0 %v1035
        %1075 = vmatpush1.msra.mxu0 %v1034
        %1076 = vmatprep.subr.mxu0 %v1038
        %1077 = vmatpush1.msra.mxu0 %v1037
        %1078 = vmatprep.subr.mxu0 %v1041
        %1079 = vmatpush1.msra.mxu0 %v1040
        %1080 = vmatprep.subr.mxu0 %v1044
        %1081 = vmatpush1.msra.mxu0 %v1043
        %1082 = vmatprep.subr.mxu0 %v1047
        %1083 = vmatpush1.msra.mxu0 %v1046
        %1084 = vmatprep.subr.mxu0 %v1050
        %1085 = vmatpush1.msra.mxu0 %v1049
        %1086 = vmatprep.subr.mxu0 %v1053
        %1087 = vmatpush1.msra.mxu0 %v1052
        %1088 = vmatprep.subr.mxu0 %v1056
        %1089 = vmatpush1.msra.mxu0 %v1055
        %1090 = vmatprep.subr.mxu0 0.0
        %1091 = vmatpush1.msra.mxu0 0.0
        %1092 = vmatprep.subr.mxu0 0.0
        %1093 = vmatpush1.msra.mxu0 0.0
        %1094 = vmatprep.subr.mxu0 0.0
        %1095 = vmatpush1.msra.mxu0 0.0
        %1096 = vmatprep.subr.mxu0 0.0
        %1097 = vmatpush1.msra.mxu0 0.0
        %1098 = vmatprep.subr.mxu0 0.0
        %1099 = vmatpush1.msra.mxu0 0.0
        %1100 = vmatprep.subr.mxu0 0.0
        %1101 = vmatpush1.msra.mxu0 0.0
        %1102 = vmatprep.subr.mxu0 0.0
        %1103 = vmatpush1.msra.mxu0 0.0
        %1104 = vmatprep.subr.mxu0 0.0
        %1105 = vmatpush1.msra.mxu0 0.0
        %1106 = vmatprep.subr.mxu0 0.0
        %1107 = vmatpush1.msra.mxu0 0.0
        %1108 = vmatprep.subr.mxu0 0.0
        %1109 = vmatpush1.msra.mxu0 0.0
        %1110 = vmatprep.subr.mxu0 0.0
        %1111 = vmatpush1.msra.mxu0 0.0
        %1112 = vmatprep.subr.mxu0 0.0
        %1113 = vmatpush1.msra.mxu0 0.0
        %1114 = vmatprep.subr.mxu0 0.0
        %1115 = vmatpush1.msra.mxu0 0.0
        %1116 = vmatprep.subr.mxu0 0.0
        %1117 = vmatpush1.msra.mxu0 0.0
        %1118 = vmatprep.subr.mxu0 0.0
        %1119 = vmatpush1.msra.mxu0 0.0
        %1120 = vmatprep.subr.mxu0 0.0
        %1121 = vmatpush1.msra.mxu0 0.0
        %1122 = vmatprep.mubr.f32.mxu0 0.0
        %1123 = vmatmul.mubr.f32.gmra.mrb[0].mxu0 %v1008
        %v1124 = vpop.f32.mrb[0].mxu0
        %v1125 = vadd.f32 0.0, %v1124
        %v1126 = vpop.f32.mrb[0].mxu0
        %v1127 = vadd.f32 0.0, %v1126
        %1128 = vdwg.mxu0
        %1129 = vmatprep.subr.mxu0 0.0
        %1130 = vmatpush1.msra.mxu0 %v1012
        %1131 = vmatprep.subr.mxu0 0.0
        %1132 = vmatpush1.msra.mxu0 %v1015
        %1133 = vmatprep.subr.mxu0 0.0
        %1134 = vmatpush1.msra.mxu0 %v1018
        %1135 = vmatprep.subr.mxu0 0.0
        %1136 = vmatpush1.msra.mxu0 %v1021
        %1137 = vmatprep.subr.mxu0 0.0
        %1138 = vmatpush1.msra.mxu0 %v1024
        %1139 = vmatprep.subr.mxu0 0.0
        %1140 = vmatpush1.msra.mxu0 %v1027
        %1141 = vmatprep.subr.mxu0 0.0
        %1142 = vmatpush1.msra.mxu0 %v1030
        %1143 = vmatprep.subr.mxu0 0.0
        %1144 = vmatpush1.msra.mxu0 %v1033
        %1145 = vmatprep.subr.mxu0 0.0
        %1146 = vmatpush1.msra.mxu0 %v1036
        %1147 = vmatprep.subr.mxu0 0.0
        %1148 = vmatpush1.msra.mxu0 %v1039
        %1149 = vmatprep.subr.mxu0 0.0
        %1150 = vmatpush1.msra.mxu0 %v1042
        %1151 = vmatprep.subr.mxu0 0.0
        %1152 = vmatpush1.msra.mxu0 %v1045
        %1153 = vmatprep.subr.mxu0 0.0
        %1154 = vmatpush1.msra.mxu0 %v1048
        %1155 = vmatprep.subr.mxu0 0.0
        %1156 = vmatpush1.msra.mxu0 %v1051
        %1157 = vmatprep.subr.mxu0 0.0
        %1158 = vmatpush1.msra.mxu0 %v1054
        %1159 = vmatprep.subr.mxu0 0.0
        %1160 = vmatpush1.msra.mxu0 %v1057
        %1161 = vmatprep.subr.mxu0 0.0
        %1162 = vmatpush1.msra.mxu0 0.0
        %1163 = vmatprep.subr.mxu0 0.0
        %1164 = vmatpush1.msra.mxu0 0.0
        %1165 = vmatprep.subr.mxu0 0.0
        %1166 = vmatpush1.msra.mxu0 0.0
        %1167 = vmatprep.subr.mxu0 0.0
        %1168 = vmatpush1.msra.mxu0 0.0
        %1169 = vmatprep.subr.mxu0 0.0
        %1170 = vmatpush1.msra.mxu0 0.0
        %1171 = vmatprep.subr.mxu0 0.0
        %1172 = vmatpush1.msra.mxu0 0.0
        %1173 = vmatprep.subr.mxu0 0.0
        %1174 = vmatpush1.msra.mxu0 0.0
        %1175 = vmatprep.subr.mxu0 0.0
        %1176 = vmatpush1.msra.mxu0 0.0
        %1177 = vmatprep.subr.mxu0 0.0
        %1178 = vmatpush1.msra.mxu0 0.0
        %1179 = vmatprep.subr.mxu0 0.0
        %1180 = vmatpush1.msra.mxu0 0.0
        %1181 = vmatprep.subr.mxu0 0.0
        %1182 = vmatpush1.msra.mxu0 0.0
        %1183 = vmatprep.subr.mxu0 0.0
        %1184 = vmatpush1.msra.mxu0 0.0
        %1185 = vmatprep.subr.mxu0 0.0
        %1186 = vmatpush1.msra.mxu0 0.0
        %1187 = vmatprep.subr.mxu0 0.0
        %1188 = vmatpush1.msra.mxu0 0.0
        %1189 = vmatprep.subr.mxu0 0.0
        %1190 = vmatpush1.msra.mxu0 0.0
        %1191 = vmatprep.subr.mxu0 0.0
        %1192 = vmatpush1.msra.mxu0 0.0
        %1193 = vmatprep.mubr.f32.mxu0 0.0
        %1194 = vmatmul.mubr.f32.gmra.mrb[0].mxu0 %v1008
        %v1195 = vpop.f32.mrb[0].mxu0
        %v1196 = vadd.f32 0.0, %v1195
        %v1197 = vpop.f32.mrb[0].mxu0
        %1198 = vdwg.mxu0
        %s1199 = scalar_lea.vmem [#allocation2], 24
        %v1200 = vld [vmem:[%s1199] sm:$0xff]
        %v1201 = vld [vmem:[%s1199 + $0x8] sm:$0xff]
        %v1202 = vld [vmem:[%s1199 + $0x10] sm:$0xff]
        %v1203 = vadd.f32 %v1200, %v1125
        %v1204 = vadd.f32 %v1201, %v1127
        %v1205 = vxor.u32 %v1203, 2147483648
        %v1206 = vxor.u32 %v1204, 2147483648
        %v1207 = vmul.f32 %v1205, 1.442695
        %v1208 = vpow.pop %v1207
        %v1209 = vmul.f32 %v1206, 1.442695
        %v1210 = vpow.pop %v1209
        %v1211 = vadd.f32 %v1208, 1.0
        %v1212 = vadd.f32 %v1210, 1.0
        %v1213 = vrcp.pop %v1211
        %v1214 = vmul.f32 1.0, %v1213
        %v1215 = vrcp.pop %v1212
        %v1216 = vmul.f32 1.0, %v1215
        %v1217 = vadd.f32 %v1196, %v793
        %v1218 = vmul.f32 %v1214, %v1217
        %v1219 = vadd.f32 %v1202, %v1218
        %v1220 = vtanh.pop %v1219
        %v1221 = vsub.f32 %v1008, %v1220
        %v1222 = vmul.f32 %v1216, %v1221
        %v1223 = vadd.f32 %v1220, %v1222
        %s1224 = scalar_lea.vmem [#allocation11], 8
        %1225 = vst [vmem:[%s1224] sm:$0xff] %v1223
        %v1226 = vld [vmem:[%s353] sm:$0xff]
        %v1227 = vld [vmem:[%s353 + $0x8] sm:$0xff]
        %v1228 = vld [vmem:[%s353 + $0x10] sm:$0xff]
        %v1229 = vld [vmem:[%s353 + $0x18] sm:$0xff]
        %v1230 = vld [vmem:[%s353 + $0x20] sm:$0xff]
        %v1231 = vld [vmem:[%s353 + $0x28] sm:$0xff]
        %v1232 = vld [vmem:[%s353 + $0x30] sm:$0xff]
        %v1233 = vld [vmem:[%s353 + $0x38] sm:$0xff]
        %v1234 = vld [vmem:[%s353 + $0x40] sm:$0xff]
        %v1235 = vld [vmem:[%s353 + $0x48] sm:$0xff]
        %v1236 = vld [vmem:[%s353 + $0x50] sm:$0xff]
        %v1237 = vld [vmem:[%s353 + $0x58] sm:$0xff]
        %v1238 = vld [vmem:[%s353 + $0x60] sm:$0xff]
        %v1239 = vld [vmem:[%s353 + $0x68] sm:$0xff]
        %v1240 = vld [vmem:[%s353 + $0x70] sm:$0xff]
        %v1241 = vld [vmem:[%s353 + $0x78] sm:$0xff]
        %v1242 = vld [vmem:[%s353 + $0x80] sm:$0xff]
        %v1243 = vld [vmem:[%s353 + $0x88] sm:$0xff]
        %v1244 = vld [vmem:[%s353 + $0x90] sm:$0xff]
        %v1245 = vld [vmem:[%s353 + $0x98] sm:$0xff]
        %v1246 = vld [vmem:[%s353 + $0xa0] sm:$0xff]
        %v1247 = vld [vmem:[%s353 + $0xa8] sm:$0xff]
        %v1248 = vld [vmem:[%s353 + $0xb0] sm:$0xff]
        %v1249 = vld [vmem:[%s353 + $0xb8] sm:$0xff]
        %v1250 = vld [vmem:[%s353 + $0xc0] sm:$0xff]
        %v1251 = vld [vmem:[%s353 + $0xc8] sm:$0xff]
        %v1252 = vld [vmem:[%s353 + $0xd0] sm:$0xff]
        %v1253 = vld [vmem:[%s353 + $0xd8] sm:$0xff]
        %v1254 = vld [vmem:[%s353 + $0xe0] sm:$0xff]
        %v1255 = vld [vmem:[%s353 + $0xe8] sm:$0xff]
        %v1256 = vld [vmem:[%s353 + $0xf0] sm:$0xff]
        %v1257 = vld [vmem:[%s353 + $0xf8] sm:$0xff]
        %v1258 = vld [vmem:[%s353 + $0x100] sm:$0xff]
        %v1259 = vld [vmem:[%s353 + $0x108] sm:$0xff]
        %v1260 = vld [vmem:[%s353 + $0x110] sm:$0xff]
        %v1261 = vld [vmem:[%s353 + $0x118] sm:$0xff]
        %v1262 = vld [vmem:[%s353 + $0x120] sm:$0xff]
        %v1263 = vld [vmem:[%s353 + $0x128] sm:$0xff]
        %v1264 = vld [vmem:[%s353 + $0x130] sm:$0xff]
        %v1265 = vld [vmem:[%s353 + $0x138] sm:$0xff]
        %v1266 = vld [vmem:[%s353 + $0x140] sm:$0xff]
        %v1267 = vld [vmem:[%s353 + $0x148] sm:$0xff]
        %v1268 = vld [vmem:[%s353 + $0x150] sm:$0xff]
        %v1269 = vld [vmem:[%s353 + $0x158] sm:$0xff]
        %v1270 = vld [vmem:[%s353 + $0x160] sm:$0xff]
        %v1271 = vld [vmem:[%s353 + $0x168] sm:$0xff]
        %v1272 = vld [vmem:[%s353 + $0x170] sm:$0xff]
        %v1273 = vld [vmem:[%s353 + $0x178] sm:$0xff]
        %1274 = vmatprep.subr.mxu0 %v1227
        %1275 = vmatpush1.msra.mxu0 %v1226
        %1276 = vmatprep.subr.mxu0 %v1230
        %1277 = vmatpush1.msra.mxu0 %v1229
        %1278 = vmatprep.subr.mxu0 %v1233
        %1279 = vmatpush1.msra.mxu0 %v1232
        %1280 = vmatprep.subr.mxu0 %v1236
        %1281 = vmatpush1.msra.mxu0 %v1235
        %1282 = vmatprep.subr.mxu0 %v1239
        %1283 = vmatpush1.msra.mxu0 %v1238
        %1284 = vmatprep.subr.mxu0 %v1242
        %1285 = vmatpush1.msra.mxu0 %v1241
        %1286 = vmatprep.subr.mxu0 %v1245
        %1287 = vmatpush1.msra.mxu0 %v1244
        %1288 = vmatprep.subr.mxu0 %v1248
        %1289 = vmatpush1.msra.mxu0 %v1247
        %1290 = vmatprep.subr.mxu0 %v1251
        %1291 = vmatpush1.msra.mxu0 %v1250
        %1292 = vmatprep.subr.mxu0 %v1254
        %1293 = vmatpush1.msra.mxu0 %v1253
        %1294 = vmatprep.subr.mxu0 %v1257
        %1295 = vmatpush1.msra.mxu0 %v1256
        %1296 = vmatprep.subr.mxu0 %v1260
        %1297 = vmatpush1.msra.mxu0 %v1259
        %1298 = vmatprep.subr.mxu0 %v1263
        %1299 = vmatpush1.msra.mxu0 %v1262
        %1300 = vmatprep.subr.mxu0 %v1266
        %1301 = vmatpush1.msra.mxu0 %v1265
        %1302 = vmatprep.subr.mxu0 %v1269
        %1303 = vmatpush1.msra.mxu0 %v1268
        %1304 = vmatprep.subr.mxu0 %v1272
        %1305 = vmatpush1.msra.mxu0 %v1271
        %1306 = vmatprep.subr.mxu0 0.0
        %1307 = vmatpush1.msra.mxu0 0.0
        %1308 = vmatprep.subr.mxu0 0.0
        %1309 = vmatpush1.msra.mxu0 0.0
        %1310 = vmatprep.subr.mxu0 0.0
        %1311 = vmatpush1.msra.mxu0 0.0
        %1312 = vmatprep.subr.mxu0 0.0
        %1313 = vmatpush1.msra.mxu0 0.0
        %1314 = vmatprep.subr.mxu0 0.0
        %1315 = vmatpush1.msra.mxu0 0.0
        %1316 = vmatprep.subr.mxu0 0.0
        %1317 = vmatpush1.msra.mxu0 0.0
        %1318 = vmatprep.subr.mxu0 0.0
        %1319 = vmatpush1.msra.mxu0 0.0
        %1320 = vmatprep.subr.mxu0 0.0
        %1321 = vmatpush1.msra.mxu0 0.0
        %1322 = vmatprep.subr.mxu0 0.0
        %1323 = vmatpush1.msra.mxu0 0.0
        %1324 = vmatprep.subr.mxu0 0.0
        %1325 = vmatpush1.msra.mxu0 0.0
        %1326 = vmatprep.subr.mxu0 0.0
        %1327 = vmatpush1.msra.mxu0 0.0
        %1328 = vmatprep.subr.mxu0 0.0
        %1329 = vmatpush1.msra.mxu0 0.0
        %1330 = vmatprep.subr.mxu0 0.0
        %1331 = vmatpush1.msra.mxu0 0.0
        %1332 = vmatprep.subr.mxu0 0.0
        %1333 = vmatpush1.msra.mxu0 0.0
        %1334 = vmatprep.subr.mxu0 0.0
        %1335 = vmatpush1.msra.mxu0 0.0
        %1336 = vmatprep.subr.mxu0 0.0
        %1337 = vmatpush1.msra.mxu0 0.0
        %1338 = vmatprep.mubr.f32.mxu0 0.0
        %1339 = vmatmul.mubr.f32.gmra.mrb[0].mxu0 %v1223
        %v1340 = vpop.f32.mrb[0].mxu0
        %v1341 = vadd.f32 0.0, %v1340
        %v1342 = vpop.f32.mrb[0].mxu0
        %v1343 = vadd.f32 0.0, %v1342
        %1344 = vdwg.mxu0
        %1345 = vmatprep.subr.mxu0 0.0
        %1346 = vmatpush1.msra.mxu0 %v1228
        %1347 = vmatprep.subr.mxu0 0.0
        %1348 = vmatpush1.msra.mxu0 %v1231
        %1349 = vmatprep.subr.mxu0 0.0
        %1350 = vmatpush1.msra.mxu0 %v1234
        %1351 = vmatprep.subr.mxu0 0.0
        %1352 = vmatpush1.msra.mxu0 %v1237
        %1353 = vmatprep.subr.mxu0 0.0
        %1354 = vmatpush1.msra.mxu0 %v1240
        %1355 = vmatprep.subr.mxu0 0.0
        %1356 = vmatpush1.msra.mxu0 %v1243
        %1357 = vmatprep.subr.mxu0 0.0
        %1358 = vmatpush1.msra.mxu0 %v1246
        %1359 = vmatprep.subr.mxu0 0.0
        %1360 = vmatpush1.msra.mxu0 %v1249
        %1361 = vmatprep.subr.mxu0 0.0
        %1362 = vmatpush1.msra.mxu0 %v1252
        %1363 = vmatprep.subr.mxu0 0.0
        %1364 = vmatpush1.msra.mxu0 %v1255
        %1365 = vmatprep.subr.mxu0 0.0
        %1366 = vmatpush1.msra.mxu0 %v1258
        %1367 = vmatprep.subr.mxu0 0.0
        %1368 = vmatpush1.msra.mxu0 %v1261
        %1369 = vmatprep.subr.mxu0 0.0
        %1370 = vmatpush1.msra.mxu0 %v1264
        %1371 = vmatprep.subr.mxu0 0.0
        %1372 = vmatpush1.msra.mxu0 %v1267
        %1373 = vmatprep.subr.mxu0 0.0
        %1374 = vmatpush1.msra.mxu0 %v1270
        %1375 = vmatprep.subr.mxu0 0.0
        %1376 = vmatpush1.msra.mxu0 %v1273
        %1377 = vmatprep.subr.mxu0 0.0
        %1378 = vmatpush1.msra.mxu0 0.0
        %1379 = vmatprep.subr.mxu0 0.0
        %1380 = vmatpush1.msra.mxu0 0.0
        %1381 = vmatprep.subr.mxu0 0.0
        %1382 = vmatpush1.msra.mxu0 0.0
        %1383 = vmatprep.subr.mxu0 0.0
        %1384 = vmatpush1.msra.mxu0 0.0
        %1385 = vmatprep.subr.mxu0 0.0
        %1386 = vmatpush1.msra.mxu0 0.0
        %1387 = vmatprep.subr.mxu0 0.0
        %1388 = vmatpush1.msra.mxu0 0.0
        %1389 = vmatprep.subr.mxu0 0.0
        %1390 = vmatpush1.msra.mxu0 0.0
        %1391 = vmatprep.subr.mxu0 0.0
        %1392 = vmatpush1.msra.mxu0 0.0
        %1393 = vmatprep.subr.mxu0 0.0
        %1394 = vmatpush1.msra.mxu0 0.0
        %1395 = vmatprep.subr.mxu0 0.0
        %1396 = vmatpush1.msra.mxu0 0.0
        %1397 = vmatprep.subr.mxu0 0.0
        %1398 = vmatpush1.msra.mxu0 0.0
        %1399 = vmatprep.subr.mxu0 0.0
        %1400 = vmatpush1.msra.mxu0 0.0
        %1401 = vmatprep.subr.mxu0 0.0
        %1402 = vmatpush1.msra.mxu0 0.0
        %1403 = vmatprep.subr.mxu0 0.0
        %1404 = vmatpush1.msra.mxu0 0.0
        %1405 = vmatprep.subr.mxu0 0.0
        %1406 = vmatpush1.msra.mxu0 0.0
        %1407 = vmatprep.subr.mxu0 0.0
        %1408 = vmatpush1.msra.mxu0 0.0
        %1409 = vmatprep.mubr.f32.mxu0 0.0
        %1410 = vmatmul.mubr.f32.gmra.mrb[0].mxu0 %v1223
        %v1411 = vpop.f32.mrb[0].mxu0
        %v1412 = vadd.f32 0.0, %v1411
        %v1413 = vpop.f32.mrb[0].mxu0
        %1414 = vdwg.mxu0
        %s1415 = scalar_lea.vmem [#allocation2], 48
        %v1416 = vld [vmem:[%s1415] sm:$0xff]
        %v1417 = vld [vmem:[%s1415 + $0x8] sm:$0xff]
        %v1418 = vld [vmem:[%s1415 + $0x10] sm:$0xff]
        %v1419 = vadd.f32 %v1416, %v1341
        %v1420 = vadd.f32 %v1417, %v1343
        %v1421 = vxor.u32 %v1419, 2147483648
        %v1422 = vxor.u32 %v1420, 2147483648
        %v1423 = vmul.f32 %v1421, 1.442695
        %v1424 = vpow.pop %v1423
        %v1425 = vmul.f32 %v1422, 1.442695
        %v1426 = vpow.pop %v1425
        %v1427 = vadd.f32 %v1424, 1.0
        %v1428 = vadd.f32 %v1426, 1.0
        %v1429 = vrcp.pop %v1427
        %v1430 = vmul.f32 1.0, %v1429
        %v1431 = vrcp.pop %v1428
        %v1432 = vmul.f32 1.0, %v1431
        %v1433 = vadd.f32 %v1412, %v793
        %v1434 = vmul.f32 %v1430, %v1433
        %v1435 = vadd.f32 %v1418, %v1434
        %v1436 = vtanh.pop %v1435
        %v1437 = vsub.f32 %v1223, %v1436
        %v1438 = vmul.f32 %v1432, %v1437
        %v1439 = vadd.f32 %v1436, %v1438
        %s1440 = scalar_lea.vmem [#allocation11], 16
        %1441 = vst [vmem:[%s1440] sm:$0xff] %v1439
        %v1442 = vld [vmem:[%s353] sm:$0xff]
        %v1443 = vld [vmem:[%s353 + $0x8] sm:$0xff]
        %v1444 = vld [vmem:[%s353 + $0x10] sm:$0xff]
        %v1445 = vld [vmem:[%s353 + $0x18] sm:$0xff]
        %v1446 = vld [vmem:[%s353 + $0x20] sm:$0xff]
        %v1447 = vld [vmem:[%s353 + $0x28] sm:$0xff]
        %v1448 = vld [vmem:[%s353 + $0x30] sm:$0xff]
        %v1449 = vld [vmem:[%s353 + $0x38] sm:$0xff]
        %v1450 = vld [vmem:[%s353 + $0x40] sm:$0xff]
        %v1451 = vld [vmem:[%s353 + $0x48] sm:$0xff]
        %v1452 = vld [vmem:[%s353 + $0x50] sm:$0xff]
        %v1453 = vld [vmem:[%s353 + $0x58] sm:$0xff]
        %v1454 = vld [vmem:[%s353 + $0x60] sm:$0xff]
        %v1455 = vld [vmem:[%s353 + $0x68] sm:$0xff]
        %v1456 = vld [vmem:[%s353 + $0x70] sm:$0xff]
        %v1457 = vld [vmem:[%s353 + $0x78] sm:$0xff]
        %v1458 = vld [vmem:[%s353 + $0x80] sm:$0xff]
        %v1459 = vld [vmem:[%s353 + $0x88] sm:$0xff]
        %v1460 = vld [vmem:[%s353 + $0x90] sm:$0xff]
        %v1461 = vld [vmem:[%s353 + $0x98] sm:$0xff]
        %v1462 = vld [vmem:[%s353 + $0xa0] sm:$0xff]
        %v1463 = vld [vmem:[%s353 + $0xa8] sm:$0xff]
        %v1464 = vld [vmem:[%s353 + $0xb0] sm:$0xff]
        %v1465 = vld [vmem:[%s353 + $0xb8] sm:$0xff]
        %v1466 = vld [vmem:[%s353 + $0xc0] sm:$0xff]
        %v1467 = vld [vmem:[%s353 + $0xc8] sm:$0xff]
        %v1468 = vld [vmem:[%s353 + $0xd0] sm:$0xff]
        %v1469 = vld [vmem:[%s353 + $0xd8] sm:$0xff]
        %v1470 = vld [vmem:[%s353 + $0xe0] sm:$0xff]
        %v1471 = vld [vmem:[%s353 + $0xe8] sm:$0xff]
        %v1472 = vld [vmem:[%s353 + $0xf0] sm:$0xff]
        %v1473 = vld [vmem:[%s353 + $0xf8] sm:$0xff]
        %v1474 = vld [vmem:[%s353 + $0x100] sm:$0xff]
        %v1475 = vld [vmem:[%s353 + $0x108] sm:$0xff]
        %v1476 = vld [vmem:[%s353 + $0x110] sm:$0xff]
        %v1477 = vld [vmem:[%s353 + $0x118] sm:$0xff]
        %v1478 = vld [vmem:[%s353 + $0x120] sm:$0xff]
        %v1479 = vld [vmem:[%s353 + $0x128] sm:$0xff]
        %v1480 = vld [vmem:[%s353 + $0x130] sm:$0xff]
        %v1481 = vld [vmem:[%s353 + $0x138] sm:$0xff]
        %v1482 = vld [vmem:[%s353 + $0x140] sm:$0xff]
        %v1483 = vld [vmem:[%s353 + $0x148] sm:$0xff]
        %v1484 = vld [vmem:[%s353 + $0x150] sm:$0xff]
        %v1485 = vld [vmem:[%s353 + $0x158] sm:$0xff]
        %v1486 = vld [vmem:[%s353 + $0x160] sm:$0xff]
        %v1487 = vld [vmem:[%s353 + $0x168] sm:$0xff]
        %v1488 = vld [vmem:[%s353 + $0x170] sm:$0xff]
        %v1489 = vld [vmem:[%s353 + $0x178] sm:$0xff]
        %1490 = vmatprep.subr.mxu0 %v1443
        %1491 = vmatpush1.msra.mxu0 %v1442
        %1492 = vmatprep.subr.mxu0 %v1446
        %1493 = vmatpush1.msra.mxu0 %v1445
        %1494 = vmatprep.subr.mxu0 %v1449
        %1495 = vmatpush1.msra.mxu0 %v1448
        %1496 = vmatprep.subr.mxu0 %v1452
        %1497 = vmatpush1.msra.mxu0 %v1451
        %1498 = vmatprep.subr.mxu0 %v1455
        %1499 = vmatpush1.msra.mxu0 %v1454
        %1500 = vmatprep.subr.mxu0 %v1458
        %1501 = vmatpush1.msra.mxu0 %v1457
        %1502 = vmatprep.subr.mxu0 %v1461
        %1503 = vmatpush1.msra.mxu0 %v1460
        %1504 = vmatprep.subr.mxu0 %v1464
        %1505 = vmatpush1.msra.mxu0 %v1463
        %1506 = vmatprep.subr.mxu0 %v1467
        %1507 = vmatpush1.msra.mxu0 %v1466
        %1508 = vmatprep.subr.mxu0 %v1470
        %1509 = vmatpush1.msra.mxu0 %v1469
        %1510 = vmatprep.subr.mxu0 %v1473
        %1511 = vmatpush1.msra.mxu0 %v1472
        %1512 = vmatprep.subr.mxu0 %v1476
        %1513 = vmatpush1.msra.mxu0 %v1475
        %1514 = vmatprep.subr.mxu0 %v1479
        %1515 = vmatpush1.msra.mxu0 %v1478
        %1516 = vmatprep.subr.mxu0 %v1482
        %1517 = vmatpush1.msra.mxu0 %v1481
        %1518 = vmatprep.subr.mxu0 %v1485
        %1519 = vmatpush1.msra.mxu0 %v1484
        %1520 = vmatprep.subr.mxu0 %v1488
        %1521 = vmatpush1.msra.mxu0 %v1487
        %1522 = vmatprep.subr.mxu0 0.0
        %1523 = vmatpush1.msra.mxu0 0.0
        %1524 = vmatprep.subr.mxu0 0.0
        %1525 = vmatpush1.msra.mxu0 0.0
        %1526 = vmatprep.subr.mxu0 0.0
        %1527 = vmatpush1.msra.mxu0 0.0
        %1528 = vmatprep.subr.mxu0 0.0
        %1529 = vmatpush1.msra.mxu0 0.0
        %1530 = vmatprep.subr.mxu0 0.0
        %1531 = vmatpush1.msra.mxu0 0.0
        %1532 = vmatprep.subr.mxu0 0.0
        %1533 = vmatpush1.msra.mxu0 0.0
        %1534 = vmatprep.subr.mxu0 0.0
        %1535 = vmatpush1.msra.mxu0 0.0
        %1536 = vmatprep.subr.mxu0 0.0
        %1537 = vmatpush1.msra.mxu0 0.0
        %1538 = vmatprep.subr.mxu0 0.0
        %1539 = vmatpush1.msra.mxu0 0.0
        %1540 = vmatprep.subr.mxu0 0.0
        %1541 = vmatpush1.msra.mxu0 0.0
        %1542 = vmatprep.subr.mxu0 0.0
        %1543 = vmatpush1.msra.mxu0 0.0
        %1544 = vmatprep.subr.mxu0 0.0
        %1545 = vmatpush1.msra.mxu0 0.0
        %1546 = vmatprep.subr.mxu0 0.0
        %1547 = vmatpush1.msra.mxu0 0.0
        %1548 = vmatprep.subr.mxu0 0.0
        %1549 = vmatpush1.msra.mxu0 0.0
        %1550 = vmatprep.subr.mxu0 0.0
        %1551 = vmatpush1.msra.mxu0 0.0
        %1552 = vmatprep.subr.mxu0 0.0
        %1553 = vmatpush1.msra.mxu0 0.0
        %1554 = vmatprep.mubr.f32.mxu0 0.0
        %1555 = vmatmul.mubr.f32.gmra.mrb[0].mxu0 %v1439
        %v1556 = vpop.f32.mrb[0].mxu0
        %v1557 = vadd.f32 0.0, %v1556
        %v1558 = vpop.f32.mrb[0].mxu0
        %v1559 = vadd.f32 0.0, %v1558
        %1560 = vdwg.mxu0
        %1561 = vmatprep.subr.mxu0 0.0
        %1562 = vmatpush1.msra.mxu0 %v1444
        %1563 = vmatprep.subr.mxu0 0.0
        %1564 = vmatpush1.msra.mxu0 %v1447
        %1565 = vmatprep.subr.mxu0 0.0
        %1566 = vmatpush1.msra.mxu0 %v1450
        %1567 = vmatprep.subr.mxu0 0.0
        %1568 = vmatpush1.msra.mxu0 %v1453
        %1569 = vmatprep.subr.mxu0 0.0
        %1570 = vmatpush1.msra.mxu0 %v1456
        %1571 = vmatprep.subr.mxu0 0.0
        %1572 = vmatpush1.msra.mxu0 %v1459
        %1573 = vmatprep.subr.mxu0 0.0
        %1574 = vmatpush1.msra.mxu0 %v1462
        %1575 = vmatprep.subr.mxu0 0.0
        %1576 = vmatpush1.msra.mxu0 %v1465
        %1577 = vmatprep.subr.mxu0 0.0
        %1578 = vmatpush1.msra.mxu0 %v1468
        %1579 = vmatprep.subr.mxu0 0.0
        %1580 = vmatpush1.msra.mxu0 %v1471
        %1581 = vmatprep.subr.mxu0 0.0
        %1582 = vmatpush1.msra.mxu0 %v1474
        %1583 = vmatprep.subr.mxu0 0.0
        %1584 = vmatpush1.msra.mxu0 %v1477
        %1585 = vmatprep.subr.mxu0 0.0
        %1586 = vmatpush1.msra.mxu0 %v1480
        %1587 = vmatprep.subr.mxu0 0.0
        %1588 = vmatpush1.msra.mxu0 %v1483
        %1589 = vmatprep.subr.mxu0 0.0
        %1590 = vmatpush1.msra.mxu0 %v1486
        %1591 = vmatprep.subr.mxu0 0.0
        %1592 = vmatpush1.msra.mxu0 %v1489
        %1593 = vmatprep.subr.mxu0 0.0
        %1594 = vmatpush1.msra.mxu0 0.0
        %1595 = vmatprep.subr.mxu0 0.0
        %1596 = vmatpush1.msra.mxu0 0.0
        %1597 = vmatprep.subr.mxu0 0.0
        %1598 = vmatpush1.msra.mxu0 0.0
        %1599 = vmatprep.subr.mxu0 0.0
        %1600 = vmatpush1.msra.mxu0 0.0
        %1601 = vmatprep.subr.mxu0 0.0
        %1602 = vmatpush1.msra.mxu0 0.0
        %1603 = vmatprep.subr.mxu0 0.0
        %1604 = vmatpush1.msra.mxu0 0.0
        %1605 = vmatprep.subr.mxu0 0.0
        %1606 = vmatpush1.msra.mxu0 0.0
        %1607 = vmatprep.subr.mxu0 0.0
        %1608 = vmatpush1.msra.mxu0 0.0
        %1609 = vmatprep.subr.mxu0 0.0
        %1610 = vmatpush1.msra.mxu0 0.0
        %1611 = vmatprep.subr.mxu0 0.0
        %1612 = vmatpush1.msra.mxu0 0.0
        %1613 = vmatprep.subr.mxu0 0.0
        %1614 = vmatpush1.msra.mxu0 0.0
        %1615 = vmatprep.subr.mxu0 0.0
        %1616 = vmatpush1.msra.mxu0 0.0
        %1617 = vmatprep.subr.mxu0 0.0
        %1618 = vmatpush1.msra.mxu0 0.0
        %1619 = vmatprep.subr.mxu0 0.0
        %1620 = vmatpush1.msra.mxu0 0.0
        %1621 = vmatprep.subr.mxu0 0.0
        %1622 = vmatpush1.msra.mxu0 0.0
        %1623 = vmatprep.subr.mxu0 0.0
        %1624 = vmatpush1.msra.mxu0 0.0
        %1625 = vmatprep.mubr.f32.mxu0 0.0
        %1626 = vmatmul.mubr.f32.gmra.mrb[0].mxu0 %v1439
        %v1627 = vpop.f32.mrb[0].mxu0
        %v1628 = vadd.f32 0.0, %v1627
        %v1629 = vpop.f32.mrb[0].mxu0
        %1630 = vdwg.mxu0
        %s1631 = scalar_lea.vmem [#allocation2], 72
        %v1632 = vld [vmem:[%s1631] sm:$0xff]
        %v1633 = vld [vmem:[%s1631 + $0x8] sm:$0xff]
        %v1634 = vld [vmem:[%s1631 + $0x10] sm:$0xff]
        %v1635 = vadd.f32 %v1632, %v1557
        %v1636 = vadd.f32 %v1633, %v1559
        %v1637 = vxor.u32 %v1635, 2147483648
        %v1638 = vxor.u32 %v1636, 2147483648
        %v1639 = vmul.f32 %v1637, 1.442695
        %v1640 = vpow.pop %v1639
        %v1641 = vmul.f32 %v1638, 1.442695
        %v1642 = vpow.pop %v1641
        %v1643 = vadd.f32 %v1640, 1.0
        %v1644 = vadd.f32 %v1642, 1.0
        %v1645 = vrcp.pop %v1643
        %v1646 = vmul.f32 1.0, %v1645
        %v1647 = vrcp.pop %v1644
        %v1648 = vmul.f32 1.0, %v1647
        %v1649 = vadd.f32 %v1628, %v793
        %v1650 = vmul.f32 %v1646, %v1649
        %v1651 = vadd.f32 %v1634, %v1650
        %v1652 = vtanh.pop %v1651
        %v1653 = vsub.f32 %v1439, %v1652
        %v1654 = vmul.f32 %v1648, %v1653
        %v1655 = vadd.f32 %v1652, %v1654
        %s1656 = scalar_lea.vmem [#allocation11], 24
        %1657 = vst [vmem:[%s1656] sm:$0xff] %v1655
        %v1658 = vld [vmem:[%s353] sm:$0xff]
        %v1659 = vld [vmem:[%s353 + $0x8] sm:$0xff]
        %v1660 = vld [vmem:[%s353 + $0x10] sm:$0xff]
        %v1661 = vld [vmem:[%s353 + $0x18] sm:$0xff]
        %v1662 = vld [vmem:[%s353 + $0x20] sm:$0xff]
        %v1663 = vld [vmem:[%s353 + $0x28] sm:$0xff]
        %v1664 = vld [vmem:[%s353 + $0x30] sm:$0xff]
        %v1665 = vld [vmem:[%s353 + $0x38] sm:$0xff]
        %v1666 = vld [vmem:[%s353 + $0x40] sm:$0xff]
        %v1667 = vld [vmem:[%s353 + $0x48] sm:$0xff]
        %v1668 = vld [vmem:[%s353 + $0x50] sm:$0xff]
        %v1669 = vld [vmem:[%s353 + $0x58] sm:$0xff]
        %v1670 = vld [vmem:[%s353 + $0x60] sm:$0xff]
        %v1671 = vld [vmem:[%s353 + $0x68] sm:$0xff]
        %v1672 = vld [vmem:[%s353 + $0x70] sm:$0xff]
        %v1673 = vld [vmem:[%s353 + $0x78] sm:$0xff]
        %v1674 = vld [vmem:[%s353 + $0x80] sm:$0xff]
        %v1675 = vld [vmem:[%s353 + $0x88] sm:$0xff]
        %v1676 = vld [vmem:[%s353 + $0x90] sm:$0xff]
        %v1677 = vld [vmem:[%s353 + $0x98] sm:$0xff]
        %v1678 = vld [vmem:[%s353 + $0xa0] sm:$0xff]
        %v1679 = vld [vmem:[%s353 + $0xa8] sm:$0xff]
        %v1680 = vld [vmem:[%s353 + $0xb0] sm:$0xff]
        %v1681 = vld [vmem:[%s353 + $0xb8] sm:$0xff]
        %v1682 = vld [vmem:[%s353 + $0xc0] sm:$0xff]
        %v1683 = vld [vmem:[%s353 + $0xc8] sm:$0xff]
        %v1684 = vld [vmem:[%s353 + $0xd0] sm:$0xff]
        %v1685 = vld [vmem:[%s353 + $0xd8] sm:$0xff]
        %v1686 = vld [vmem:[%s353 + $0xe0] sm:$0xff]
        %v1687 = vld [vmem:[%s353 + $0xe8] sm:$0xff]
        %v1688 = vld [vmem:[%s353 + $0xf0] sm:$0xff]
        %v1689 = vld [vmem:[%s353 + $0xf8] sm:$0xff]
        %v1690 = vld [vmem:[%s353 + $0x100] sm:$0xff]
        %v1691 = vld [vmem:[%s353 + $0x108] sm:$0xff]
        %v1692 = vld [vmem:[%s353 + $0x110] sm:$0xff]
        %v1693 = vld [vmem:[%s353 + $0x118] sm:$0xff]
        %v1694 = vld [vmem:[%s353 + $0x120] sm:$0xff]
        %v1695 = vld [vmem:[%s353 + $0x128] sm:$0xff]
        %v1696 = vld [vmem:[%s353 + $0x130] sm:$0xff]
        %v1697 = vld [vmem:[%s353 + $0x138] sm:$0xff]
        %v1698 = vld [vmem:[%s353 + $0x140] sm:$0xff]
        %v1699 = vld [vmem:[%s353 + $0x148] sm:$0xff]
        %v1700 = vld [vmem:[%s353 + $0x150] sm:$0xff]
        %v1701 = vld [vmem:[%s353 + $0x158] sm:$0xff]
        %v1702 = vld [vmem:[%s353 + $0x160] sm:$0xff]
        %v1703 = vld [vmem:[%s353 + $0x168] sm:$0xff]
        %v1704 = vld [vmem:[%s353 + $0x170] sm:$0xff]
        %v1705 = vld [vmem:[%s353 + $0x178] sm:$0xff]
        %1706 = vmatprep.subr.mxu0 %v1659
        %1707 = vmatpush1.msra.mxu0 %v1658
        %1708 = vmatprep.subr.mxu0 %v1662
        %1709 = vmatpush1.msra.mxu0 %v1661
        %1710 = vmatprep.subr.mxu0 %v1665
        %1711 = vmatpush1.msra.mxu0 %v1664
        %1712 = vmatprep.subr.mxu0 %v1668
        %1713 = vmatpush1.msra.mxu0 %v1667
        %1714 = vmatprep.subr.mxu0 %v1671
        %1715 = vmatpush1.msra.mxu0 %v1670
        %1716 = vmatprep.subr.mxu0 %v1674
        %1717 = vmatpush1.msra.mxu0 %v1673
        %1718 = vmatprep.subr.mxu0 %v1677
        %1719 = vmatpush1.msra.mxu0 %v1676
        %1720 = vmatprep.subr.mxu0 %v1680
        %1721 = vmatpush1.msra.mxu0 %v1679
        %1722 = vmatprep.subr.mxu0 %v1683
        %1723 = vmatpush1.msra.mxu0 %v1682
        %1724 = vmatprep.subr.mxu0 %v1686
        %1725 = vmatpush1.msra.mxu0 %v1685
        %1726 = vmatprep.subr.mxu0 %v1689
        %1727 = vmatpush1.msra.mxu0 %v1688
        %1728 = vmatprep.subr.mxu0 %v1692
        %1729 = vmatpush1.msra.mxu0 %v1691
        %1730 = vmatprep.subr.mxu0 %v1695
        %1731 = vmatpush1.msra.mxu0 %v1694
        %1732 = vmatprep.subr.mxu0 %v1698
        %1733 = vmatpush1.msra.mxu0 %v1697
        %1734 = vmatprep.subr.mxu0 %v1701
        %1735 = vmatpush1.msra.mxu0 %v1700
        %1736 = vmatprep.subr.mxu0 %v1704
        %1737 = vmatpush1.msra.mxu0 %v1703
        %1738 = vmatprep.subr.mxu0 0.0
        %1739 = vmatpush1.msra.mxu0 0.0
        %1740 = vmatprep.subr.mxu0 0.0
        %1741 = vmatpush1.msra.mxu0 0.0
        %1742 = vmatprep.subr.mxu0 0.0
        %1743 = vmatpush1.msra.mxu0 0.0
        %1744 = vmatprep.subr.mxu0 0.0
        %1745 = vmatpush1.msra.mxu0 0.0
        %1746 = vmatprep.subr.mxu0 0.0
        %1747 = vmatpush1.msra.mxu0 0.0
        %1748 = vmatprep.subr.mxu0 0.0
        %1749 = vmatpush1.msra.mxu0 0.0
        %1750 = vmatprep.subr.mxu0 0.0
        %1751 = vmatpush1.msra.mxu0 0.0
        %1752 = vmatprep.subr.mxu0 0.0
        %1753 = vmatpush1.msra.mxu0 0.0
        %1754 = vmatprep.subr.mxu0 0.0
        %1755 = vmatpush1.msra.mxu0 0.0
        %1756 = vmatprep.subr.mxu0 0.0
        %1757 = vmatpush1.msra.mxu0 0.0
        %1758 = vmatprep.subr.mxu0 0.0
        %1759 = vmatpush1.msra.mxu0 0.0
        %1760 = vmatprep.subr.mxu0 0.0
        %1761 = vmatpush1.msra.mxu0 0.0
        %1762 = vmatprep.subr.mxu0 0.0
        %1763 = vmatpush1.msra.mxu0 0.0
        %1764 = vmatprep.subr.mxu0 0.0
        %1765 = vmatpush1.msra.mxu0 0.0
        %1766 = vmatprep.subr.mxu0 0.0
        %1767 = vmatpush1.msra.mxu0 0.0
        %1768 = vmatprep.subr.mxu0 0.0
        %1769 = vmatpush1.msra.mxu0 0.0
        %1770 = vmatprep.mubr.f32.mxu0 0.0
        %1771 = vmatmul.mubr.f32.gmra.mrb[0].mxu0 %v1655
        %v1772 = vpop.f32.mrb[0].mxu0
        %v1773 = vadd.f32 0.0, %v1772
        %v1774 = vpop.f32.mrb[0].mxu0
        %v1775 = vadd.f32 0.0, %v1774
        %1776 = vdwg.mxu0
        %1777 = vmatprep.subr.mxu0 0.0
        %1778 = vmatpush1.msra.mxu0 %v1660
        %1779 = vmatprep.subr.mxu0 0.0
        %1780 = vmatpush1.msra.mxu0 %v1663
        %1781 = vmatprep.subr.mxu0 0.0
        %1782 = vmatpush1.msra.mxu0 %v1666
        %1783 = vmatprep.subr.mxu0 0.0
        %1784 = vmatpush1.msra.mxu0 %v1669
        %1785 = vmatprep.subr.mxu0 0.0
        %1786 = vmatpush1.msra.mxu0 %v1672
        %1787 = vmatprep.subr.mxu0 0.0
        %1788 = vmatpush1.msra.mxu0 %v1675
        %1789 = vmatprep.subr.mxu0 0.0
        %1790 = vmatpush1.msra.mxu0 %v1678
        %1791 = vmatprep.subr.mxu0 0.0
        %1792 = vmatpush1.msra.mxu0 %v1681
        %1793 = vmatprep.subr.mxu0 0.0
        %1794 = vmatpush1.msra.mxu0 %v1684
        %1795 = vmatprep.subr.mxu0 0.0
        %1796 = vmatpush1.msra.mxu0 %v1687
        %1797 = vmatprep.subr.mxu0 0.0
        %1798 = vmatpush1.msra.mxu0 %v1690
        %1799 = vmatprep.subr.mxu0 0.0
        %1800 = vmatpush1.msra.mxu0 %v1693
        %1801 = vmatprep.subr.mxu0 0.0
        %1802 = vmatpush1.msra.mxu0 %v1696
        %1803 = vmatprep.subr.mxu0 0.0
        %1804 = vmatpush1.msra.mxu0 %v1699
        %1805 = vmatprep.subr.mxu0 0.0
        %1806 = vmatpush1.msra.mxu0 %v1702
        %1807 = vmatprep.subr.mxu0 0.0
        %1808 = vmatpush1.msra.mxu0 %v1705
        %1809 = vmatprep.subr.mxu0 0.0
        %1810 = vmatpush1.msra.mxu0 0.0
        %1811 = vmatprep.subr.mxu0 0.0
        %1812 = vmatpush1.msra.mxu0 0.0
        %1813 = vmatprep.subr.mxu0 0.0
        %1814 = vmatpush1.msra.mxu0 0.0
        %1815 = vmatprep.subr.mxu0 0.0
        %1816 = vmatpush1.msra.mxu0 0.0
        %1817 = vmatprep.subr.mxu0 0.0
        %1818 = vmatpush1.msra.mxu0 0.0
        %1819 = vmatprep.subr.mxu0 0.0
        %1820 = vmatpush1.msra.mxu0 0.0
        %1821 = vmatprep.subr.mxu0 0.0
        %1822 = vmatpush1.msra.mxu0 0.0
        %1823 = vmatprep.subr.mxu0 0.0
        %1824 = vmatpush1.msra.mxu0 0.0
        %1825 = vmatprep.subr.mxu0 0.0
        %1826 = vmatpush1.msra.mxu0 0.0
        %1827 = vmatprep.subr.mxu0 0.0
        %1828 = vmatpush1.msra.mxu0 0.0
        %1829 = vmatprep.subr.mxu0 0.0
        %1830 = vmatpush1.msra.mxu0 0.0
        %1831 = vmatprep.subr.mxu0 0.0
        %1832 = vmatpush1.msra.mxu0 0.0
        %1833 = vmatprep.subr.mxu0 0.0
        %1834 = vmatpush1.msra.mxu0 0.0
        %1835 = vmatprep.subr.mxu0 0.0
        %1836 = vmatpush1.msra.mxu0 0.0
        %1837 = vmatprep.subr.mxu0 0.0
        %1838 = vmatpush1.msra.mxu0 0.0
        %1839 = vmatprep.subr.mxu0 0.0
        %1840 = vmatpush1.msra.mxu0 0.0
        %1841 = vmatprep.mubr.f32.mxu0 0.0
        %1842 = vmatmul.mubr.f32.gmra.mrb[0].mxu0 %v1655
        %v1843 = vpop.f32.mrb[0].mxu0
        %v1844 = vadd.f32 0.0, %v1843
        %v1845 = vpop.f32.mrb[0].mxu0
        %1846 = vdwg.mxu0
        %s1847 = scalar_lea.vmem [#allocation2], 96
        %v1848 = vld [vmem:[%s1847] sm:$0xff]
        %v1849 = vld [vmem:[%s1847 + $0x8] sm:$0xff]
        %v1850 = vld [vmem:[%s1847 + $0x10] sm:$0xff]
        %v1851 = vadd.f32 %v1848, %v1773
        %v1852 = vadd.f32 %v1849, %v1775
        %v1853 = vxor.u32 %v1851, 2147483648
        %v1854 = vxor.u32 %v1852, 2147483648
        %v1855 = vmul.f32 %v1853, 1.442695
        %v1856 = vpow.pop %v1855
        %v1857 = vmul.f32 %v1854, 1.442695
        %v1858 = vpow.pop %v1857
        %v1859 = vadd.f32 %v1856, 1.0
        %v1860 = vadd.f32 %v1858, 1.0
        %v1861 = vrcp.pop %v1859
        %v1862 = vmul.f32 1.0, %v1861
        %v1863 = vrcp.pop %v1860
        %v1864 = vmul.f32 1.0, %v1863
        %v1865 = vadd.f32 %v1844, %v793
        %v1866 = vmul.f32 %v1862, %v1865
        %v1867 = vadd.f32 %v1850, %v1866
        %v1868 = vtanh.pop %v1867
        %v1869 = vsub.f32 %v1655, %v1868
        %v1870 = vmul.f32 %v1864, %v1869
        %v1871 = vadd.f32 %v1868, %v1870
        %s1872 = scalar_lea.vmem [#allocation11], 32
        %1873 = vst [vmem:[%s1872] sm:$0xff] %v1871
        %v1874 = vld [vmem:[%s353] sm:$0xff]
        %v1875 = vld [vmem:[%s353 + $0x8] sm:$0xff]
        %v1876 = vld [vmem:[%s353 + $0x10] sm:$0xff]
        %v1877 = vld [vmem:[%s353 + $0x18] sm:$0xff]
        %v1878 = vld [vmem:[%s353 + $0x20] sm:$0xff]
        %v1879 = vld [vmem:[%s353 + $0x28] sm:$0xff]
        %v1880 = vld [vmem:[%s353 + $0x30] sm:$0xff]
        %v1881 = vld [vmem:[%s353 + $0x38] sm:$0xff]
        %v1882 = vld [vmem:[%s353 + $0x40] sm:$0xff]
        %v1883 = vld [vmem:[%s353 + $0x48] sm:$0xff]
        %v1884 = vld [vmem:[%s353 + $0x50] sm:$0xff]
        %v1885 = vld [vmem:[%s353 + $0x58] sm:$0xff]
        %v1886 = vld [vmem:[%s353 + $0x60] sm:$0xff]
        %v1887 = vld [vmem:[%s353 + $0x68] sm:$0xff]
        %v1888 = vld [vmem:[%s353 + $0x70] sm:$0xff]
        %v1889 = vld [vmem:[%s353 + $0x78] sm:$0xff]
        %v1890 = vld [vmem:[%s353 + $0x80] sm:$0xff]
        %v1891 = vld [vmem:[%s353 + $0x88] sm:$0xff]
        %v1892 = vld [vmem:[%s353 + $0x90] sm:$0xff]
        %v1893 = vld [vmem:[%s353 + $0x98] sm:$0xff]
        %v1894 = vld [vmem:[%s353 + $0xa0] sm:$0xff]
        %v1895 = vld [vmem:[%s353 + $0xa8] sm:$0xff]
        %v1896 = vld [vmem:[%s353 + $0xb0] sm:$0xff]
        %v1897 = vld [vmem:[%s353 + $0xb8] sm:$0xff]
        %v1898 = vld [vmem:[%s353 + $0xc0] sm:$0xff]
        %v1899 = vld [vmem:[%s353 + $0xc8] sm:$0xff]
        %v1900 = vld [vmem:[%s353 + $0xd0] sm:$0xff]
        %v1901 = vld [vmem:[%s353 + $0xd8] sm:$0xff]
        %v1902 = vld [vmem:[%s353 + $0xe0] sm:$0xff]
        %v1903 = vld [vmem:[%s353 + $0xe8] sm:$0xff]
        %v1904 = vld [vmem:[%s353 + $0xf0] sm:$0xff]
        %v1905 = vld [vmem:[%s353 + $0xf8] sm:$0xff]
        %v1906 = vld [vmem:[%s353 + $0x100] sm:$0xff]
        %v1907 = vld [vmem:[%s353 + $0x108] sm:$0xff]
        %v1908 = vld [vmem:[%s353 + $0x110] sm:$0xff]
        %v1909 = vld [vmem:[%s353 + $0x118] sm:$0xff]
        %v1910 = vld [vmem:[%s353 + $0x120] sm:$0xff]
        %v1911 = vld [vmem:[%s353 + $0x128] sm:$0xff]
        %v1912 = vld [vmem:[%s353 + $0x130] sm:$0xff]
        %v1913 = vld [vmem:[%s353 + $0x138] sm:$0xff]
        %v1914 = vld [vmem:[%s353 + $0x140] sm:$0xff]
        %v1915 = vld [vmem:[%s353 + $0x148] sm:$0xff]
        %v1916 = vld [vmem:[%s353 + $0x150] sm:$0xff]
        %v1917 = vld [vmem:[%s353 + $0x158] sm:$0xff]
        %v1918 = vld [vmem:[%s353 + $0x160] sm:$0xff]
        %v1919 = vld [vmem:[%s353 + $0x168] sm:$0xff]
        %v1920 = vld [vmem:[%s353 + $0x170] sm:$0xff]
        %v1921 = vld [vmem:[%s353 + $0x178] sm:$0xff]
        %1922 = vmatprep.subr.mxu0 %v1875
        %1923 = vmatpush1.msra.mxu0 %v1874
        %1924 = vmatprep.subr.mxu0 %v1878
        %1925 = vmatpush1.msra.mxu0 %v1877
        %1926 = vmatprep.subr.mxu0 %v1881
        %1927 = vmatpush1.msra.mxu0 %v1880
        %1928 = vmatprep.subr.mxu0 %v1884
        %1929 = vmatpush1.msra.mxu0 %v1883
        %1930 = vmatprep.subr.mxu0 %v1887
        %1931 = vmatpush1.msra.mxu0 %v1886
        %1932 = vmatprep.subr.mxu0 %v1890
        %1933 = vmatpush1.msra.mxu0 %v1889
        %1934 = vmatprep.subr.mxu0 %v1893
        %1935 = vmatpush1.msra.mxu0 %v1892
        %1936 = vmatprep.subr.mxu0 %v1896
        %1937 = vmatpush1.msra.mxu0 %v1895
        %1938 = vmatprep.subr.mxu0 %v1899
        %1939 = vmatpush1.msra.mxu0 %v1898
        %1940 = vmatprep.subr.mxu0 %v1902
        %1941 = vmatpush1.msra.mxu0 %v1901
        %1942 = vmatprep.subr.mxu0 %v1905
        %1943 = vmatpush1.msra.mxu0 %v1904
        %1944 = vmatprep.subr.mxu0 %v1908
        %1945 = vmatpush1.msra.mxu0 %v1907
        %1946 = vmatprep.subr.mxu0 %v1911
        %1947 = vmatpush1.msra.mxu0 %v1910
        %1948 = vmatprep.subr.mxu0 %v1914
        %1949 = vmatpush1.msra.mxu0 %v1913
        %1950 = vmatprep.subr.mxu0 %v1917
        %1951 = vmatpush1.msra.mxu0 %v1916
        %1952 = vmatprep.subr.mxu0 %v1920
        %1953 = vmatpush1.msra.mxu0 %v1919
        %1954 = vmatprep.subr.mxu0 0.0
        %1955 = vmatpush1.msra.mxu0 0.0
        %1956 = vmatprep.subr.mxu0 0.0
        %1957 = vmatpush1.msra.mxu0 0.0
        %1958 = vmatprep.subr.mxu0 0.0
        %1959 = vmatpush1.msra.mxu0 0.0
        %1960 = vmatprep.subr.mxu0 0.0
        %1961 = vmatpush1.msra.mxu0 0.0
        %1962 = vmatprep.subr.mxu0 0.0
        %1963 = vmatpush1.msra.mxu0 0.0
        %1964 = vmatprep.subr.mxu0 0.0
        %1965 = vmatpush1.msra.mxu0 0.0
        %1966 = vmatprep.subr.mxu0 0.0
        %1967 = vmatpush1.msra.mxu0 0.0
        %1968 = vmatprep.subr.mxu0 0.0
        %1969 = vmatpush1.msra.mxu0 0.0
        %1970 = vmatprep.subr.mxu0 0.0
        %1971 = vmatpush1.msra.mxu0 0.0
        %1972 = vmatprep.subr.mxu0 0.0
        %1973 = vmatpush1.msra.mxu0 0.0
        %1974 = vmatprep.subr.mxu0 0.0
        %1975 = vmatpush1.msra.mxu0 0.0
        %1976 = vmatprep.subr.mxu0 0.0
        %1977 = vmatpush1.msra.mxu0 0.0
        %1978 = vmatprep.subr.mxu0 0.0
        %1979 = vmatpush1.msra.mxu0 0.0
        %1980 = vmatprep.subr.mxu0 0.0
        %1981 = vmatpush1.msra.mxu0 0.0
        %1982 = vmatprep.subr.mxu0 0.0
        %1983 = vmatpush1.msra.mxu0 0.0
        %1984 = vmatprep.subr.mxu0 0.0
        %1985 = vmatpush1.msra.mxu0 0.0
        %1986 = vmatprep.mubr.f32.mxu0 0.0
        %1987 = vmatmul.mubr.f32.gmra.mrb[0].mxu0 %v1871
        %v1988 = vpop.f32.mrb[0].mxu0
        %v1989 = vadd.f32 0.0, %v1988
        %v1990 = vpop.f32.mrb[0].mxu0
        %v1991 = vadd.f32 0.0, %v1990
        %1992 = vdwg.mxu0
        %1993 = vmatprep.subr.mxu0 0.0
        %1994 = vmatpush1.msra.mxu0 %v1876
        %1995 = vmatprep.subr.mxu0 0.0
        %1996 = vmatpush1.msra.mxu0 %v1879
        %1997 = vmatprep.subr.mxu0 0.0
        %1998 = vmatpush1.msra.mxu0 %v1882
        %1999 = vmatprep.subr.mxu0 0.0
        %2000 = vmatpush1.msra.mxu0 %v1885
        %2001 = vmatprep.subr.mxu0 0.0
        %2002 = vmatpush1.msra.mxu0 %v1888
        %2003 = vmatprep.subr.mxu0 0.0
        %2004 = vmatpush1.msra.mxu0 %v1891
        %2005 = vmatprep.subr.mxu0 0.0
        %2006 = vmatpush1.msra.mxu0 %v1894
        %2007 = vmatprep.subr.mxu0 0.0
        %2008 = vmatpush1.msra.mxu0 %v1897
        %2009 = vmatprep.subr.mxu0 0.0
        %2010 = vmatpush1.msra.mxu0 %v1900
        %2011 = vmatprep.subr.mxu0 0.0
        %2012 = vmatpush1.msra.mxu0 %v1903
        %2013 = vmatprep.subr.mxu0 0.0
        %2014 = vmatpush1.msra.mxu0 %v1906
        %2015 = vmatprep.subr.mxu0 0.0
        %2016 = vmatpush1.msra.mxu0 %v1909
        %2017 = vmatprep.subr.mxu0 0.0
        %2018 = vmatpush1.msra.mxu0 %v1912
        %2019 = vmatprep.subr.mxu0 0.0
        %2020 = vmatpush1.msra.mxu0 %v1915
        %2021 = vmatprep.subr.mxu0 0.0
        %2022 = vmatpush1.msra.mxu0 %v1918
        %2023 = vmatprep.subr.mxu0 0.0
        %2024 = vmatpush1.msra.mxu0 %v1921
        %2025 = vmatprep.subr.mxu0 0.0
        %2026 = vmatpush1.msra.mxu0 0.0
        %2027 = vmatprep.subr.mxu0 0.0
        %2028 = vmatpush1.msra.mxu0 0.0
        %2029 = vmatprep.subr.mxu0 0.0
        %2030 = vmatpush1.msra.mxu0 0.0
        %2031 = vmatprep.subr.mxu0 0.0
        %2032 = vmatpush1.msra.mxu0 0.0
        %2033 = vmatprep.subr.mxu0 0.0
        %2034 = vmatpush1.msra.mxu0 0.0
        %2035 = vmatprep.subr.mxu0 0.0
        %2036 = vmatpush1.msra.mxu0 0.0
        %2037 = vmatprep.subr.mxu0 0.0
        %2038 = vmatpush1.msra.mxu0 0.0
        %2039 = vmatprep.subr.mxu0 0.0
        %2040 = vmatpush1.msra.mxu0 0.0
        %2041 = vmatprep.subr.mxu0 0.0
        %2042 = vmatpush1.msra.mxu0 0.0
        %2043 = vmatprep.subr.mxu0 0.0
        %2044 = vmatpush1.msra.mxu0 0.0
        %2045 = vmatprep.subr.mxu0 0.0
        %2046 = vmatpush1.msra.mxu0 0.0
        %2047 = vmatprep.subr.mxu0 0.0
        %2048 = vmatpush1.msra.mxu0 0.0
        %2049 = vmatprep.subr.mxu0 0.0
        %2050 = vmatpush1.msra.mxu0 0.0
        %2051 = vmatprep.subr.mxu0 0.0
        %2052 = vmatpush1.msra.mxu0 0.0
        %2053 = vmatprep.subr.mxu0 0.0
        %2054 = vmatpush1.msra.mxu0 0.0
        %2055 = vmatprep.subr.mxu0 0.0
        %2056 = vmatpush1.msra.mxu0 0.0
        %2057 = vmatprep.mubr.f32.mxu0 0.0
        %2058 = vmatmul.mubr.f32.gmra.mrb[0].mxu0 %v1871
        %v2059 = vpop.f32.mrb[0].mxu0
        %v2060 = vadd.f32 0.0, %v2059
        %v2061 = vpop.f32.mrb[0].mxu0
        %2062 = vdwg.mxu0
        %s2063 = scalar_lea.vmem [#allocation2], 120
        %v2064 = vld [vmem:[%s2063] sm:$0xff]
        %v2065 = vld [vmem:[%s2063 + $0x8] sm:$0xff]
        %v2066 = vld [vmem:[%s2063 + $0x10] sm:$0xff]
        %v2067 = vadd.f32 %v2064, %v1989
        %v2068 = vadd.f32 %v2065, %v1991
        %v2069 = vxor.u32 %v2067, 2147483648
        %v2070 = vxor.u32 %v2068, 2147483648
        %v2071 = vmul.f32 %v2069, 1.442695
        %v2072 = vpow.pop %v2071
        %v2073 = vmul.f32 %v2070, 1.442695
        %v2074 = vpow.pop %v2073
        %v2075 = vadd.f32 %v2072, 1.0
        %v2076 = vadd.f32 %v2074, 1.0
        %v2077 = vrcp.pop %v2075
        %v2078 = vmul.f32 1.0, %v2077
        %v2079 = vrcp.pop %v2076
        %v2080 = vmul.f32 1.0, %v2079
        %v2081 = vadd.f32 %v2060, %v793
        %v2082 = vmul.f32 %v2078, %v2081
        %v2083 = vadd.f32 %v2066, %v2082
        %v2084 = vtanh.pop %v2083
        %v2085 = vsub.f32 %v1871, %v2084
        %v2086 = vmul.f32 %v2080, %v2085
        %v2087 = vadd.f32 %v2084, %v2086
        %s2088 = scalar_lea.vmem [#allocation11], 40
        %2089 = vst [vmem:[%s2088] sm:$0xff] %v2087
        %v2090 = vld [vmem:[%s353] sm:$0xff]
        %v2091 = vld [vmem:[%s353 + $0x8] sm:$0xff]
        %v2092 = vld [vmem:[%s353 + $0x10] sm:$0xff]
        %v2093 = vld [vmem:[%s353 + $0x18] sm:$0xff]
        %v2094 = vld [vmem:[%s353 + $0x20] sm:$0xff]
        %v2095 = vld [vmem:[%s353 + $0x28] sm:$0xff]
        %v2096 = vld [vmem:[%s353 + $0x30] sm:$0xff]
        %v2097 = vld [vmem:[%s353 + $0x38] sm:$0xff]
        %v2098 = vld [vmem:[%s353 + $0x40] sm:$0xff]
        %v2099 = vld [vmem:[%s353 + $0x48] sm:$0xff]
        %v2100 = vld [vmem:[%s353 + $0x50] sm:$0xff]
        %v2101 = vld [vmem:[%s353 + $0x58] sm:$0xff]
        %v2102 = vld [vmem:[%s353 + $0x60] sm:$0xff]
        %v2103 = vld [vmem:[%s353 + $0x68] sm:$0xff]
        %v2104 = vld [vmem:[%s353 + $0x70] sm:$0xff]
        %v2105 = vld [vmem:[%s353 + $0x78] sm:$0xff]
        %v2106 = vld [vmem:[%s353 + $0x80] sm:$0xff]
        %v2107 = vld [vmem:[%s353 + $0x88] sm:$0xff]
        %v2108 = vld [vmem:[%s353 + $0x90] sm:$0xff]
        %v2109 = vld [vmem:[%s353 + $0x98] sm:$0xff]
        %v2110 = vld [vmem:[%s353 + $0xa0] sm:$0xff]
        %v2111 = vld [vmem:[%s353 + $0xa8] sm:$0xff]
        %v2112 = vld [vmem:[%s353 + $0xb0] sm:$0xff]
        %v2113 = vld [vmem:[%s353 + $0xb8] sm:$0xff]
        %v2114 = vld [vmem:[%s353 + $0xc0] sm:$0xff]
        %v2115 = vld [vmem:[%s353 + $0xc8] sm:$0xff]
        %v2116 = vld [vmem:[%s353 + $0xd0] sm:$0xff]
        %v2117 = vld [vmem:[%s353 + $0xd8] sm:$0xff]
        %v2118 = vld [vmem:[%s353 + $0xe0] sm:$0xff]
        %v2119 = vld [vmem:[%s353 + $0xe8] sm:$0xff]
        %v2120 = vld [vmem:[%s353 + $0xf0] sm:$0xff]
        %v2121 = vld [vmem:[%s353 + $0xf8] sm:$0xff]
        %v2122 = vld [vmem:[%s353 + $0x100] sm:$0xff]
        %v2123 = vld [vmem:[%s353 + $0x108] sm:$0xff]
        %v2124 = vld [vmem:[%s353 + $0x110] sm:$0xff]
        %v2125 = vld [vmem:[%s353 + $0x118] sm:$0xff]
        %v2126 = vld [vmem:[%s353 + $0x120] sm:$0xff]
        %v2127 = vld [vmem:[%s353 + $0x128] sm:$0xff]
        %v2128 = vld [vmem:[%s353 + $0x130] sm:$0xff]
        %v2129 = vld [vmem:[%s353 + $0x138] sm:$0xff]
        %v2130 = vld [vmem:[%s353 + $0x140] sm:$0xff]
        %v2131 = vld [vmem:[%s353 + $0x148] sm:$0xff]
        %v2132 = vld [vmem:[%s353 + $0x150] sm:$0xff]
        %v2133 = vld [vmem:[%s353 + $0x158] sm:$0xff]
        %v2134 = vld [vmem:[%s353 + $0x160] sm:$0xff]
        %v2135 = vld [vmem:[%s353 + $0x168] sm:$0xff]
        %v2136 = vld [vmem:[%s353 + $0x170] sm:$0xff]
        %v2137 = vld [vmem:[%s353 + $0x178] sm:$0xff]
        %2138 = vmatprep.subr.mxu0 %v2091
        %2139 = vmatpush1.msra.mxu0 %v2090
        %2140 = vmatprep.subr.mxu0 %v2094
        %2141 = vmatpush1.msra.mxu0 %v2093
        %2142 = vmatprep.subr.mxu0 %v2097
        %2143 = vmatpush1.msra.mxu0 %v2096
        %2144 = vmatprep.subr.mxu0 %v2100
        %2145 = vmatpush1.msra.mxu0 %v2099
        %2146 = vmatprep.subr.mxu0 %v2103
        %2147 = vmatpush1.msra.mxu0 %v2102
        %2148 = vmatprep.subr.mxu0 %v2106
        %2149 = vmatpush1.msra.mxu0 %v2105
        %2150 = vmatprep.subr.mxu0 %v2109
        %2151 = vmatpush1.msra.mxu0 %v2108
        %2152 = vmatprep.subr.mxu0 %v2112
        %2153 = vmatpush1.msra.mxu0 %v2111
        %2154 = vmatprep.subr.mxu0 %v2115
        %2155 = vmatpush1.msra.mxu0 %v2114
        %2156 = vmatprep.subr.mxu0 %v2118
        %2157 = vmatpush1.msra.mxu0 %v2117
        %2158 = vmatprep.subr.mxu0 %v2121
        %2159 = vmatpush1.msra.mxu0 %v2120
        %2160 = vmatprep.subr.mxu0 %v2124
        %2161 = vmatpush1.msra.mxu0 %v2123
        %2162 = vmatprep.subr.mxu0 %v2127
        %2163 = vmatpush1.msra.mxu0 %v2126
        %2164 = vmatprep.subr.mxu0 %v2130
        %2165 = vmatpush1.msra.mxu0 %v2129
        %2166 = vmatprep.subr.mxu0 %v2133
        %2167 = vmatpush1.msra.mxu0 %v2132
        %2168 = vmatprep.subr.mxu0 %v2136
        %2169 = vmatpush1.msra.mxu0 %v2135
        %2170 = vmatprep.subr.mxu0 0.0
        %2171 = vmatpush1.msra.mxu0 0.0
        %2172 = vmatprep.subr.mxu0 0.0
        %2173 = vmatpush1.msra.mxu0 0.0
        %2174 = vmatprep.subr.mxu0 0.0
        %2175 = vmatpush1.msra.mxu0 0.0
        %2176 = vmatprep.subr.mxu0 0.0
        %2177 = vmatpush1.msra.mxu0 0.0
        %2178 = vmatprep.subr.mxu0 0.0
        %2179 = vmatpush1.msra.mxu0 0.0
        %2180 = vmatprep.subr.mxu0 0.0
        %2181 = vmatpush1.msra.mxu0 0.0
        %2182 = vmatprep.subr.mxu0 0.0
        %2183 = vmatpush1.msra.mxu0 0.0
        %2184 = vmatprep.subr.mxu0 0.0
        %2185 = vmatpush1.msra.mxu0 0.0
        %2186 = vmatprep.subr.mxu0 0.0
        %2187 = vmatpush1.msra.mxu0 0.0
        %2188 = vmatprep.subr.mxu0 0.0
        %2189 = vmatpush1.msra.mxu0 0.0
        %2190 = vmatprep.subr.mxu0 0.0
        %2191 = vmatpush1.msra.mxu0 0.0
        %2192 = vmatprep.subr.mxu0 0.0
        %2193 = vmatpush1.msra.mxu0 0.0
        %2194 = vmatprep.subr.mxu0 0.0
        %2195 = vmatpush1.msra.mxu0 0.0
        %2196 = vmatprep.subr.mxu0 0.0
        %2197 = vmatpush1.msra.mxu0 0.0
        %2198 = vmatprep.subr.mxu0 0.0
        %2199 = vmatpush1.msra.mxu0 0.0
        %2200 = vmatprep.subr.mxu0 0.0
        %2201 = vmatpush1.msra.mxu0 0.0
        %2202 = vmatprep.mubr.f32.mxu0 0.0
        %2203 = vmatmul.mubr.f32.gmra.mrb[0].mxu0 %v2087
        %v2204 = vpop.f32.mrb[0].mxu0
        %v2205 = vadd.f32 0.0, %v2204
        %v2206 = vpop.f32.mrb[0].mxu0
        %v2207 = vadd.f32 0.0, %v2206
        %2208 = vdwg.mxu0
        %2209 = vmatprep.subr.mxu0 0.0
        %2210 = vmatpush1.msra.mxu0 %v2092
        %2211 = vmatprep.subr.mxu0 0.0
        %2212 = vmatpush1.msra.mxu0 %v2095
        %2213 = vmatprep.subr.mxu0 0.0
        %2214 = vmatpush1.msra.mxu0 %v2098
        %2215 = vmatprep.subr.mxu0 0.0
        %2216 = vmatpush1.msra.mxu0 %v2101
        %2217 = vmatprep.subr.mxu0 0.0
        %2218 = vmatpush1.msra.mxu0 %v2104
        %2219 = vmatprep.subr.mxu0 0.0
        %2220 = vmatpush1.msra.mxu0 %v2107
        %2221 = vmatprep.subr.mxu0 0.0
        %2222 = vmatpush1.msra.mxu0 %v2110
        %2223 = vmatprep.subr.mxu0 0.0
        %2224 = vmatpush1.msra.mxu0 %v2113
        %2225 = vmatprep.subr.mxu0 0.0
        %2226 = vmatpush1.msra.mxu0 %v2116
        %2227 = vmatprep.subr.mxu0 0.0
        %2228 = vmatpush1.msra.mxu0 %v2119
        %2229 = vmatprep.subr.mxu0 0.0
        %2230 = vmatpush1.msra.mxu0 %v2122
        %2231 = vmatprep.subr.mxu0 0.0
        %2232 = vmatpush1.msra.mxu0 %v2125
        %2233 = vmatprep.subr.mxu0 0.0
        %2234 = vmatpush1.msra.mxu0 %v2128
        %2235 = vmatprep.subr.mxu0 0.0
        %2236 = vmatpush1.msra.mxu0 %v2131
        %2237 = vmatprep.subr.mxu0 0.0
        %2238 = vmatpush1.msra.mxu0 %v2134
        %2239 = vmatprep.subr.mxu0 0.0
        %2240 = vmatpush1.msra.mxu0 %v2137
        %2241 = vmatprep.subr.mxu0 0.0
        %2242 = vmatpush1.msra.mxu0 0.0
        %2243 = vmatprep.subr.mxu0 0.0
        %2244 = vmatpush1.msra.mxu0 0.0
        %2245 = vmatprep.subr.mxu0 0.0
        %2246 = vmatpush1.msra.mxu0 0.0
        %2247 = vmatprep.subr.mxu0 0.0
        %2248 = vmatpush1.msra.mxu0 0.0
        %2249 = vmatprep.subr.mxu0 0.0
        %2250 = vmatpush1.msra.mxu0 0.0
        %2251 = vmatprep.subr.mxu0 0.0
        %2252 = vmatpush1.msra.mxu0 0.0
        %2253 = vmatprep.subr.mxu0 0.0
        %2254 = vmatpush1.msra.mxu0 0.0
        %2255 = vmatprep.subr.mxu0 0.0
        %2256 = vmatpush1.msra.mxu0 0.0
        %2257 = vmatprep.subr.mxu0 0.0
        %2258 = vmatpush1.msra.mxu0 0.0
        %2259 = vmatprep.subr.mxu0 0.0
        %2260 = vmatpush1.msra.mxu0 0.0
        %2261 = vmatprep.subr.mxu0 0.0
        %2262 = vmatpush1.msra.mxu0 0.0
        %2263 = vmatprep.subr.mxu0 0.0
        %2264 = vmatpush1.msra.mxu0 0.0
        %2265 = vmatprep.subr.mxu0 0.0
        %2266 = vmatpush1.msra.mxu0 0.0
        %2267 = vmatprep.subr.mxu0 0.0
        %2268 = vmatpush1.msra.mxu0 0.0
        %2269 = vmatprep.subr.mxu0 0.0
        %2270 = vmatpush1.msra.mxu0 0.0
        %2271 = vmatprep.subr.mxu0 0.0
        %2272 = vmatpush1.msra.mxu0 0.0
        %2273 = vmatprep.mubr.f32.mxu0 0.0
        %2274 = vmatmul.mubr.f32.gmra.mrb[0].mxu0 %v2087
        %v2275 = vpop.f32.mrb[0].mxu0
        %v2276 = vadd.f32 0.0, %v2275
        %v2277 = vpop.f32.mrb[0].mxu0
        %2278 = vdwg.mxu0
        %s2279 = scalar_lea.vmem [#allocation2], 144
        %v2280 = vld [vmem:[%s2279] sm:$0xff]
        %v2281 = vld [vmem:[%s2279 + $0x8] sm:$0xff]
        %v2282 = vld [vmem:[%s2279 + $0x10] sm:$0xff]
        %v2283 = vadd.f32 %v2280, %v2205
        %v2284 = vadd.f32 %v2281, %v2207
        %v2285 = vxor.u32 %v2283, 2147483648
        %v2286 = vxor.u32 %v2284, 2147483648
        %v2287 = vmul.f32 %v2285, 1.442695
        %v2288 = vpow.pop %v2287
        %v2289 = vmul.f32 %v2286, 1.442695
        %v2290 = vpow.pop %v2289
        %v2291 = vadd.f32 %v2288, 1.0
        %v2292 = vadd.f32 %v2290, 1.0
        %v2293 = vrcp.pop %v2291
        %v2294 = vmul.f32 1.0, %v2293
        %v2295 = vrcp.pop %v2292
        %v2296 = vmul.f32 1.0, %v2295
        %v2297 = vadd.f32 %v2276, %v793
        %v2298 = vmul.f32 %v2294, %v2297
        %v2299 = vadd.f32 %v2282, %v2298
        %v2300 = vtanh.pop %v2299
        %v2301 = vsub.f32 %v2087, %v2300
        %v2302 = vmul.f32 %v2296, %v2301
        %v2303 = vadd.f32 %v2300, %v2302
        %s2304 = scalar_lea.vmem [#allocation11], 48
        %2305 = vst [vmem:[%s2304] sm:$0xff] %v2303
        %v2306 = vld [vmem:[%s353] sm:$0xff]
        %v2307 = vld [vmem:[%s353 + $0x8] sm:$0xff]
        %v2308 = vld [vmem:[%s353 + $0x10] sm:$0xff]
        %v2309 = vld [vmem:[%s353 + $0x18] sm:$0xff]
        %v2310 = vld [vmem:[%s353 + $0x20] sm:$0xff]
        %v2311 = vld [vmem:[%s353 + $0x28] sm:$0xff]
        %v2312 = vld [vmem:[%s353 + $0x30] sm:$0xff]
        %v2313 = vld [vmem:[%s353 + $0x38] sm:$0xff]
        %v2314 = vld [vmem:[%s353 + $0x40] sm:$0xff]
        %v2315 = vld [vmem:[%s353 + $0x48] sm:$0xff]
        %v2316 = vld [vmem:[%s353 + $0x50] sm:$0xff]
        %v2317 = vld [vmem:[%s353 + $0x58] sm:$0xff]
        %v2318 = vld [vmem:[%s353 + $0x60] sm:$0xff]
        %v2319 = vld [vmem:[%s353 + $0x68] sm:$0xff]
        %v2320 = vld [vmem:[%s353 + $0x70] sm:$0xff]
        %v2321 = vld [vmem:[%s353 + $0x78] sm:$0xff]
        %v2322 = vld [vmem:[%s353 + $0x80] sm:$0xff]
        %v2323 = vld [vmem:[%s353 + $0x88] sm:$0xff]
        %v2324 = vld [vmem:[%s353 + $0x90] sm:$0xff]
        %v2325 = vld [vmem:[%s353 + $0x98] sm:$0xff]
        %v2326 = vld [vmem:[%s353 + $0xa0] sm:$0xff]
        %v2327 = vld [vmem:[%s353 + $0xa8] sm:$0xff]
        %v2328 = vld [vmem:[%s353 + $0xb0] sm:$0xff]
        %v2329 = vld [vmem:[%s353 + $0xb8] sm:$0xff]
        %v2330 = vld [vmem:[%s353 + $0xc0] sm:$0xff]
        %v2331 = vld [vmem:[%s353 + $0xc8] sm:$0xff]
        %v2332 = vld [vmem:[%s353 + $0xd0] sm:$0xff]
        %v2333 = vld [vmem:[%s353 + $0xd8] sm:$0xff]
        %v2334 = vld [vmem:[%s353 + $0xe0] sm:$0xff]
        %v2335 = vld [vmem:[%s353 + $0xe8] sm:$0xff]
        %v2336 = vld [vmem:[%s353 + $0xf0] sm:$0xff]
        %v2337 = vld [vmem:[%s353 + $0xf8] sm:$0xff]
        %v2338 = vld [vmem:[%s353 + $0x100] sm:$0xff]
        %v2339 = vld [vmem:[%s353 + $0x108] sm:$0xff]
        %v2340 = vld [vmem:[%s353 + $0x110] sm:$0xff]
        %v2341 = vld [vmem:[%s353 + $0x118] sm:$0xff]
        %v2342 = vld [vmem:[%s353 + $0x120] sm:$0xff]
        %v2343 = vld [vmem:[%s353 + $0x128] sm:$0xff]
        %v2344 = vld [vmem:[%s353 + $0x130] sm:$0xff]
        %v2345 = vld [vmem:[%s353 + $0x138] sm:$0xff]
        %v2346 = vld [vmem:[%s353 + $0x140] sm:$0xff]
        %v2347 = vld [vmem:[%s353 + $0x148] sm:$0xff]
        %v2348 = vld [vmem:[%s353 + $0x150] sm:$0xff]
        %v2349 = vld [vmem:[%s353 + $0x158] sm:$0xff]
        %v2350 = vld [vmem:[%s353 + $0x160] sm:$0xff]
        %v2351 = vld [vmem:[%s353 + $0x168] sm:$0xff]
        %v2352 = vld [vmem:[%s353 + $0x170] sm:$0xff]
        %v2353 = vld [vmem:[%s353 + $0x178] sm:$0xff]
        %2354 = vmatprep.subr.mxu0 %v2307
        %2355 = vmatpush1.msra.mxu0 %v2306
        %2356 = vmatprep.subr.mxu0 %v2310
        %2357 = vmatpush1.msra.mxu0 %v2309
        %2358 = vmatprep.subr.mxu0 %v2313
        %2359 = vmatpush1.msra.mxu0 %v2312
        %2360 = vmatprep.subr.mxu0 %v2316
        %2361 = vmatpush1.msra.mxu0 %v2315
        %2362 = vmatprep.subr.mxu0 %v2319
        %2363 = vmatpush1.msra.mxu0 %v2318
        %2364 = vmatprep.subr.mxu0 %v2322
        %2365 = vmatpush1.msra.mxu0 %v2321
        %2366 = vmatprep.subr.mxu0 %v2325
        %2367 = vmatpush1.msra.mxu0 %v2324
        %2368 = vmatprep.subr.mxu0 %v2328
        %2369 = vmatpush1.msra.mxu0 %v2327
        %2370 = vmatprep.subr.mxu0 %v2331
        %2371 = vmatpush1.msra.mxu0 %v2330
        %2372 = vmatprep.subr.mxu0 %v2334
        %2373 = vmatpush1.msra.mxu0 %v2333
        %2374 = vmatprep.subr.mxu0 %v2337
        %2375 = vmatpush1.msra.mxu0 %v2336
        %2376 = vmatprep.subr.mxu0 %v2340
        %2377 = vmatpush1.msra.mxu0 %v2339
        %2378 = vmatprep.subr.mxu0 %v2343
        %2379 = vmatpush1.msra.mxu0 %v2342
        %2380 = vmatprep.subr.mxu0 %v2346
        %2381 = vmatpush1.msra.mxu0 %v2345
        %2382 = vmatprep.subr.mxu0 %v2349
        %2383 = vmatpush1.msra.mxu0 %v2348
        %2384 = vmatprep.subr.mxu0 %v2352
        %2385 = vmatpush1.msra.mxu0 %v2351
        %2386 = vmatprep.subr.mxu0 0.0
        %2387 = vmatpush1.msra.mxu0 0.0
        %2388 = vmatprep.subr.mxu0 0.0
        %2389 = vmatpush1.msra.mxu0 0.0
        %2390 = vmatprep.subr.mxu0 0.0
        %2391 = vmatpush1.msra.mxu0 0.0
        %2392 = vmatprep.subr.mxu0 0.0
        %2393 = vmatpush1.msra.mxu0 0.0
        %2394 = vmatprep.subr.mxu0 0.0
        %2395 = vmatpush1.msra.mxu0 0.0
        %2396 = vmatprep.subr.mxu0 0.0
        %2397 = vmatpush1.msra.mxu0 0.0
        %2398 = vmatprep.subr.mxu0 0.0
        %2399 = vmatpush1.msra.mxu0 0.0
        %2400 = vmatprep.subr.mxu0 0.0
        %2401 = vmatpush1.msra.mxu0 0.0
        %2402 = vmatprep.subr.mxu0 0.0
        %2403 = vmatpush1.msra.mxu0 0.0
        %2404 = vmatprep.subr.mxu0 0.0
        %2405 = vmatpush1.msra.mxu0 0.0
        %2406 = vmatprep.subr.mxu0 0.0
        %2407 = vmatpush1.msra.mxu0 0.0
        %2408 = vmatprep.subr.mxu0 0.0
        %2409 = vmatpush1.msra.mxu0 0.0
        %2410 = vmatprep.subr.mxu0 0.0
        %2411 = vmatpush1.msra.mxu0 0.0
        %2412 = vmatprep.subr.mxu0 0.0
        %2413 = vmatpush1.msra.mxu0 0.0
        %2414 = vmatprep.subr.mxu0 0.0
        %2415 = vmatpush1.msra.mxu0 0.0
        %2416 = vmatprep.subr.mxu0 0.0
        %2417 = vmatpush1.msra.mxu0 0.0
        %2418 = vmatprep.mubr.f32.mxu0 0.0
        %2419 = vmatmul.mubr.f32.gmra.mrb[0].mxu0 %v2303
        %v2420 = vpop.f32.mrb[0].mxu0
        %v2421 = vadd.f32 0.0, %v2420
        %v2422 = vpop.f32.mrb[0].mxu0
        %v2423 = vadd.f32 0.0, %v2422
        %2424 = vdwg.mxu0
        %2425 = vmatprep.subr.mxu0 0.0
        %2426 = vmatpush1.msra.mxu0 %v2308
        %2427 = vmatprep.subr.mxu0 0.0
        %2428 = vmatpush1.msra.mxu0 %v2311
        %2429 = vmatprep.subr.mxu0 0.0
        %2430 = vmatpush1.msra.mxu0 %v2314
        %2431 = vmatprep.subr.mxu0 0.0
        %2432 = vmatpush1.msra.mxu0 %v2317
        %2433 = vmatprep.subr.mxu0 0.0
        %2434 = vmatpush1.msra.mxu0 %v2320
        %2435 = vmatprep.subr.mxu0 0.0
        %2436 = vmatpush1.msra.mxu0 %v2323
        %2437 = vmatprep.subr.mxu0 0.0
        %2438 = vmatpush1.msra.mxu0 %v2326
        %2439 = vmatprep.subr.mxu0 0.0
        %2440 = vmatpush1.msra.mxu0 %v2329
        %2441 = vmatprep.subr.mxu0 0.0
        %2442 = vmatpush1.msra.mxu0 %v2332
        %2443 = vmatprep.subr.mxu0 0.0
        %2444 = vmatpush1.msra.mxu0 %v2335
        %2445 = vmatprep.subr.mxu0 0.0
        %2446 = vmatpush1.msra.mxu0 %v2338
        %2447 = vmatprep.subr.mxu0 0.0
        %2448 = vmatpush1.msra.mxu0 %v2341
        %2449 = vmatprep.subr.mxu0 0.0
        %2450 = vmatpush1.msra.mxu0 %v2344
        %2451 = vmatprep.subr.mxu0 0.0
        %2452 = vmatpush1.msra.mxu0 %v2347
        %2453 = vmatprep.subr.mxu0 0.0
        %2454 = vmatpush1.msra.mxu0 %v2350
        %2455 = vmatprep.subr.mxu0 0.0
        %2456 = vmatpush1.msra.mxu0 %v2353
        %2457 = vmatprep.subr.mxu0 0.0
        %2458 = vmatpush1.msra.mxu0 0.0
        %2459 = vmatprep.subr.mxu0 0.0
        %2460 = vmatpush1.msra.mxu0 0.0
        %2461 = vmatprep.subr.mxu0 0.0
        %2462 = vmatpush1.msra.mxu0 0.0
        %2463 = vmatprep.subr.mxu0 0.0
        %2464 = vmatpush1.msra.mxu0 0.0
        %2465 = vmatprep.subr.mxu0 0.0
        %2466 = vmatpush1.msra.mxu0 0.0
        %2467 = vmatprep.subr.mxu0 0.0
        %2468 = vmatpush1.msra.mxu0 0.0
        %2469 = vmatprep.subr.mxu0 0.0
        %2470 = vmatpush1.msra.mxu0 0.0
        %2471 = vmatprep.subr.mxu0 0.0
        %2472 = vmatpush1.msra.mxu0 0.0
        %2473 = vmatprep.subr.mxu0 0.0
        %2474 = vmatpush1.msra.mxu0 0.0
        %2475 = vmatprep.subr.mxu0 0.0
        %2476 = vmatpush1.msra.mxu0 0.0
        %2477 = vmatprep.subr.mxu0 0.0
        %2478 = vmatpush1.msra.mxu0 0.0
        %2479 = vmatprep.subr.mxu0 0.0
        %2480 = vmatpush1.msra.mxu0 0.0
        %2481 = vmatprep.subr.mxu0 0.0
        %2482 = vmatpush1.msra.mxu0 0.0
        %2483 = vmatprep.subr.mxu0 0.0
        %2484 = vmatpush1.msra.mxu0 0.0
        %2485 = vmatprep.subr.mxu0 0.0
        %2486 = vmatpush1.msra.mxu0 0.0
        %2487 = vmatprep.subr.mxu0 0.0
        %2488 = vmatpush1.msra.mxu0 0.0
        %2489 = vmatprep.mubr.f32.mxu0 0.0
        %2490 = vmatmul.mubr.f32.gmra.mrb[0].mxu0 %v2303
        %v2491 = vpop.f32.mrb[0].mxu0
        %v2492 = vadd.f32 0.0, %v2491
        %v2493 = vpop.f32.mrb[0].mxu0
        %2494 = vdwg.mxu0
        %s2495 = scalar_lea.vmem [#allocation2], 168
        %v2496 = vld [vmem:[%s2495] sm:$0xff]
        %v2497 = vld [vmem:[%s2495 + $0x8] sm:$0xff]
        %v2498 = vld [vmem:[%s2495 + $0x10] sm:$0xff]
        %v2499 = vadd.f32 %v2496, %v2421
        %v2500 = vadd.f32 %v2497, %v2423
        %v2501 = vxor.u32 %v2499, 2147483648
        %v2502 = vxor.u32 %v2500, 2147483648
        %v2503 = vmul.f32 %v2501, 1.442695
        %v2504 = vpow.pop %v2503
        %v2505 = vmul.f32 %v2502, 1.442695
        %v2506 = vpow.pop %v2505
        %v2507 = vadd.f32 %v2504, 1.0
        %v2508 = vadd.f32 %v2506, 1.0
        %v2509 = vrcp.pop %v2507
        %v2510 = vmul.f32 1.0, %v2509
        %v2511 = vrcp.pop %v2508
        %v2512 = vmul.f32 1.0, %v2511
        %v2513 = vadd.f32 %v2492, %v793
        %v2514 = vmul.f32 %v2510, %v2513
        %v2515 = vadd.f32 %v2498, %v2514
        %v2516 = vtanh.pop %v2515
        %v2517 = vsub.f32 %v2303, %v2516
        %v2518 = vmul.f32 %v2512, %v2517
        %v2519 = vadd.f32 %v2516, %v2518
        %s2520 = scalar_lea.vmem [#allocation11], 56
        %2521 = vst [vmem:[%s2520] sm:$0xff] %v2519
        %2522 = vst [vmem:[%s409] sm:$0xff] %v2519
        %s2523 = sand.u32 %s210, 1
        %s2524 = scalar_lea.sflag [#allocation13], %s2523
        %s2525 = sand.u32 %s210, 1
        %s2526 = smul.addr %s2525, 8
        %s2527 = scalar_lea.vmem [#allocation12], %s2526
        // Predicated region
        $region69: #{tpu_custom_call.1} parent=43 // pred_check
          %p2528 = pneg %p194
        $region70: #{tpu_custom_call.1} parent=43 // pred_check_branch
          %2530 = sbr.rel (%p2528) target = $region72
        $region71: #{tpu_custom_call.1} parent=43 // pred_region
          %s2532 = ssub.s32 1024, 1024
          %2533 = vsyncadd [#allocation5], %s2532
          %s2534 = sshll.u32 [#allocation11], 4
          %s2535 = int_to_ptr.vmem [resolvable:$true] %s2534
          %2540 = dma.vmem_to_hbm [thread:$0]  %s2535, 1024, %s6, [#allocation5], 128, 128, 8
        $region72: #{tpu_custom_call.1} parent=43 // pred_fallthru
          _
        // Predicated region
        $region73: #{tpu_custom_call.1} parent=43 // pred_check
          %p2541 = pneg %p220
        $region74: #{tpu_custom_call.1} parent=43 // pred_check_branch
          %2543 = sbr.rel (%p2541) target = $region76
        $region75: #{tpu_custom_call.1} parent=43 // pred_region
          %s2545 = ssub.s32 128, 128
          %2546 = vsyncadd %s2524, %s2545
          %s2547 = smul.addr %s30, 128
          %s2548 = scalar_lea.hbm %s7, %s2547
          %s2550 = sshll.u32 %s2527, 4
          %s2551 = int_to_ptr.vmem [resolvable:$true] %s2550
          %2553 = dma.vmem_to_hbm [thread:$0]  %s2551, 128, %s2548, %s2524
        $region76: #{tpu_custom_call.1} parent=43 // pred_fallthru
          _
        // Predicated region
        $region77: #{tpu_custom_call.1} parent=43 // pred_check
          %p2554 = pneg %p194
        $region78: #{tpu_custom_call.1} parent=43 // pred_check_branch
          %2556 = sbr.rel (%p2554) target = $region80
        $region79: #{tpu_custom_call.1} parent=43 // pred_region
          %2557 = dma.done [#allocation5], 1024
        $region80: #{tpu_custom_call.1} parent=43 // pred_fallthru
          _
      $region44: #{tpu_custom_call.1} parent=5 // pred_fallthru
        _
      %p2558 = scmp.le.s32.totalorder 2, %s25
      // Predicated region
      $region81: #{tpu_custom_call.1} parent=5 // pred_check
        %p2559 = pneg %p2558
      $region82: #{tpu_custom_call.1} parent=5 // pred_check_branch
        %2561 = sbr.rel (%p2559) target = $region84
      $region83: #{tpu_custom_call.1} parent=5 // pred_region
        %s2562 = ssub.s32 %s25, 2
        // Predicated region
        $region85: #{tpu_custom_call.1} parent=83 // pred_check
          %p2563 = pneg %p226
        $region86: #{tpu_custom_call.1} parent=83 // pred_check_branch
          %2565 = sbr.rel (%p2563) target = $region88
        $region87: #{tpu_custom_call.1} parent=83 // pred_region
          %s2566 = sand.u32 %s211, 1
          %s2567 = scalar_lea.sflag [#allocation13], %s2566
          %s2568 = sand.u32 %s211, 1
          %s2569 = smul.addr %s2568, 8
          %s2570 = scalar_lea.vmem [#allocation12], %s2569
          %2571 = dma.done %s2567, 128
        $region88: #{tpu_custom_call.1} parent=83 // pred_fallthru
          _
      $region84: #{tpu_custom_call.1} parent=5 // pred_fallthru
        _
    $region6: #{tpu_custom_call.1} parent=1 // loop_footer
      %s29 = sadd.s32 1, %s25
    $region7: #{tpu_custom_call.1} parent=1 // loop_footer_branch
      %24 = sbr.rel target = $region3
    $region8: #{tpu_custom_call.1} parent=1 // loop_exit
      _
    %2572 = vsyncpa [#allocation4], 1
    %s2573 = scalar_lea.sflag [#allocation4], 1
    %2574 = vsyncpa %s2573, 1
    %2575 = vsyncpa [#allocation7], 1
    %s2576 = scalar_lea.sflag [#allocation7], 1
    %2577 = vsyncpa %s2576, 1
    %2578 = vsyncpa [#allocation10], 1
    %s2579 = scalar_lea.sflag [#allocation10], 1
    %2580 = vsyncpa %s2579, 1
    %2581 = vsyncpa [#allocation5], 1
    %s2582 = scalar_lea.sflag [#allocation5], 1
    %2583 = vsyncpa %s2582, 1
    %2584 = vsyncpa [#allocation13], 1
    %s2585 = scalar_lea.sflag [#allocation13], 1
    %2586 = vsyncpa %s2585, 1

</llo_original>
